<compile_context>
chip_gen: v5e
topology: v5e:2x2
jax: 0.10.0
libtpu: 0.0.40
codegen_flags: <defaults>
</compile_context>

<pallas_src>
import functools

import jax
import jax.numpy as jnp
from jax.experimental import pallas as pl
from jax.experimental.pallas import tpu as pltpu


# ---------------- in-kernel activation helpers ----------------
def _gelu_exact(x):
    # erf-based GELU (torch's default) via the Abramowitz-Stegun 7.1.26 polynomial
    # (abs err < 1.5e-7): only exp / mul / add / select, guaranteed to lower.
    z = x * 0.7071067811865476
    az = jnp.abs(z)
    t = 1.0 / (1.0 + 0.3275911 * az)
    poly = ((((1.061405429 * t - 1.453152027) * t + 1.421413741) * t
             - 0.284496736) * t + 0.254829592) * t
    erf_abs = 1.0 - poly * jnp.exp(-az * az)
    erf_z = jnp.where(z >= 0, erf_abs, -erf_abs)
    return 0.5 * x * (1.0 + erf_z)


def _sigmoid_exact(x):
    # exact (non-approximate) sigmoid; exp rides the EUP slot, divide is not binding.
    return 1.0 / (1.0 + jnp.exp(-x))


# ---------------- fused DualAdaptiveNeuralBlock kernel ----------------
def _danb_kernel(x_ref, mask_ref, w1_ref, b1_ref, wdw_ref, bdw_ref,
                 w2_ref, b2_ref, o_ref, y_ref, *, H, W, C, TH, KS, TAIL):
    pad = KS // 2                        # 3
    wwp = W + 2 * pad                    # padded row width
    n_taps = KS * KS                     # 49
    Ly = (H + 2 * pad) * wwp + TAIL      # flattened padded pixel count (+ tail)

    # ---- 1x1 conv (C -> C) over the whole padded image, chunked on lanes (MXU) ----
    # y[c_out, p] = sum_ci w1[c_out, ci] * x[ci, p] + b1[c_out]; the border / tail
    # positions are then zeroed with the precomputed mask so the depthwise conv sees
    # exact zero padding (PyTorch zero-pads AFTER conv1, so conv1's bias must not
    # leak into the halo).
    w1 = w1_ref[...]
    b1 = b1_ref[...]
    CC = 1024
    for j in range(0, Ly, CC):           # static chunk loop
        cs = min(CC, Ly - j)
        yk = jnp.dot(w1, x_ref[0, :, j:j + cs],
                     preferred_element_type=jnp.float32) + b1
        y_ref[:, j:j + cs] = yk * mask_ref[:, j:j + cs]

    # ---- depthwise 7x7 (2 gates/channel) + gelu*sigmoid + final 1x1 conv,
    #      processed per H-slab with fully static offsets ----
    wdw = wdw_ref[...]                   # (C, 2*49): [:, k*49 + dy*7 + dx]
    w2 = w2_ref[...]
    b2 = b2_ref[...]
    for s in range(-(-H // TH)):         # static slab loop
        h0 = s * TH
        rows = min(TH, H - h0)
        n = rows * wwp                   # output pixels (incl. 2*pad scratch cols/row)
        lwin = (rows + 2 * pad) * wwp + TAIL
        ywin = y_ref[:, h0 * wwp: h0 * wwp + lwin]           # (C, lwin), lane-dense

        # accumulators initialized with the depthwise bias (saves one full pass)
        acc0 = jnp.broadcast_to(bdw_ref[:, 0:1], (C, n))     # gate 0 (torch ch 2c)
        acc1 = jnp.broadcast_to(bdw_ref[:, 1:2], (C, n))     # gate 1 (torch ch 2c+1)
        for dy in range(KS):
            for dx in range(KS):
                tap = dy * KS + dx
                off = dy * wwp + dx                          # static lane shift
                sl = ywin[:, off: off + n]                   # (C, n), 100% lane-dense
                acc0 = acc0 + sl * wdw[:, tap:tap + 1]
                acc1 = acc1 + sl * wdw[:, n_taps + tap: n_taps + tap + 1]

        g = _gelu_exact(acc0) * _sigmoid_exact(acc1)         # (C, n)
        out = jnp.dot(w2, g, preferred_element_type=jnp.float32) + b2
        o_ref[0, :, h0 * wwp: h0 * wwp + n] = out            # contiguous dense store


def dual_adaptive_neural_block(x, params, *, tile_h=32, kernel_size=7):
    """x: (B, C, H, W) float32 -> (B, C, H, W) float32 (NCHW, like PyTorch)."""
    B, C, H, W = x.shape
    ks = kernel_size
    pad = ks // 2
    wwp = W + 2 * pad
    tail = 8                              # >= 2*pad, keeps the last tap slices in range
    Ly = (H + 2 * pad) * wwp + tail
    th = min(tile_h, H)

    # host-side prep: zero-pad in NCHW (no layout transpose anywhere) and flatten the
    # padded (H+6, W+6) grid onto the lane axis (+ small tail).  Fused by XLA.
    xp = jnp.pad(x, ((0, 0), (0, 0), (pad, pad), (pad, pad)))
    x_flat = jnp.pad(xp.reshape(B, C, (H + 2 * pad) * wwp),
                     ((0, 0), (0, 0), (0, tail)))

    # 1.0 on real pixels, 0.0 on the zero-padding ring / tail.
    rr = jnp.arange(H + 2 * pad)
    cc = jnp.arange(wwp)
    valid = (((rr >= pad) & (rr < H + pad))[:, None]
             & ((cc >= pad) & (cc < W + pad))[None, :])
    mask = jnp.pad(valid.reshape(1, -1).astype(jnp.float32),
                   ((0, 0), (0, tail)))

    kern = functools.partial(_danb_kernel, H=H, W=W, C=C, TH=th, KS=ks, TAIL=tail)
    out_flat = pl.pallas_call(
        kern,
        out_shape=jax.ShapeDtypeStruct((B, C, H * wwp), jnp.float32),
        grid=(B,),
        in_specs=[
            pl.BlockSpec((1, C, Ly), lambda b: (b, 0, 0)),        # x (per batch elem)
            pl.BlockSpec((1, Ly), lambda b: (0, 0)),              # border mask
            pl.BlockSpec((C, C), lambda b: (0, 0)),               # w1 [out, in]
            pl.BlockSpec((C, 1), lambda b: (0, 0)),               # b1
            pl.BlockSpec((C, 2 * ks * ks), lambda b: (0, 0)),     # w_dw
            pl.BlockSpec((C, 2), lambda b: (0, 0)),               # b_dw
            pl.BlockSpec((C, C), lambda b: (0, 0)),               # w2 [out, in]
            pl.BlockSpec((C, 1), lambda b: (0, 0)),               # b2
        ],
        out_specs=pl.BlockSpec((1, C, H * wwp), lambda b: (b, 0, 0)),
        scratch_shapes=[pltpu.VMEM((C, Ly), jnp.float32)],        # staged conv1 output
        compiler_params=pltpu.CompilerParams(
            dimension_semantics=("parallel",)),
    )(x_flat, mask, params["w1"], params["b1"], params["w_dw"],
      params["b_dw"], params["w2"], params["b2"])

    # drop the 2*pad scratch columns per row produced by the flat-shift trick.
    return out_flat.reshape(B, C, H, wwp)[:, :, :, :W]


# ---------------- deterministic parameter init ----------------
def init_params(key, embed_dim, kernel_size=7):
    # Layouts (mapping to the PyTorch module):
    #   w1[o, i]                 <-> group_conv[0].weight[o, i, 0, 0]
    #   b1[o, 0]                 <-> group_conv[0].bias[o]
    #   w_dw[c, k*49 + dy*7+dx]  <-> group_conv[1].weight[2c+k, 0, dy, dx]
    #   b_dw[c, k]               <-> group_conv[1].bias[2c+k]
    #   w2[o, i]                 <-> post_conv.weight[o, i, 0, 0]
    #   b2[o, 0]                 <-> post_conv.bias[o]
    ks = kernel_size
    keys = jax.random.split(key, 6)
    n = lambda k, s, scale: scale * jax.random.normal(k, s, jnp.float32)
    return dict(
        w1=n(keys[0], (embed_dim, embed_dim), 0.2),
        b1=n(keys[1], (embed_dim, 1), 0.1),
        w_dw=n(keys[2], (embed_dim, 2 * ks * ks), 0.2),
        b_dw=n(keys[3], (embed_dim, 2), 0.1),
        w2=n(keys[4], (embed_dim, embed_dim), 0.2),
        b2=n(keys[5], (embed_dim, 1), 0.1),
    )


# ---------------- pure-JAX reference (sanity check only) ----------------
def _reference_forward(x, params):
    B, C, H, W = x.shape
    hp = jax.lax.Precision.HIGHEST
    ks, pad = 7, 3
    y = (jnp.einsum("oi,bihw->bohw", params["w1"], x, precision=hp)
         + params["b1"][:, 0][None, :, None, None])
    yp = jnp.pad(y, ((0, 0), (0, 0), (pad, pad), (pad, pad)))
    acc0 = jnp.zeros((B, C, H, W), jnp.float32)
    acc1 = jnp.zeros((B, C, H, W), jnp.float32)
    for dy in range(ks):
        for dx in range(ks):
            win = yp[:, :, dy:dy + H, dx:dx + W]
            t = dy * ks + dx
            acc0 = acc0 + win * params["w_dw"][:, t][None, :, None, None]
            acc1 = acc1 + win * params["w_dw"][:, ks * ks + t][None, :, None, None]
    acc0 = acc0 + params["b_dw"][:, 0][None, :, None, None]
    acc1 = acc1 + params["b_dw"][:, 1][None, :, None, None]
    g = jax.nn.gelu(acc0, approximate=False) * jax.nn.sigmoid(acc1)
    out = (jnp.einsum("oi,bihw->bohw", params["w2"], g, precision=hp)
           + params["b2"][:, 0][None, :, None, None])
    return out


if __name__ == "__main__":
    EMBED_DIM = 16
    B, H, W = 2, 16, 16

    key = jax.random.PRNGKey(0)
    pkey, xkey = jax.random.split(key)
    params = init_params(pkey, EMBED_DIM)
    x = jax.random.normal(xkey, (B, EMBED_DIM, H, W), jnp.float32)

    fwd = jax.jit(functools.partial(dual_adaptive_neural_block, tile_h=32))
    out = fwd(x, params)
    jax.block_until_ready(out)

    assert out.shape == (B, EMBED_DIM, H, W)
    assert out.dtype == jnp.float32

    # sanity check vs a pure-JAX reference (tolerance covers MXU default-precision
    # f32 matmuls; the gate nonlinearities are now near-exact).
    ref = jax.jit(_reference_forward)(x, params)
    err = float(jnp.max(jnp.abs(out - ref)))
    assert err < 5e-2, f"mismatch vs reference: max abs err = {err}"

    print("KERNEL_OK")
</pallas_src>

<mosaic_0001>
module attributes {stable_mosaic.version = 11 : i64} {
  func.func @_danb_kernel(%arg0: i32, %arg1: memref<1x16x492xf32, #tpu.memory_space<vmem>>, %arg2: memref<1x492xf32, #tpu.memory_space<vmem>>, %arg3: memref<16x16xf32, #tpu.memory_space<vmem>>, %arg4: memref<16x1xf32, #tpu.memory_space<vmem>>, %arg5: memref<16x98xf32, #tpu.memory_space<vmem>>, %arg6: memref<16x2xf32, #tpu.memory_space<vmem>>, %arg7: memref<16x16xf32, #tpu.memory_space<vmem>>, %arg8: memref<16x1xf32, #tpu.memory_space<vmem>>, %arg9: memref<1x16x352xf32, #tpu.memory_space<vmem>>, %arg10: memref<16x492xf32, #tpu.memory_space<vmem>>) attributes {dimension_semantics = [#tpu.dimension_semantics<parallel>], iteration_bounds = array<i64: 2>, scalar_prefetch = 0 : i64, scratch_operands = 1 : i64, tpu.core_type = #tpu.core_type<tc>, window_params = [{transform_indices = @transform_0, window_bounds = array<i64: 1, 16, 492>}, {pipeline_mode = #tpu.pipeline_mode<synchronous>, transform_indices = @transform_1, window_bounds = array<i64: 1, 492>}, {pipeline_mode = #tpu.pipeline_mode<synchronous>, transform_indices = @transform_2, window_bounds = array<i64: 16, 16>}, {pipeline_mode = #tpu.pipeline_mode<synchronous>, transform_indices = @transform_3, window_bounds = array<i64: 16, 1>}, {pipeline_mode = #tpu.pipeline_mode<synchronous>, transform_indices = @transform_4, window_bounds = array<i64: 16, 98>}, {pipeline_mode = #tpu.pipeline_mode<synchronous>, transform_indices = @transform_5, window_bounds = array<i64: 16, 2>}, {pipeline_mode = #tpu.pipeline_mode<synchronous>, transform_indices = @transform_6, window_bounds = array<i64: 16, 16>}, {pipeline_mode = #tpu.pipeline_mode<synchronous>, transform_indices = @transform_7, window_bounds = array<i64: 16, 1>}, {transform_indices = @transform_8, window_bounds = array<i64: 1, 16, 352>}]} {
    %c0 = arith.constant 0 : index
    %c0_0 = arith.constant 0 : index
    %0 = vector.load %arg3[%c0, %c0_0] : memref<16x16xf32, #tpu.memory_space<vmem>>, vector<16x16xf32>
    %c0_1 = arith.constant 0 : index
    %c0_2 = arith.constant 0 : index
    %1 = vector.load %arg4[%c0_1, %c0_2] : memref<16x1xf32, #tpu.memory_space<vmem>>, vector<16x1xf32>
    %c0_3 = arith.constant 0 : index
    %c0_4 = arith.constant 0 : index
    %c0_5 = arith.constant 0 : index
    %2 = vector.load %arg1[%c0_3, %c0_4, %c0_5] : memref<1x16x492xf32, #tpu.memory_space<vmem>>, vector<1x16x492xf32>
    %3 = vector.shape_cast %2 : vector<1x16x492xf32> to vector<16x492xf32>
    %cst = arith.constant dense<0.000000e+00> : vector<16x492xf32>
    %4 = tpu.matmul %0, %3, %cst {dimension_numbers = #tpu.dot_dimension_numbers<[1], [0], [0], [1], [0, 0, 1, 1], [], []>} : vector<16x16xf32>, vector<16x492xf32>, vector<16x492xf32> -> vector<16x492xf32>
    %5 = vector.broadcast %1 : vector<16x1xf32> to vector<16x492xf32>
    %6 = arith.addf %4, %5 : vector<16x492xf32>
    %c0_6 = arith.constant 0 : index
    %c0_7 = arith.constant 0 : index
    %7 = vector.load %arg2[%c0_6, %c0_7] : memref<1x492xf32, #tpu.memory_space<vmem>>, vector<1x492xf32>
    %8 = vector.broadcast %7 : vector<1x492xf32> to vector<16x492xf32>
    %9 = arith.mulf %6, %8 : vector<16x492xf32>
    %c0_8 = arith.constant 0 : index
    %c0_9 = arith.constant 0 : index
    %10 = vector.load %arg10[%c0_8, %c0_9] : memref<16x492xf32, #tpu.memory_space<vmem>>, vector<16x492xf32>
    tpu.vector_store %arg10[%c0_8, %c0_9], %9 {strides = array<i32>} : memref<16x492xf32, #tpu.memory_space<vmem>>, vector<16x492xf32>,
    %c0_10 = arith.constant 0 : index
    %c0_11 = arith.constant 0 : index
    %11 = vector.load %arg5[%c0_10, %c0_11] : memref<16x98xf32, #tpu.memory_space<vmem>>, vector<16x98xf32>
    %c0_12 = arith.constant 0 : index
    %c0_13 = arith.constant 0 : index
    %12 = vector.load %arg7[%c0_12, %c0_13] : memref<16x16xf32, #tpu.memory_space<vmem>>, vector<16x16xf32>
    %c0_14 = arith.constant 0 : index
    %c0_15 = arith.constant 0 : index
    %13 = vector.load %arg8[%c0_14, %c0_15] : memref<16x1xf32, #tpu.memory_space<vmem>>, vector<16x1xf32>
    %c0_16 = arith.constant 0 : index
    %c0_17 = arith.constant 0 : index
    %14 = vector.load %arg10[%c0_16, %c0_17] : memref<16x492xf32, #tpu.memory_space<vmem>>, vector<16x492xf32>
    %c0_18 = arith.constant 0 : index
    %c0_19 = arith.constant 0 : index
    %15 = vector.load %arg6[%c0_18, %c0_19] : memref<16x2xf32, #tpu.memory_space<vmem>>, vector<16x1xf32>
    %16 = vector.shape_cast %15 : vector<16x1xf32> to vector<16x1xf32>
    %17 = vector.broadcast %16 : vector<16x1xf32> to vector<16x352xf32>
    %c0_20 = arith.constant 0 : index
    %c1 = arith.constant 1 : index
    %18 = vector.load %arg6[%c0_20, %c1] : memref<16x2xf32, #tpu.memory_space<vmem>>, vector<16x1xf32>
    %19 = vector.shape_cast %18 : vector<16x1xf32> to vector<16x1xf32>
    %20 = vector.broadcast %19 : vector<16x1xf32> to vector<16x352xf32>
    %21 = vector.extract_strided_slice %14 {offsets = [0, 0], sizes = [16, 352], strides = [1, 1]} : vector<16x492xf32> to vector<16x352xf32>
    %22 = vector.extract_strided_slice %11 {offsets = [0, 0], sizes = [16, 1], strides = [1, 1]} : vector<16x98xf32> to vector<16x1xf32>
    %23 = vector.broadcast %22 : vector<16x1xf32> to vector<16x352xf32>
    %24 = arith.mulf %21, %23 : vector<16x352xf32>
    %25 = arith.addf %17, %24 : vector<16x352xf32>
    %26 = vector.extract_strided_slice %11 {offsets = [0, 49], sizes = [16, 1], strides = [1, 1]} : vector<16x98xf32> to vector<16x1xf32>
    %27 = vector.broadcast %26 : vector<16x1xf32> to vector<16x352xf32>
    %28 = arith.mulf %21, %27 : vector<16x352xf32>
    %29 = arith.addf %20, %28 : vector<16x352xf32>
    %30 = vector.extract_strided_slice %14 {offsets = [0, 1], sizes = [16, 352], strides = [1, 1]} : vector<16x492xf32> to vector<16x352xf32>
    %31 = vector.extract_strided_slice %11 {offsets = [0, 1], sizes = [16, 1], strides = [1, 1]} : vector<16x98xf32> to vector<16x1xf32>
    %32 = vector.broadcast %31 : vector<16x1xf32> to vector<16x352xf32>
    %33 = arith.mulf %30, %32 : vector<16x352xf32>
    %34 = arith.addf %25, %33 : vector<16x352xf32>
    %35 = vector.extract_strided_slice %11 {offsets = [0, 50], sizes = [16, 1], strides = [1, 1]} : vector<16x98xf32> to vector<16x1xf32>
    %36 = vector.broadcast %35 : vector<16x1xf32> to vector<16x352xf32>
    %37 = arith.mulf %30, %36 : vector<16x352xf32>
    %38 = arith.addf %29, %37 : vector<16x352xf32>
    %39 = vector.extract_strided_slice %14 {offsets = [0, 2], sizes = [16, 352], strides = [1, 1]} : vector<16x492xf32> to vector<16x352xf32>
    %40 = vector.extract_strided_slice %11 {offsets = [0, 2], sizes = [16, 1], strides = [1, 1]} : vector<16x98xf32> to vector<16x1xf32>
    %41 = vector.broadcast %40 : vector<16x1xf32> to vector<16x352xf32>
    %42 = arith.mulf %39, %41 : vector<16x352xf32>
    %43 = arith.addf %34, %42 : vector<16x352xf32>
    %44 = vector.extract_strided_slice %11 {offsets = [0, 51], sizes = [16, 1], strides = [1, 1]} : vector<16x98xf32> to vector<16x1xf32>
    %45 = vector.broadcast %44 : vector<16x1xf32> to vector<16x352xf32>
    %46 = arith.mulf %39, %45 : vector<16x352xf32>
    %47 = arith.addf %38, %46 : vector<16x352xf32>
    %48 = vector.extract_strided_slice %14 {offsets = [0, 3], sizes = [16, 352], strides = [1, 1]} : vector<16x492xf32> to vector<16x352xf32>
    %49 = vector.extract_strided_slice %11 {offsets = [0, 3], sizes = [16, 1], strides = [1, 1]} : vector<16x98xf32> to vector<16x1xf32>
    %50 = vector.broadcast %49 : vector<16x1xf32> to vector<16x352xf32>
    %51 = arith.mulf %48, %50 : vector<16x352xf32>
    %52 = arith.addf %43, %51 : vector<16x352xf32>
    %53 = vector.extract_strided_slice %11 {offsets = [0, 52], sizes = [16, 1], strides = [1, 1]} : vector<16x98xf32> to vector<16x1xf32>
    %54 = vector.broadcast %53 : vector<16x1xf32> to vector<16x352xf32>
    %55 = arith.mulf %48, %54 : vector<16x352xf32>
    %56 = arith.addf %47, %55 : vector<16x352xf32>
    %57 = vector.extract_strided_slice %14 {offsets = [0, 4], sizes = [16, 352], strides = [1, 1]} : vector<16x492xf32> to vector<16x352xf32>
    %58 = vector.extract_strided_slice %11 {offsets = [0, 4], sizes = [16, 1], strides = [1, 1]} : vector<16x98xf32> to vector<16x1xf32>
    %59 = vector.broadcast %58 : vector<16x1xf32> to vector<16x352xf32>
    %60 = arith.mulf %57, %59 : vector<16x352xf32>
    %61 = arith.addf %52, %60 : vector<16x352xf32>
    %62 = vector.extract_strided_slice %11 {offsets = [0, 53], sizes = [16, 1], strides = [1, 1]} : vector<16x98xf32> to vector<16x1xf32>
    %63 = vector.broadcast %62 : vector<16x1xf32> to vector<16x352xf32>
    %64 = arith.mulf %57, %63 : vector<16x352xf32>
    %65 = arith.addf %56, %64 : vector<16x352xf32>
    %66 = vector.extract_strided_slice %14 {offsets = [0, 5], sizes = [16, 352], strides = [1, 1]} : vector<16x492xf32> to vector<16x352xf32>
    %67 = vector.extract_strided_slice %11 {offsets = [0, 5], sizes = [16, 1], strides = [1, 1]} : vector<16x98xf32> to vector<16x1xf32>
    %68 = vector.broadcast %67 : vector<16x1xf32> to vector<16x352xf32>
    %69 = arith.mulf %66, %68 : vector<16x352xf32>
    %70 = arith.addf %61, %69 : vector<16x352xf32>
    %71 = vector.extract_strided_slice %11 {offsets = [0, 54], sizes = [16, 1], strides = [1, 1]} : vector<16x98xf32> to vector<16x1xf32>
    %72 = vector.broadcast %71 : vector<16x1xf32> to vector<16x352xf32>
    %73 = arith.mulf %66, %72 : vector<16x352xf32>
    %74 = arith.addf %65, %73 : vector<16x352xf32>
    %75 = vector.extract_strided_slice %14 {offsets = [0, 6], sizes = [16, 352], strides = [1, 1]} : vector<16x492xf32> to vector<16x352xf32>
    %76 = vector.extract_strided_slice %11 {offsets = [0, 6], sizes = [16, 1], strides = [1, 1]} : vector<16x98xf32> to vector<16x1xf32>
    %77 = vector.broadcast %76 : vector<16x1xf32> to vector<16x352xf32>
    %78 = arith.mulf %75, %77 : vector<16x352xf32>
    %79 = arith.addf %70, %78 : vector<16x352xf32>
    %80 = vector.extract_strided_slice %11 {offsets = [0, 55], sizes = [16, 1], strides = [1, 1]} : vector<16x98xf32> to vector<16x1xf32>
    %81 = vector.broadcast %80 : vector<16x1xf32> to vector<16x352xf32>
    %82 = arith.mulf %75, %81 : vector<16x352xf32>
    %83 = arith.addf %74, %82 : vector<16x352xf32>
    %84 = vector.extract_strided_slice %14 {offsets = [0, 22], sizes = [16, 352], strides = [1, 1]} : vector<16x492xf32> to vector<16x352xf32>
    %85 = vector.extract_strided_slice %11 {offsets = [0, 7], sizes = [16, 1], strides = [1, 1]} : vector<16x98xf32> to vector<16x1xf32>
    %86 = vector.broadcast %85 : vector<16x1xf32> to vector<16x352xf32>
    %87 = arith.mulf %84, %86 : vector<16x352xf32>
    %88 = arith.addf %79, %87 : vector<16x352xf32>
    %89 = vector.extract_strided_slice %11 {offsets = [0, 56], sizes = [16, 1], strides = [1, 1]} : vector<16x98xf32> to vector<16x1xf32>
    %90 = vector.broadcast %89 : vector<16x1xf32> to vector<16x352xf32>
    %91 = arith.mulf %84, %90 : vector<16x352xf32>
    %92 = arith.addf %83, %91 : vector<16x352xf32>
    %93 = vector.extract_strided_slice %14 {offsets = [0, 23], sizes = [16, 352], strides = [1, 1]} : vector<16x492xf32> to vector<16x352xf32>
    %94 = vector.extract_strided_slice %11 {offsets = [0, 8], sizes = [16, 1], strides = [1, 1]} : vector<16x98xf32> to vector<16x1xf32>
    %95 = vector.broadcast %94 : vector<16x1xf32> to vector<16x352xf32>
    %96 = arith.mulf %93, %95 : vector<16x352xf32>
    %97 = arith.addf %88, %96 : vector<16x352xf32>
    %98 = vector.extract_strided_slice %11 {offsets = [0, 57], sizes = [16, 1], strides = [1, 1]} : vector<16x98xf32> to vector<16x1xf32>
    %99 = vector.broadcast %98 : vector<16x1xf32> to vector<16x352xf32>
    %100 = arith.mulf %93, %99 : vector<16x352xf32>
    %101 = arith.addf %92, %100 : vector<16x352xf32>
    %102 = vector.extract_strided_slice %14 {offsets = [0, 24], sizes = [16, 352], strides = [1, 1]} : vector<16x492xf32> to vector<16x352xf32>
    %103 = vector.extract_strided_slice %11 {offsets = [0, 9], sizes = [16, 1], strides = [1, 1]} : vector<16x98xf32> to vector<16x1xf32>
    %104 = vector.broadcast %103 : vector<16x1xf32> to vector<16x352xf32>
    %105 = arith.mulf %102, %104 : vector<16x352xf32>
    %106 = arith.addf %97, %105 : vector<16x352xf32>
    %107 = vector.extract_strided_slice %11 {offsets = [0, 58], sizes = [16, 1], strides = [1, 1]} : vector<16x98xf32> to vector<16x1xf32>
    %108 = vector.broadcast %107 : vector<16x1xf32> to vector<16x352xf32>
    %109 = arith.mulf %102, %108 : vector<16x352xf32>
    %110 = arith.addf %101, %109 : vector<16x352xf32>
    %111 = vector.extract_strided_slice %14 {offsets = [0, 25], sizes = [16, 352], strides = [1, 1]} : vector<16x492xf32> to vector<16x352xf32>
    %112 = vector.extract_strided_slice %11 {offsets = [0, 10], sizes = [16, 1], strides = [1, 1]} : vector<16x98xf32> to vector<16x1xf32>
    %113 = vector.broadcast %112 : vector<16x1xf32> to vector<16x352xf32>
    %114 = arith.mulf %111, %113 : vector<16x352xf32>
    %115 = arith.addf %106, %114 : vector<16x352xf32>
    %116 = vector.extract_strided_slice %11 {offsets = [0, 59], sizes = [16, 1], strides = [1, 1]} : vector<16x98xf32> to vector<16x1xf32>
    %117 = vector.broadcast %116 : vector<16x1xf32> to vector<16x352xf32>
    %118 = arith.mulf %111, %117 : vector<16x352xf32>
    %119 = arith.addf %110, %118 : vector<16x352xf32>
    %120 = vector.extract_strided_slice %14 {offsets = [0, 26], sizes = [16, 352], strides = [1, 1]} : vector<16x492xf32> to vector<16x352xf32>
    %121 = vector.extract_strided_slice %11 {offsets = [0, 11], sizes = [16, 1], strides = [1, 1]} : vector<16x98xf32> to vector<16x1xf32>
    %122 = vector.broadcast %121 : vector<16x1xf32> to vector<16x352xf32>
    %123 = arith.mulf %120, %122 : vector<16x352xf32>
    %124 = arith.addf %115, %123 : vector<16x352xf32>
    %125 = vector.extract_strided_slice %11 {offsets = [0, 60], sizes = [16, 1], strides = [1, 1]} : vector<16x98xf32> to vector<16x1xf32>
    %126 = vector.broadcast %125 : vector<16x1xf32> to vector<16x352xf32>
    %127 = arith.mulf %120, %126 : vector<16x352xf32>
    %128 = arith.addf %119, %127 : vector<16x352xf32>
    %129 = vector.extract_strided_slice %14 {offsets = [0, 27], sizes = [16, 352], strides = [1, 1]} : vector<16x492xf32> to vector<16x352xf32>
    %130 = vector.extract_strided_slice %11 {offsets = [0, 12], sizes = [16, 1], strides = [1, 1]} : vector<16x98xf32> to vector<16x1xf32>
    %131 = vector.broadcast %130 : vector<16x1xf32> to vector<16x352xf32>
    %132 = arith.mulf %129, %131 : vector<16x352xf32>
    %133 = arith.addf %124, %132 : vector<16x352xf32>
    %134 = vector.extract_strided_slice %11 {offsets = [0, 61], sizes = [16, 1], strides = [1, 1]} : vector<16x98xf32> to vector<16x1xf32>
    %135 = vector.broadcast %134 : vector<16x1xf32> to vector<16x352xf32>
    %136 = arith.mulf %129, %135 : vector<16x352xf32>
    %137 = arith.addf %128, %136 : vector<16x352xf32>
    %138 = vector.extract_strided_slice %14 {offsets = [0, 28], sizes = [16, 352], strides = [1, 1]} : vector<16x492xf32> to vector<16x352xf32>
    %139 = vector.extract_strided_slice %11 {offsets = [0, 13], sizes = [16, 1], strides = [1, 1]} : vector<16x98xf32> to vector<16x1xf32>
    %140 = vector.broadcast %139 : vector<16x1xf32> to vector<16x352xf32>
    %141 = arith.mulf %138, %140 : vector<16x352xf32>
    %142 = arith.addf %133, %141 : vector<16x352xf32>
    %143 = vector.extract_strided_slice %11 {offsets = [0, 62], sizes = [16, 1], strides = [1, 1]} : vector<16x98xf32> to vector<16x1xf32>
    %144 = vector.broadcast %143 : vector<16x1xf32> to vector<16x352xf32>
    %145 = arith.mulf %138, %144 : vector<16x352xf32>
    %146 = arith.addf %137, %145 : vector<16x352xf32>
    %147 = vector.extract_strided_slice %14 {offsets = [0, 44], sizes = [16, 352], strides = [1, 1]} : vector<16x492xf32> to vector<16x352xf32>
    %148 = vector.extract_strided_slice %11 {offsets = [0, 14], sizes = [16, 1], strides = [1, 1]} : vector<16x98xf32> to vector<16x1xf32>
    %149 = vector.broadcast %148 : vector<16x1xf32> to vector<16x352xf32>
    %150 = arith.mulf %147, %149 : vector<16x352xf32>
    %151 = arith.addf %142, %150 : vector<16x352xf32>
    %152 = vector.extract_strided_slice %11 {offsets = [0, 63], sizes = [16, 1], strides = [1, 1]} : vector<16x98xf32> to vector<16x1xf32>
    %153 = vector.broadcast %152 : vector<16x1xf32> to vector<16x352xf32>
    %154 = arith.mulf %147, %153 : vector<16x352xf32>
    %155 = arith.addf %146, %154 : vector<16x352xf32>
    %156 = vector.extract_strided_slice %14 {offsets = [0, 45], sizes = [16, 352], strides = [1, 1]} : vector<16x492xf32> to vector<16x352xf32>
    %157 = vector.extract_strided_slice %11 {offsets = [0, 15], sizes = [16, 1], strides = [1, 1]} : vector<16x98xf32> to vector<16x1xf32>
    %158 = vector.broadcast %157 : vector<16x1xf32> to vector<16x352xf32>
    %159 = arith.mulf %156, %158 : vector<16x352xf32>
    %160 = arith.addf %151, %159 : vector<16x352xf32>
    %161 = vector.extract_strided_slice %11 {offsets = [0, 64], sizes = [16, 1], strides = [1, 1]} : vector<16x98xf32> to vector<16x1xf32>
    %162 = vector.broadcast %161 : vector<16x1xf32> to vector<16x352xf32>
    %163 = arith.mulf %156, %162 : vector<16x352xf32>
    %164 = arith.addf %155, %163 : vector<16x352xf32>
    %165 = vector.extract_strided_slice %14 {offsets = [0, 46], sizes = [16, 352], strides = [1, 1]} : vector<16x492xf32> to vector<16x352xf32>
    %166 = vector.extract_strided_slice %11 {offsets = [0, 16], sizes = [16, 1], strides = [1, 1]} : vector<16x98xf32> to vector<16x1xf32>
    %167 = vector.broadcast %166 : vector<16x1xf32> to vector<16x352xf32>
    %168 = arith.mulf %165, %167 : vector<16x352xf32>
    %169 = arith.addf %160, %168 : vector<16x352xf32>
    %170 = vector.extract_strided_slice %11 {offsets = [0, 65], sizes = [16, 1], strides = [1, 1]} : vector<16x98xf32> to vector<16x1xf32>
    %171 = vector.broadcast %170 : vector<16x1xf32> to vector<16x352xf32>
    %172 = arith.mulf %165, %171 : vector<16x352xf32>
    %173 = arith.addf %164, %172 : vector<16x352xf32>
    %174 = vector.extract_strided_slice %14 {offsets = [0, 47], sizes = [16, 352], strides = [1, 1]} : vector<16x492xf32> to vector<16x352xf32>
    %175 = vector.extract_strided_slice %11 {offsets = [0, 17], sizes = [16, 1], strides = [1, 1]} : vector<16x98xf32> to vector<16x1xf32>
    %176 = vector.broadcast %175 : vector<16x1xf32> to vector<16x352xf32>
    %177 = arith.mulf %174, %176 : vector<16x352xf32>
    %178 = arith.addf %169, %177 : vector<16x352xf32>
    %179 = vector.extract_strided_slice %11 {offsets = [0, 66], sizes = [16, 1], strides = [1, 1]} : vector<16x98xf32> to vector<16x1xf32>
    %180 = vector.broadcast %179 : vector<16x1xf32> to vector<16x352xf32>
    %181 = arith.mulf %174, %180 : vector<16x352xf32>
    %182 = arith.addf %173, %181 : vector<16x352xf32>
    %183 = vector.extract_strided_slice %14 {offsets = [0, 48], sizes = [16, 352], strides = [1, 1]} : vector<16x492xf32> to vector<16x352xf32>
    %184 = vector.extract_strided_slice %11 {offsets = [0, 18], sizes = [16, 1], strides = [1, 1]} : vector<16x98xf32> to vector<16x1xf32>
    %185 = vector.broadcast %184 : vector<16x1xf32> to vector<16x352xf32>
    %186 = arith.mulf %183, %185 : vector<16x352xf32>
    %187 = arith.addf %178, %186 : vector<16x352xf32>
    %188 = vector.extract_strided_slice %11 {offsets = [0, 67], sizes = [16, 1], strides = [1, 1]} : vector<16x98xf32> to vector<16x1xf32>
    %189 = vector.broadcast %188 : vector<16x1xf32> to vector<16x352xf32>
    %190 = arith.mulf %183, %189 : vector<16x352xf32>
    %191 = arith.addf %182, %190 : vector<16x352xf32>
    %192 = vector.extract_strided_slice %14 {offsets = [0, 49], sizes = [16, 352], strides = [1, 1]} : vector<16x492xf32> to vector<16x352xf32>
    %193 = vector.extract_strided_slice %11 {offsets = [0, 19], sizes = [16, 1], strides = [1, 1]} : vector<16x98xf32> to vector<16x1xf32>
    %194 = vector.broadcast %193 : vector<16x1xf32> to vector<16x352xf32>
    %195 = arith.mulf %192, %194 : vector<16x352xf32>
    %196 = arith.addf %187, %195 : vector<16x352xf32>
    %197 = vector.extract_strided_slice %11 {offsets = [0, 68], sizes = [16, 1], strides = [1, 1]} : vector<16x98xf32> to vector<16x1xf32>
    %198 = vector.broadcast %197 : vector<16x1xf32> to vector<16x352xf32>
    %199 = arith.mulf %192, %198 : vector<16x352xf32>
    %200 = arith.addf %191, %199 : vector<16x352xf32>
    %201 = vector.extract_strided_slice %14 {offsets = [0, 50], sizes = [16, 352], strides = [1, 1]} : vector<16x492xf32> to vector<16x352xf32>
    %202 = vector.extract_strided_slice %11 {offsets = [0, 20], sizes = [16, 1], strides = [1, 1]} : vector<16x98xf32> to vector<16x1xf32>
    %203 = vector.broadcast %202 : vector<16x1xf32> to vector<16x352xf32>
    %204 = arith.mulf %201, %203 : vector<16x352xf32>
    %205 = arith.addf %196, %204 : vector<16x352xf32>
    %206 = vector.extract_strided_slice %11 {offsets = [0, 69], sizes = [16, 1], strides = [1, 1]} : vector<16x98xf32> to vector<16x1xf32>
    %207 = vector.broadcast %206 : vector<16x1xf32> to vector<16x352xf32>
    %208 = arith.mulf %201, %207 : vector<16x352xf32>
    %209 = arith.addf %200, %208 : vector<16x352xf32>
    %210 = vector.extract_strided_slice %14 {offsets = [0, 66], sizes = [16, 352], strides = [1, 1]} : vector<16x492xf32> to vector<16x352xf32>
    %211 = vector.extract_strided_slice %11 {offsets = [0, 21], sizes = [16, 1], strides = [1, 1]} : vector<16x98xf32> to vector<16x1xf32>
    %212 = vector.broadcast %211 : vector<16x1xf32> to vector<16x352xf32>
    %213 = arith.mulf %210, %212 : vector<16x352xf32>
    %214 = arith.addf %205, %213 : vector<16x352xf32>
    %215 = vector.extract_strided_slice %11 {offsets = [0, 70], sizes = [16, 1], strides = [1, 1]} : vector<16x98xf32> to vector<16x1xf32>
    %216 = vector.broadcast %215 : vector<16x1xf32> to vector<16x352xf32>
    %217 = arith.mulf %210, %216 : vector<16x352xf32>
    %218 = arith.addf %209, %217 : vector<16x352xf32>
    %219 = vector.extract_strided_slice %14 {offsets = [0, 67], sizes = [16, 352], strides = [1, 1]} : vector<16x492xf32> to vector<16x352xf32>
    %220 = vector.extract_strided_slice %11 {offsets = [0, 22], sizes = [16, 1], strides = [1, 1]} : vector<16x98xf32> to vector<16x1xf32>
    %221 = vector.broadcast %220 : vector<16x1xf32> to vector<16x352xf32>
    %222 = arith.mulf %219, %221 : vector<16x352xf32>
    %223 = arith.addf %214, %222 : vector<16x352xf32>
    %224 = vector.extract_strided_slice %11 {offsets = [0, 71], sizes = [16, 1], strides = [1, 1]} : vector<16x98xf32> to vector<16x1xf32>
    %225 = vector.broadcast %224 : vector<16x1xf32> to vector<16x352xf32>
    %226 = arith.mulf %219, %225 : vector<16x352xf32>
    %227 = arith.addf %218, %226 : vector<16x352xf32>
    %228 = vector.extract_strided_slice %14 {offsets = [0, 68], sizes = [16, 352], strides = [1, 1]} : vector<16x492xf32> to vector<16x352xf32>
    %229 = vector.extract_strided_slice %11 {offsets = [0, 23], sizes = [16, 1], strides = [1, 1]} : vector<16x98xf32> to vector<16x1xf32>
    %230 = vector.broadcast %229 : vector<16x1xf32> to vector<16x352xf32>
    %231 = arith.mulf %228, %230 : vector<16x352xf32>
    %232 = arith.addf %223, %231 : vector<16x352xf32>
    %233 = vector.extract_strided_slice %11 {offsets = [0, 72], sizes = [16, 1], strides = [1, 1]} : vector<16x98xf32> to vector<16x1xf32>
    %234 = vector.broadcast %233 : vector<16x1xf32> to vector<16x352xf32>
    %235 = arith.mulf %228, %234 : vector<16x352xf32>
    %236 = arith.addf %227, %235 : vector<16x352xf32>
    %237 = vector.extract_strided_slice %14 {offsets = [0, 69], sizes = [16, 352], strides = [1, 1]} : vector<16x492xf32> to vector<16x352xf32>
    %238 = vector.extract_strided_slice %11 {offsets = [0, 24], sizes = [16, 1], strides = [1, 1]} : vector<16x98xf32> to vector<16x1xf32>
    %239 = vector.broadcast %238 : vector<16x1xf32> to vector<16x352xf32>
    %240 = arith.mulf %237, %239 : vector<16x352xf32>
    %241 = arith.addf %232, %240 : vector<16x352xf32>
    %242 = vector.extract_strided_slice %11 {offsets = [0, 73], sizes = [16, 1], strides = [1, 1]} : vector<16x98xf32> to vector<16x1xf32>
    %243 = vector.broadcast %242 : vector<16x1xf32> to vector<16x352xf32>
    %244 = arith.mulf %237, %243 : vector<16x352xf32>
    %245 = arith.addf %236, %244 : vector<16x352xf32>
    %246 = vector.extract_strided_slice %14 {offsets = [0, 70], sizes = [16, 352], strides = [1, 1]} : vector<16x492xf32> to vector<16x352xf32>
    %247 = vector.extract_strided_slice %11 {offsets = [0, 25], sizes = [16, 1], strides = [1, 1]} : vector<16x98xf32> to vector<16x1xf32>
    %248 = vector.broadcast %247 : vector<16x1xf32> to vector<16x352xf32>
    %249 = arith.mulf %246, %248 : vector<16x352xf32>
    %250 = arith.addf %241, %249 : vector<16x352xf32>
    %251 = vector.extract_strided_slice %11 {offsets = [0, 74], sizes = [16, 1], strides = [1, 1]} : vector<16x98xf32> to vector<16x1xf32>
    %252 = vector.broadcast %251 : vector<16x1xf32> to vector<16x352xf32>
    %253 = arith.mulf %246, %252 : vector<16x352xf32>
    %254 = arith.addf %245, %253 : vector<16x352xf32>
    %255 = vector.extract_strided_slice %14 {offsets = [0, 71], sizes = [16, 352], strides = [1, 1]} : vector<16x492xf32> to vector<16x352xf32>
    %256 = vector.extract_strided_slice %11 {offsets = [0, 26], sizes = [16, 1], strides = [1, 1]} : vector<16x98xf32> to vector<16x1xf32>
    %257 = vector.broadcast %256 : vector<16x1xf32> to vector<16x352xf32>
    %258 = arith.mulf %255, %257 : vector<16x352xf32>
    %259 = arith.addf %250, %258 : vector<16x352xf32>
    %260 = vector.extract_strided_slice %11 {offsets = [0, 75], sizes = [16, 1], strides = [1, 1]} : vector<16x98xf32> to vector<16x1xf32>
    %261 = vector.broadcast %260 : vector<16x1xf32> to vector<16x352xf32>
    %262 = arith.mulf %255, %261 : vector<16x352xf32>
    %263 = arith.addf %254, %262 : vector<16x352xf32>
    %264 = vector.extract_strided_slice %14 {offsets = [0, 72], sizes = [16, 352], strides = [1, 1]} : vector<16x492xf32> to vector<16x352xf32>
    %265 = vector.extract_strided_slice %11 {offsets = [0, 27], sizes = [16, 1], strides = [1, 1]} : vector<16x98xf32> to vector<16x1xf32>
    %266 = vector.broadcast %265 : vector<16x1xf32> to vector<16x352xf32>
    %267 = arith.mulf %264, %266 : vector<16x352xf32>
    %268 = arith.addf %259, %267 : vector<16x352xf32>
    %269 = vector.extract_strided_slice %11 {offsets = [0, 76], sizes = [16, 1], strides = [1, 1]} : vector<16x98xf32> to vector<16x1xf32>
    %270 = vector.broadcast %269 : vector<16x1xf32> to vector<16x352xf32>
    %271 = arith.mulf %264, %270 : vector<16x352xf32>
    %272 = arith.addf %263, %271 : vector<16x352xf32>
    %273 = vector.extract_strided_slice %14 {offsets = [0, 88], sizes = [16, 352], strides = [1, 1]} : vector<16x492xf32> to vector<16x352xf32>
    %274 = vector.extract_strided_slice %11 {offsets = [0, 28], sizes = [16, 1], strides = [1, 1]} : vector<16x98xf32> to vector<16x1xf32>
    %275 = vector.broadcast %274 : vector<16x1xf32> to vector<16x352xf32>
    %276 = arith.mulf %273, %275 : vector<16x352xf32>
    %277 = arith.addf %268, %276 : vector<16x352xf32>
    %278 = vector.extract_strided_slice %11 {offsets = [0, 77], sizes = [16, 1], strides = [1, 1]} : vector<16x98xf32> to vector<16x1xf32>
    %279 = vector.broadcast %278 : vector<16x1xf32> to vector<16x352xf32>
    %280 = arith.mulf %273, %279 : vector<16x352xf32>
    %281 = arith.addf %272, %280 : vector<16x352xf32>
    %282 = vector.extract_strided_slice %14 {offsets = [0, 89], sizes = [16, 352], strides = [1, 1]} : vector<16x492xf32> to vector<16x352xf32>
    %283 = vector.extract_strided_slice %11 {offsets = [0, 29], sizes = [16, 1], strides = [1, 1]} : vector<16x98xf32> to vector<16x1xf32>
    %284 = vector.broadcast %283 : vector<16x1xf32> to vector<16x352xf32>
    %285 = arith.mulf %282, %284 : vector<16x352xf32>
    %286 = arith.addf %277, %285 : vector<16x352xf32>
    %287 = vector.extract_strided_slice %11 {offsets = [0, 78], sizes = [16, 1], strides = [1, 1]} : vector<16x98xf32> to vector<16x1xf32>
    %288 = vector.broadcast %287 : vector<16x1xf32> to vector<16x352xf32>
    %289 = arith.mulf %282, %288 : vector<16x352xf32>
    %290 = arith.addf %281, %289 : vector<16x352xf32>
    %291 = vector.extract_strided_slice %14 {offsets = [0, 90], sizes = [16, 352], strides = [1, 1]} : vector<16x492xf32> to vector<16x352xf32>
    %292 = vector.extract_strided_slice %11 {offsets = [0, 30], sizes = [16, 1], strides = [1, 1]} : vector<16x98xf32> to vector<16x1xf32>
    %293 = vector.broadcast %292 : vector<16x1xf32> to vector<16x352xf32>
    %294 = arith.mulf %291, %293 : vector<16x352xf32>
    %295 = arith.addf %286, %294 : vector<16x352xf32>
    %296 = vector.extract_strided_slice %11 {offsets = [0, 79], sizes = [16, 1], strides = [1, 1]} : vector<16x98xf32> to vector<16x1xf32>
    %297 = vector.broadcast %296 : vector<16x1xf32> to vector<16x352xf32>
    %298 = arith.mulf %291, %297 : vector<16x352xf32>
    %299 = arith.addf %290, %298 : vector<16x352xf32>
    %300 = vector.extract_strided_slice %14 {offsets = [0, 91], sizes = [16, 352], strides = [1, 1]} : vector<16x492xf32> to vector<16x352xf32>
    %301 = vector.extract_strided_slice %11 {offsets = [0, 31], sizes = [16, 1], strides = [1, 1]} : vector<16x98xf32> to vector<16x1xf32>
    %302 = vector.broadcast %301 : vector<16x1xf32> to vector<16x352xf32>
    %303 = arith.mulf %300, %302 : vector<16x352xf32>
    %304 = arith.addf %295, %303 : vector<16x352xf32>
    %305 = vector.extract_strided_slice %11 {offsets = [0, 80], sizes = [16, 1], strides = [1, 1]} : vector<16x98xf32> to vector<16x1xf32>
    %306 = vector.broadcast %305 : vector<16x1xf32> to vector<16x352xf32>
    %307 = arith.mulf %300, %306 : vector<16x352xf32>
    %308 = arith.addf %299, %307 : vector<16x352xf32>
    %309 = vector.extract_strided_slice %14 {offsets = [0, 92], sizes = [16, 352], strides = [1, 1]} : vector<16x492xf32> to vector<16x352xf32>
    %310 = vector.extract_strided_slice %11 {offsets = [0, 32], sizes = [16, 1], strides = [1, 1]} : vector<16x98xf32> to vector<16x1xf32>
    %311 = vector.broadcast %310 : vector<16x1xf32> to vector<16x352xf32>
    %312 = arith.mulf %309, %311 : vector<16x352xf32>
    %313 = arith.addf %304, %312 : vector<16x352xf32>
    %314 = vector.extract_strided_slice %11 {offsets = [0, 81], sizes = [16, 1], strides = [1, 1]} : vector<16x98xf32> to vector<16x1xf32>
    %315 = vector.broadcast %314 : vector<16x1xf32> to vector<16x352xf32>
    %316 = arith.mulf %309, %315 : vector<16x352xf32>
    %317 = arith.addf %308, %316 : vector<16x352xf32>
    %318 = vector.extract_strided_slice %14 {offsets = [0, 93], sizes = [16, 352], strides = [1, 1]} : vector<16x492xf32> to vector<16x352xf32>
    %319 = vector.extract_strided_slice %11 {offsets = [0, 33], sizes = [16, 1], strides = [1, 1]} : vector<16x98xf32> to vector<16x1xf32>
    %320 = vector.broadcast %319 : vector<16x1xf32> to vector<16x352xf32>
    %321 = arith.mulf %318, %320 : vector<16x352xf32>
    %322 = arith.addf %313, %321 : vector<16x352xf32>
    %323 = vector.extract_strided_slice %11 {offsets = [0, 82], sizes = [16, 1], strides = [1, 1]} : vector<16x98xf32> to vector<16x1xf32>
    %324 = vector.broadcast %323 : vector<16x1xf32> to vector<16x352xf32>
    %325 = arith.mulf %318, %324 : vector<16x352xf32>
    %326 = arith.addf %317, %325 : vector<16x352xf32>
    %327 = vector.extract_strided_slice %14 {offsets = [0, 94], sizes = [16, 352], strides = [1, 1]} : vector<16x492xf32> to vector<16x352xf32>
    %328 = vector.extract_strided_slice %11 {offsets = [0, 34], sizes = [16, 1], strides = [1, 1]} : vector<16x98xf32> to vector<16x1xf32>
    %329 = vector.broadcast %328 : vector<16x1xf32> to vector<16x352xf32>
    %330 = arith.mulf %327, %329 : vector<16x352xf32>
    %331 = arith.addf %322, %330 : vector<16x352xf32>
    %332 = vector.extract_strided_slice %11 {offsets = [0, 83], sizes = [16, 1], strides = [1, 1]} : vector<16x98xf32> to vector<16x1xf32>
    %333 = vector.broadcast %332 : vector<16x1xf32> to vector<16x352xf32>
    %334 = arith.mulf %327, %333 : vector<16x352xf32>
    %335 = arith.addf %326, %334 : vector<16x352xf32>
    %336 = vector.extract_strided_slice %14 {offsets = [0, 110], sizes = [16, 352], strides = [1, 1]} : vector<16x492xf32> to vector<16x352xf32>
    %337 = vector.extract_strided_slice %11 {offsets = [0, 35], sizes = [16, 1], strides = [1, 1]} : vector<16x98xf32> to vector<16x1xf32>
    %338 = vector.broadcast %337 : vector<16x1xf32> to vector<16x352xf32>
    %339 = arith.mulf %336, %338 : vector<16x352xf32>
    %340 = arith.addf %331, %339 : vector<16x352xf32>
    %341 = vector.extract_strided_slice %11 {offsets = [0, 84], sizes = [16, 1], strides = [1, 1]} : vector<16x98xf32> to vector<16x1xf32>
    %342 = vector.broadcast %341 : vector<16x1xf32> to vector<16x352xf32>
    %343 = arith.mulf %336, %342 : vector<16x352xf32>
    %344 = arith.addf %335, %343 : vector<16x352xf32>
    %345 = vector.extract_strided_slice %14 {offsets = [0, 111], sizes = [16, 352], strides = [1, 1]} : vector<16x492xf32> to vector<16x352xf32>
    %346 = vector.extract_strided_slice %11 {offsets = [0, 36], sizes = [16, 1], strides = [1, 1]} : vector<16x98xf32> to vector<16x1xf32>
    %347 = vector.broadcast %346 : vector<16x1xf32> to vector<16x352xf32>
    %348 = arith.mulf %345, %347 : vector<16x352xf32>
    %349 = arith.addf %340, %348 : vector<16x352xf32>
    %350 = vector.extract_strided_slice %11 {offsets = [0, 85], sizes = [16, 1], strides = [1, 1]} : vector<16x98xf32> to vector<16x1xf32>
    %351 = vector.broadcast %350 : vector<16x1xf32> to vector<16x352xf32>
    %352 = arith.mulf %345, %351 : vector<16x352xf32>
    %353 = arith.addf %344, %352 : vector<16x352xf32>
    %354 = vector.extract_strided_slice %14 {offsets = [0, 112], sizes = [16, 352], strides = [1, 1]} : vector<16x492xf32> to vector<16x352xf32>
    %355 = vector.extract_strided_slice %11 {offsets = [0, 37], sizes = [16, 1], strides = [1, 1]} : vector<16x98xf32> to vector<16x1xf32>
    %356 = vector.broadcast %355 : vector<16x1xf32> to vector<16x352xf32>
    %357 = arith.mulf %354, %356 : vector<16x352xf32>
    %358 = arith.addf %349, %357 : vector<16x352xf32>
    %359 = vector.extract_strided_slice %11 {offsets = [0, 86], sizes = [16, 1], strides = [1, 1]} : vector<16x98xf32> to vector<16x1xf32>
    %360 = vector.broadcast %359 : vector<16x1xf32> to vector<16x352xf32>
    %361 = arith.mulf %354, %360 : vector<16x352xf32>
    %362 = arith.addf %353, %361 : vector<16x352xf32>
    %363 = vector.extract_strided_slice %14 {offsets = [0, 113], sizes = [16, 352], strides = [1, 1]} : vector<16x492xf32> to vector<16x352xf32>
    %364 = vector.extract_strided_slice %11 {offsets = [0, 38], sizes = [16, 1], strides = [1, 1]} : vector<16x98xf32> to vector<16x1xf32>
    %365 = vector.broadcast %364 : vector<16x1xf32> to vector<16x352xf32>
    %366 = arith.mulf %363, %365 : vector<16x352xf32>
    %367 = arith.addf %358, %366 : vector<16x352xf32>
    %368 = vector.extract_strided_slice %11 {offsets = [0, 87], sizes = [16, 1], strides = [1, 1]} : vector<16x98xf32> to vector<16x1xf32>
    %369 = vector.broadcast %368 : vector<16x1xf32> to vector<16x352xf32>
    %370 = arith.mulf %363, %369 : vector<16x352xf32>
    %371 = arith.addf %362, %370 : vector<16x352xf32>
    %372 = vector.extract_strided_slice %14 {offsets = [0, 114], sizes = [16, 352], strides = [1, 1]} : vector<16x492xf32> to vector<16x352xf32>
    %373 = vector.extract_strided_slice %11 {offsets = [0, 39], sizes = [16, 1], strides = [1, 1]} : vector<16x98xf32> to vector<16x1xf32>
    %374 = vector.broadcast %373 : vector<16x1xf32> to vector<16x352xf32>
    %375 = arith.mulf %372, %374 : vector<16x352xf32>
    %376 = arith.addf %367, %375 : vector<16x352xf32>
    %377 = vector.extract_strided_slice %11 {offsets = [0, 88], sizes = [16, 1], strides = [1, 1]} : vector<16x98xf32> to vector<16x1xf32>
    %378 = vector.broadcast %377 : vector<16x1xf32> to vector<16x352xf32>
    %379 = arith.mulf %372, %378 : vector<16x352xf32>
    %380 = arith.addf %371, %379 : vector<16x352xf32>
    %381 = vector.extract_strided_slice %14 {offsets = [0, 115], sizes = [16, 352], strides = [1, 1]} : vector<16x492xf32> to vector<16x352xf32>
    %382 = vector.extract_strided_slice %11 {offsets = [0, 40], sizes = [16, 1], strides = [1, 1]} : vector<16x98xf32> to vector<16x1xf32>
    %383 = vector.broadcast %382 : vector<16x1xf32> to vector<16x352xf32>
    %384 = arith.mulf %381, %383 : vector<16x352xf32>
    %385 = arith.addf %376, %384 : vector<16x352xf32>
    %386 = vector.extract_strided_slice %11 {offsets = [0, 89], sizes = [16, 1], strides = [1, 1]} : vector<16x98xf32> to vector<16x1xf32>
    %387 = vector.broadcast %386 : vector<16x1xf32> to vector<16x352xf32>
    %388 = arith.mulf %381, %387 : vector<16x352xf32>
    %389 = arith.addf %380, %388 : vector<16x352xf32>
    %390 = vector.extract_strided_slice %14 {offsets = [0, 116], sizes = [16, 352], strides = [1, 1]} : vector<16x492xf32> to vector<16x352xf32>
    %391 = vector.extract_strided_slice %11 {offsets = [0, 41], sizes = [16, 1], strides = [1, 1]} : vector<16x98xf32> to vector<16x1xf32>
    %392 = vector.broadcast %391 : vector<16x1xf32> to vector<16x352xf32>
    %393 = arith.mulf %390, %392 : vector<16x352xf32>
    %394 = arith.addf %385, %393 : vector<16x352xf32>
    %395 = vector.extract_strided_slice %11 {offsets = [0, 90], sizes = [16, 1], strides = [1, 1]} : vector<16x98xf32> to vector<16x1xf32>
    %396 = vector.broadcast %395 : vector<16x1xf32> to vector<16x352xf32>
    %397 = arith.mulf %390, %396 : vector<16x352xf32>
    %398 = arith.addf %389, %397 : vector<16x352xf32>
    %399 = vector.extract_strided_slice %14 {offsets = [0, 132], sizes = [16, 352], strides = [1, 1]} : vector<16x492xf32> to vector<16x352xf32>
    %400 = vector.extract_strided_slice %11 {offsets = [0, 42], sizes = [16, 1], strides = [1, 1]} : vector<16x98xf32> to vector<16x1xf32>
    %401 = vector.broadcast %400 : vector<16x1xf32> to vector<16x352xf32>
    %402 = arith.mulf %399, %401 : vector<16x352xf32>
    %403 = arith.addf %394, %402 : vector<16x352xf32>
    %404 = vector.extract_strided_slice %11 {offsets = [0, 91], sizes = [16, 1], strides = [1, 1]} : vector<16x98xf32> to vector<16x1xf32>
    %405 = vector.broadcast %404 : vector<16x1xf32> to vector<16x352xf32>
    %406 = arith.mulf %399, %405 : vector<16x352xf32>
    %407 = arith.addf %398, %406 : vector<16x352xf32>
    %408 = vector.extract_strided_slice %14 {offsets = [0, 133], sizes = [16, 352], strides = [1, 1]} : vector<16x492xf32> to vector<16x352xf32>
    %409 = vector.extract_strided_slice %11 {offsets = [0, 43], sizes = [16, 1], strides = [1, 1]} : vector<16x98xf32> to vector<16x1xf32>
    %410 = vector.broadcast %409 : vector<16x1xf32> to vector<16x352xf32>
    %411 = arith.mulf %408, %410 : vector<16x352xf32>
    %412 = arith.addf %403, %411 : vector<16x352xf32>
    %413 = vector.extract_strided_slice %11 {offsets = [0, 92], sizes = [16, 1], strides = [1, 1]} : vector<16x98xf32> to vector<16x1xf32>
    %414 = vector.broadcast %413 : vector<16x1xf32> to vector<16x352xf32>
    %415 = arith.mulf %408, %414 : vector<16x352xf32>
    %416 = arith.addf %407, %415 : vector<16x352xf32>
    %417 = vector.extract_strided_slice %14 {offsets = [0, 134], sizes = [16, 352], strides = [1, 1]} : vector<16x492xf32> to vector<16x352xf32>
    %418 = vector.extract_strided_slice %11 {offsets = [0, 44], sizes = [16, 1], strides = [1, 1]} : vector<16x98xf32> to vector<16x1xf32>
    %419 = vector.broadcast %418 : vector<16x1xf32> to vector<16x352xf32>
    %420 = arith.mulf %417, %419 : vector<16x352xf32>
    %421 = arith.addf %412, %420 : vector<16x352xf32>
    %422 = vector.extract_strided_slice %11 {offsets = [0, 93], sizes = [16, 1], strides = [1, 1]} : vector<16x98xf32> to vector<16x1xf32>
    %423 = vector.broadcast %422 : vector<16x1xf32> to vector<16x352xf32>
    %424 = arith.mulf %417, %423 : vector<16x352xf32>
    %425 = arith.addf %416, %424 : vector<16x352xf32>
    %426 = vector.extract_strided_slice %14 {offsets = [0, 135], sizes = [16, 352], strides = [1, 1]} : vector<16x492xf32> to vector<16x352xf32>
    %427 = vector.extract_strided_slice %11 {offsets = [0, 45], sizes = [16, 1], strides = [1, 1]} : vector<16x98xf32> to vector<16x1xf32>
    %428 = vector.broadcast %427 : vector<16x1xf32> to vector<16x352xf32>
    %429 = arith.mulf %426, %428 : vector<16x352xf32>
    %430 = arith.addf %421, %429 : vector<16x352xf32>
    %431 = vector.extract_strided_slice %11 {offsets = [0, 94], sizes = [16, 1], strides = [1, 1]} : vector<16x98xf32> to vector<16x1xf32>
    %432 = vector.broadcast %431 : vector<16x1xf32> to vector<16x352xf32>
    %433 = arith.mulf %426, %432 : vector<16x352xf32>
    %434 = arith.addf %425, %433 : vector<16x352xf32>
    %435 = vector.extract_strided_slice %14 {offsets = [0, 136], sizes = [16, 352], strides = [1, 1]} : vector<16x492xf32> to vector<16x352xf32>
    %436 = vector.extract_strided_slice %11 {offsets = [0, 46], sizes = [16, 1], strides = [1, 1]} : vector<16x98xf32> to vector<16x1xf32>
    %437 = vector.broadcast %436 : vector<16x1xf32> to vector<16x352xf32>
    %438 = arith.mulf %435, %437 : vector<16x352xf32>
    %439 = arith.addf %430, %438 : vector<16x352xf32>
    %440 = vector.extract_strided_slice %11 {offsets = [0, 95], sizes = [16, 1], strides = [1, 1]} : vector<16x98xf32> to vector<16x1xf32>
    %441 = vector.broadcast %440 : vector<16x1xf32> to vector<16x352xf32>
    %442 = arith.mulf %435, %441 : vector<16x352xf32>
    %443 = arith.addf %434, %442 : vector<16x352xf32>
    %444 = vector.extract_strided_slice %14 {offsets = [0, 137], sizes = [16, 352], strides = [1, 1]} : vector<16x492xf32> to vector<16x352xf32>
    %445 = vector.extract_strided_slice %11 {offsets = [0, 47], sizes = [16, 1], strides = [1, 1]} : vector<16x98xf32> to vector<16x1xf32>
    %446 = vector.broadcast %445 : vector<16x1xf32> to vector<16x352xf32>
    %447 = arith.mulf %444, %446 : vector<16x352xf32>
    %448 = arith.addf %439, %447 : vector<16x352xf32>
    %449 = vector.extract_strided_slice %11 {offsets = [0, 96], sizes = [16, 1], strides = [1, 1]} : vector<16x98xf32> to vector<16x1xf32>
    %450 = vector.broadcast %449 : vector<16x1xf32> to vector<16x352xf32>
    %451 = arith.mulf %444, %450 : vector<16x352xf32>
    %452 = arith.addf %443, %451 : vector<16x352xf32>
    %453 = vector.extract_strided_slice %14 {offsets = [0, 138], sizes = [16, 352], strides = [1, 1]} : vector<16x492xf32> to vector<16x352xf32>
    %454 = vector.extract_strided_slice %11 {offsets = [0, 48], sizes = [16, 1], strides = [1, 1]} : vector<16x98xf32> to vector<16x1xf32>
    %455 = vector.broadcast %454 : vector<16x1xf32> to vector<16x352xf32>
    %456 = arith.mulf %453, %455 : vector<16x352xf32>
    %457 = arith.addf %448, %456 : vector<16x352xf32>
    %458 = vector.extract_strided_slice %11 {offsets = [0, 97], sizes = [16, 1], strides = [1, 1]} : vector<16x98xf32> to vector<16x1xf32>
    %459 = vector.broadcast %458 : vector<16x1xf32> to vector<16x352xf32>
    %460 = arith.mulf %453, %459 : vector<16x352xf32>
    %461 = arith.addf %452, %460 : vector<16x352xf32>
    %cst_21 = arith.constant 0.707106769 : f32
    %462 = vector.broadcast %cst_21 : f32 to vector<16x352xf32>
    %463 = arith.mulf %457, %462 : vector<16x352xf32>
    %464 = math.absf %463 : vector<16x352xf32>
    %cst_22 = arith.constant 0.327591091 : f32
    %465 = vector.broadcast %cst_22 : f32 to vector<16x352xf32>
    %466 = arith.mulf %465, %464 : vector<16x352xf32>
    %cst_23 = arith.constant 1.000000e+00 : f32
    %467 = vector.broadcast %cst_23 : f32 to vector<16x352xf32>
    %468 = arith.addf %467, %466 : vector<16x352xf32>
    %cst_24 = arith.constant 1.000000e+00 : f32
    %469 = vector.broadcast %cst_24 : f32 to vector<16x352xf32>
    %470 = arith.divf %469, %468 : vector<16x352xf32>
    %cst_25 = arith.constant 1.06140542 : f32
    %471 = vector.broadcast %cst_25 : f32 to vector<16x352xf32>
    %472 = arith.mulf %471, %470 : vector<16x352xf32>
    %cst_26 = arith.constant 1.45315206 : f32
    %473 = vector.broadcast %cst_26 : f32 to vector<16x352xf32>
    %474 = arith.subf %472, %473 : vector<16x352xf32>
    %475 = arith.mulf %474, %470 : vector<16x352xf32>
    %cst_27 = arith.constant 1.42141378 : f32
    %476 = vector.broadcast %cst_27 : f32 to vector<16x352xf32>
    %477 = arith.addf %475, %476 : vector<16x352xf32>
    %478 = arith.mulf %477, %470 : vector<16x352xf32>
    %cst_28 = arith.constant 0.284496725 : f32
    %479 = vector.broadcast %cst_28 : f32 to vector<16x352xf32>
    %480 = arith.subf %478, %479 : vector<16x352xf32>
    %481 = arith.mulf %480, %470 : vector<16x352xf32>
    %cst_29 = arith.constant 0.254829586 : f32
    %482 = vector.broadcast %cst_29 : f32 to vector<16x352xf32>
    %483 = arith.addf %481, %482 : vector<16x352xf32>
    %484 = arith.mulf %483, %470 : vector<16x352xf32>
    %cst_30 = arith.constant 0.000000e+00 : f32
    %485 = vector.broadcast %cst_30 : f32 to vector<16x352xf32>
    %486 = arith.subf %485, %464 : vector<16x352xf32>
    %487 = arith.mulf %486, %464 : vector<16x352xf32>
    %488 = math.exp %487 : vector<16x352xf32>
    %489 = arith.mulf %484, %488 : vector<16x352xf32>
    %cst_31 = arith.constant 1.000000e+00 : f32
    %490 = vector.broadcast %cst_31 : f32 to vector<16x352xf32>
    %491 = arith.subf %490, %489 : vector<16x352xf32>
    %cst_32 = arith.constant 0.000000e+00 : f32
    %492 = vector.broadcast %cst_32 : f32 to vector<16x352xf32>
    %493 = arith.cmpf oge, %463, %492 : vector<16x352xf32>
    %cst_33 = arith.constant 0.000000e+00 : f32
    %494 = vector.broadcast %cst_33 : f32 to vector<16x352xf32>
    %495 = arith.subf %494, %491 : vector<16x352xf32>
    %496 = arith.select %493, %491, %495 : vector<16x352xi1>, vector<16x352xf32>
    %cst_34 = arith.constant 5.000000e-01 : f32
    %497 = vector.broadcast %cst_34 : f32 to vector<16x352xf32>
    %498 = arith.mulf %497, %457 : vector<16x352xf32>
    %cst_35 = arith.constant 1.000000e+00 : f32
    %499 = vector.broadcast %cst_35 : f32 to vector<16x352xf32>
    %500 = arith.addf %499, %496 : vector<16x352xf32>
    %501 = arith.mulf %498, %500 : vector<16x352xf32>
    %cst_36 = arith.constant 0.000000e+00 : f32
    %502 = vector.broadcast %cst_36 : f32 to vector<16x352xf32>
    %503 = arith.subf %502, %461 : vector<16x352xf32>
    %504 = math.exp %503 : vector<16x352xf32>
    %cst_37 = arith.constant 1.000000e+00 : f32
    %505 = vector.broadcast %cst_37 : f32 to vector<16x352xf32>
    %506 = arith.addf %505, %504 : vector<16x352xf32>
    %cst_38 = arith.constant 1.000000e+00 : f32
    %507 = vector.broadcast %cst_38 : f32 to vector<16x352xf32>
    %508 = arith.divf %507, %506 : vector<16x352xf32>
    %509 = arith.mulf %501, %508 : vector<16x352xf32>
    %cst_39 = arith.constant dense<0.000000e+00> : vector<16x352xf32>
    %510 = tpu.matmul %12, %509, %cst_39 {dimension_numbers = #tpu.dot_dimension_numbers<[1], [0], [0], [1], [0, 0, 1, 1], [], []>} : vector<16x16xf32>, vector<16x352xf32>, vector<16x352xf32> -> vector<16x352xf32>
    %511 = vector.broadcast %13 : vector<16x1xf32> to vector<16x352xf32>
    %512 = arith.addf %510, %511 : vector<16x352xf32>
    %c0_40 = arith.constant 0 : index
    %c0_41 = arith.constant 0 : index
    %c0_42 = arith.constant 0 : index
    %513 = vector.load %arg9[%c0_40, %c0_41, %c0_42] : memref<1x16x352xf32, #tpu.memory_space<vmem>>, vector<1x16x352xf32>
    %514 = vector.shape_cast %513 : vector<1x16x352xf32> to vector<16x352xf32>
    %515 = vector.shape_cast %512 : vector<16x352xf32> to vector<1x16x352xf32>
    tpu.vector_store %arg9[%c0_40, %c0_41, %c0_42], %515 {strides = array<i32>} : memref<1x16x352xf32, #tpu.memory_space<vmem>>, vector<1x16x352xf32>,
    return
  }
  func.func @transform_0(%arg0: i32) -> (i32, i32, i32) {
    %c0_i32 = arith.constant 0 : i32
    %c0_i32_0 = arith.constant 0 : i32
    %c0_i32_1 = arith.constant 0 : i32
    return %arg0, %c0_i32, %c0_i32_0 : i32, i32, i32
  }
  func.func @transform_1(%arg0: i32) -> (i32, i32) {
    %c0_i32 = arith.constant 0 : i32
    %c0_i32_0 = arith.constant 0 : i32
    %c0_i32_1 = arith.constant 0 : i32
    return %c0_i32, %c0_i32_0 : i32, i32
  }
  func.func @transform_2(%arg0: i32) -> (i32, i32) {
    %c0_i32 = arith.constant 0 : i32
    %c0_i32_0 = arith.constant 0 : i32
    %c0_i32_1 = arith.constant 0 : i32
    return %c0_i32, %c0_i32_0 : i32, i32
  }
  func.func @transform_3(%arg0: i32) -> (i32, i32) {
    %c0_i32 = arith.constant 0 : i32
    %c0_i32_0 = arith.constant 0 : i32
    %c0_i32_1 = arith.constant 0 : i32
    return %c0_i32, %c0_i32_0 : i32, i32
  }
  func.func @transform_4(%arg0: i32) -> (i32, i32) {
    %c0_i32 = arith.constant 0 : i32
    %c0_i32_0 = arith.constant 0 : i32
    %c0_i32_1 = arith.constant 0 : i32
    return %c0_i32, %c0_i32_0 : i32, i32
  }
  func.func @transform_5(%arg0: i32) -> (i32, i32) {
    %c0_i32 = arith.constant 0 : i32
    %c0_i32_0 = arith.constant 0 : i32
    %c0_i32_1 = arith.constant 0 : i32
    return %c0_i32, %c0_i32_0 : i32, i32
  }
  func.func @transform_6(%arg0: i32) -> (i32, i32) {
    %c0_i32 = arith.constant 0 : i32
    %c0_i32_0 = arith.constant 0 : i32
    %c0_i32_1 = arith.constant 0 : i32
    return %c0_i32, %c0_i32_0 : i32, i32
  }
  func.func @transform_7(%arg0: i32) -> (i32, i32) {
    %c0_i32 = arith.constant 0 : i32
    %c0_i32_0 = arith.constant 0 : i32
    %c0_i32_1 = arith.constant 0 : i32
    return %c0_i32, %c0_i32_0 : i32, i32
  }
  func.func @transform_8(%arg0: i32) -> (i32, i32, i32) {
    %c0_i32 = arith.constant 0 : i32
    %c0_i32_0 = arith.constant 0 : i32
    %c0_i32_1 = arith.constant 0 : i32
    return %arg0, %c0_i32, %c0_i32_0 : i32, i32, i32
  }
}

</mosaic_0001>

<llo_original>
// kernel: dual_adaptive_neural_block.1
$region0: #{dual_adaptive_neural_block.1}
  #allocation0 [shape = 'u32[]', space=smem, size = 0x4, offset = 0x4, fixed_abs, tag = 'smem constant byte address 0x4 - core index']
  #allocation1 [shape = 'u32[72,128]{1,0:T(1,128)}', space=vmem, size = 0x9000, scoped, tag = 'internal scratch']
  #allocation2 [shape = 'f32[16,492]{1,0:T(8,128)}', space=vmem, size = 0x8000, scoped, tag = 'scratch operand']
  %s0 = inlined_call_operand.vmem [shape: f32[2,16,492], index: 0, kind: input, shape index: {}]
  %s1 = inlined_call_operand.vmem [shape: f32[1,492], index: 1, kind: input, shape index: {}]
  %s2 = inlined_call_operand.vmem [shape: f32[16,16], index: 2, kind: input, shape index: {}]
  %s3 = inlined_call_operand.vmem [shape: f32[16,1], index: 3, kind: input, shape index: {}]
  %s4 = inlined_call_operand.vmem [shape: f32[16,98], index: 4, kind: input, shape index: {}]
  %s5 = inlined_call_operand.vmem [shape: f32[16,2], index: 5, kind: input, shape index: {}]
  %s6 = inlined_call_operand.vmem [shape: f32[16,16], index: 6, kind: input, shape index: {}]
  %s7 = inlined_call_operand.vmem [shape: f32[16,1], index: 7, kind: input, shape index: {}]
  %s8 = inlined_call_operand.vmem [shape: f32[2,16,352], index: 8, kind: output, shape index: {}]
  %s9 = sld [smem:[#allocation0]]
  $region65: #{dual_adaptive_neural_block.1} parent=0
    _
  %s11 = ssub.s32 1, %s9
  %s12 = scalar_select 0, %s11, %s9
  loop: start=0, step=1, limit=4
  $region2: #{dual_adaptive_neural_block.1} parent=0 // loop_pre_header
    _
  $region3: #{dual_adaptive_neural_block.1} parent=0 // loop_header
    %s14 = sphi 0, %s18
    %p15 = scmp.ge.s32.totalorder %s14, 4
    %s24 = sphi 0, %s26
    %s27 = sphi 0, %s24
    %s28 = sphi 0, %s27
    %s44 = sphi 0, %s28
    %s48 = sphi 0, %s48
    %s50 = sphi 0, %s48
    %s51 = sphi 0, %s50
    %s65 = sphi 0, %s51
    %s69 = sphi 0, %s69
    %s71 = sphi 0, %s69
    %s72 = sphi 0, %s71
    %s86 = sphi 0, %s72
    %s90 = sphi 0, %s90
    %s92 = sphi 0, %s90
    %s93 = sphi 0, %s92
    %s107 = sphi 0, %s93
    %s111 = sphi 0, %s111
    %s113 = sphi 0, %s111
    %s114 = sphi 0, %s113
    %s128 = sphi 0, %s114
    %s132 = sphi 0, %s132
    %s134 = sphi 0, %s132
    %s135 = sphi 0, %s134
    %s149 = sphi 0, %s135
    %s153 = sphi 0, %s153
    %s155 = sphi 0, %s153
    %s156 = sphi 0, %s155
    %s170 = sphi 0, %s156
    %s174 = sphi 0, %s174
    %s176 = sphi 0, %s174
    %s177 = sphi 0, %s176
    %s191 = sphi 0, %s177
    %s197 = sphi 0, %s199
    %s200 = sphi 0, %s197
    %s201 = sphi 0, %s200
    %s217 = sphi 0, %s201
  $region4: #{dual_adaptive_neural_block.1} parent=0 // loop_header_branch
    %17 = sbr.rel (%p15) target = $region8
  $region5: #{dual_adaptive_neural_block.1} parent=0 // loop_body
    %s19 = ssub.s32 %s14, 1
    %s20 = ssub.s32 %s14, 2
    %s21 = sadd.s32 %s14, 1
    %s22 = ssub.s32 %s14, %s21
    %p23 = scmp.eq.s32.totalorder %s22, 0
    %s25 = sadd.s32 %s24, 1
    %s26 = scalar_select %p23, %s24, %s25
    %p29 = pneg %p23
    %p30 = scmp.eq.s32.totalorder %s14, 1
    %p31 = por %p29, %p30
    %p32 = scmp.ne.s32.totalorder %s24, %s27
    %p33 = scmp.eq.s32.totalorder %s14, 0
    %p34 = por %p32, %p33
    %p35 = scmp.ne.s32.totalorder %s24, %s27
    %p36 = scmp.eq.s32.totalorder %s19, 1
    %p37 = por %p35, %p36
    %p38 = scmp.ne.s32.totalorder %s27, %s28
    %p39 = scmp.eq.s32.totalorder %s19, 0
    %p40 = por %p38, %p39
    %p41 = scmp.ne.s32.totalorder %s27, %s28
    %p42 = scmp.eq.s32.totalorder %s20, 1
    %p43 = por %p41, %p42
    %p45 = scmp.ne.s32.totalorder %s28, %s44
    %p46 = scmp.eq.s32.totalorder %s20, 0
    %p47 = por %p45, %p46
    %s49 = sadd.s32 %s48, 1
    %p52 = scmp.eq.s32.totalorder %s14, 1
    %p53 = scmp.ne.s32.totalorder %s48, %s50
    %p54 = scmp.eq.s32.totalorder %s14, 0
    %p55 = por %p53, %p54
    %p56 = scmp.ne.s32.totalorder %s48, %s50
    %p57 = scmp.eq.s32.totalorder %s19, 1
    %p58 = por %p56, %p57
    %p59 = scmp.ne.s32.totalorder %s50, %s51
    %p60 = scmp.eq.s32.totalorder %s19, 0
    %p61 = por %p59, %p60
    %p62 = scmp.ne.s32.totalorder %s50, %s51
    %p63 = scmp.eq.s32.totalorder %s20, 1
    %p64 = por %p62, %p63
    %p66 = scmp.ne.s32.totalorder %s51, %s65
    %p67 = scmp.eq.s32.totalorder %s20, 0
    %p68 = por %p66, %p67
    %s70 = sadd.s32 %s69, 1
    %p73 = scmp.eq.s32.totalorder %s14, 1
    %p74 = scmp.ne.s32.totalorder %s69, %s71
    %p75 = scmp.eq.s32.totalorder %s14, 0
    %p76 = por %p74, %p75
    %p77 = scmp.ne.s32.totalorder %s69, %s71
    %p78 = scmp.eq.s32.totalorder %s19, 1
    %p79 = por %p77, %p78
    %p80 = scmp.ne.s32.totalorder %s71, %s72
    %p81 = scmp.eq.s32.totalorder %s19, 0
    %p82 = por %p80, %p81
    %p83 = scmp.ne.s32.totalorder %s71, %s72
    %p84 = scmp.eq.s32.totalorder %s20, 1
    %p85 = por %p83, %p84
    %p87 = scmp.ne.s32.totalorder %s72, %s86
    %p88 = scmp.eq.s32.totalorder %s20, 0
    %p89 = por %p87, %p88
    %s91 = sadd.s32 %s90, 1
    %p94 = scmp.eq.s32.totalorder %s14, 1
    %p95 = scmp.ne.s32.totalorder %s90, %s92
    %p96 = scmp.eq.s32.totalorder %s14, 0
    %p97 = por %p95, %p96
    %p98 = scmp.ne.s32.totalorder %s90, %s92
    %p99 = scmp.eq.s32.totalorder %s19, 1
    %p100 = por %p98, %p99
    %p101 = scmp.ne.s32.totalorder %s92, %s93
    %p102 = scmp.eq.s32.totalorder %s19, 0
    %p103 = por %p101, %p102
    %p104 = scmp.ne.s32.totalorder %s92, %s93
    %p105 = scmp.eq.s32.totalorder %s20, 1
    %p106 = por %p104, %p105
    %p108 = scmp.ne.s32.totalorder %s93, %s107
    %p109 = scmp.eq.s32.totalorder %s20, 0
    %p110 = por %p108, %p109
    %s112 = sadd.s32 %s111, 1
    %p115 = scmp.eq.s32.totalorder %s14, 1
    %p116 = scmp.ne.s32.totalorder %s111, %s113
    %p117 = scmp.eq.s32.totalorder %s14, 0
    %p118 = por %p116, %p117
    %p119 = scmp.ne.s32.totalorder %s111, %s113
    %p120 = scmp.eq.s32.totalorder %s19, 1
    %p121 = por %p119, %p120
    %p122 = scmp.ne.s32.totalorder %s113, %s114
    %p123 = scmp.eq.s32.totalorder %s19, 0
    %p124 = por %p122, %p123
    %p125 = scmp.ne.s32.totalorder %s113, %s114
    %p126 = scmp.eq.s32.totalorder %s20, 1
    %p127 = por %p125, %p126
    %p129 = scmp.ne.s32.totalorder %s114, %s128
    %p130 = scmp.eq.s32.totalorder %s20, 0
    %p131 = por %p129, %p130
    %s133 = sadd.s32 %s132, 1
    %p136 = scmp.eq.s32.totalorder %s14, 1
    %p137 = scmp.ne.s32.totalorder %s132, %s134
    %p138 = scmp.eq.s32.totalorder %s14, 0
    %p139 = por %p137, %p138
    %p140 = scmp.ne.s32.totalorder %s132, %s134
    %p141 = scmp.eq.s32.totalorder %s19, 1
    %p142 = por %p140, %p141
    %p143 = scmp.ne.s32.totalorder %s134, %s135
    %p144 = scmp.eq.s32.totalorder %s19, 0
    %p145 = por %p143, %p144
    %p146 = scmp.ne.s32.totalorder %s134, %s135
    %p147 = scmp.eq.s32.totalorder %s20, 1
    %p148 = por %p146, %p147
    %p150 = scmp.ne.s32.totalorder %s135, %s149
    %p151 = scmp.eq.s32.totalorder %s20, 0
    %p152 = por %p150, %p151
    %s154 = sadd.s32 %s153, 1
    %p157 = scmp.eq.s32.totalorder %s14, 1
    %p158 = scmp.ne.s32.totalorder %s153, %s155
    %p159 = scmp.eq.s32.totalorder %s14, 0
    %p160 = por %p158, %p159
    %p161 = scmp.ne.s32.totalorder %s153, %s155
    %p162 = scmp.eq.s32.totalorder %s19, 1
    %p163 = por %p161, %p162
    %p164 = scmp.ne.s32.totalorder %s155, %s156
    %p165 = scmp.eq.s32.totalorder %s19, 0
    %p166 = por %p164, %p165
    %p167 = scmp.ne.s32.totalorder %s155, %s156
    %p168 = scmp.eq.s32.totalorder %s20, 1
    %p169 = por %p167, %p168
    %p171 = scmp.ne.s32.totalorder %s156, %s170
    %p172 = scmp.eq.s32.totalorder %s20, 0
    %p173 = por %p171, %p172
    %s175 = sadd.s32 %s174, 1
    %p178 = scmp.eq.s32.totalorder %s14, 1
    %p179 = scmp.ne.s32.totalorder %s174, %s176
    %p180 = scmp.eq.s32.totalorder %s14, 0
    %p181 = por %p179, %p180
    %p182 = scmp.ne.s32.totalorder %s174, %s176
    %p183 = scmp.eq.s32.totalorder %s19, 1
    %p184 = por %p182, %p183
    %p185 = scmp.ne.s32.totalorder %s176, %s177
    %p186 = scmp.eq.s32.totalorder %s19, 0
    %p187 = por %p185, %p186
    %p188 = scmp.ne.s32.totalorder %s176, %s177
    %p189 = scmp.eq.s32.totalorder %s20, 1
    %p190 = por %p188, %p189
    %p192 = scmp.ne.s32.totalorder %s177, %s191
    %p193 = scmp.eq.s32.totalorder %s20, 0
    %p194 = por %p192, %p193
    %s195 = ssub.s32 %s14, %s21
    %p196 = scmp.eq.s32.totalorder %s195, 0
    %s198 = sadd.s32 %s197, 1
    %s199 = scalar_select %p196, %s197, %s198
    %p202 = pneg %p196
    %p203 = scmp.eq.s32.totalorder %s14, 1
    %p204 = por %p202, %p203
    %p205 = scmp.ne.s32.totalorder %s197, %s200
    %p206 = scmp.eq.s32.totalorder %s14, 0
    %p207 = por %p205, %p206
    %p208 = scmp.ne.s32.totalorder %s197, %s200
    %p209 = scmp.eq.s32.totalorder %s19, 1
    %p210 = por %p208, %p209
    %p211 = scmp.ne.s32.totalorder %s200, %s201
    %p212 = scmp.eq.s32.totalorder %s19, 0
    %p213 = por %p211, %p212
    %p214 = scmp.ne.s32.totalorder %s200, %s201
    %p215 = scmp.eq.s32.totalorder %s20, 1
    %p216 = por %p214, %p215
    %p218 = scmp.ne.s32.totalorder %s201, %s217
    %p219 = scmp.eq.s32.totalorder %s20, 0
    %p220 = por %p218, %p219
    %p221 = scmp.le.s32.totalorder 1, %s14
    %p222 = scmp.lt.s32.totalorder %s14, 3
    %p223 = pnand %p221, %p222
    %p224 = pneg %p223
    // Predicated region
    $region9: #{dual_adaptive_neural_block.1} parent=5 // pred_check
      _
    $region10: #{dual_adaptive_neural_block.1} parent=5 // pred_check_branch
      %226 = sbr.rel (%p223) target = $region12
    $region11: #{dual_adaptive_neural_block.1} parent=5 // pred_region
      %s227 = ssub.s32 %s14, 1
      // Predicated region
      $region13: #{dual_adaptive_neural_block.1} parent=11 // pred_check
        %p228 = pneg %p61
      $region14: #{dual_adaptive_neural_block.1} parent=11 // pred_check_branch
        %230 = sbr.rel (%p228) target = $region16
      $region15: #{dual_adaptive_neural_block.1} parent=11 // pred_region
        _
      $region16: #{dual_adaptive_neural_block.1} parent=11 // pred_fallthru
        _
      // Predicated region
      $region17: #{dual_adaptive_neural_block.1} parent=11 // pred_check
        %p231 = pneg %p82
      $region18: #{dual_adaptive_neural_block.1} parent=11 // pred_check_branch
        %233 = sbr.rel (%p231) target = $region20
      $region19: #{dual_adaptive_neural_block.1} parent=11 // pred_region
        _
      $region20: #{dual_adaptive_neural_block.1} parent=11 // pred_fallthru
        _
      // Predicated region
      $region21: #{dual_adaptive_neural_block.1} parent=11 // pred_check
        %p234 = pneg %p103
      $region22: #{dual_adaptive_neural_block.1} parent=11 // pred_check_branch
        %236 = sbr.rel (%p234) target = $region24
      $region23: #{dual_adaptive_neural_block.1} parent=11 // pred_region
        _
      $region24: #{dual_adaptive_neural_block.1} parent=11 // pred_fallthru
        _
      // Predicated region
      $region25: #{dual_adaptive_neural_block.1} parent=11 // pred_check
        %p237 = pneg %p124
      $region26: #{dual_adaptive_neural_block.1} parent=11 // pred_check_branch
        %239 = sbr.rel (%p237) target = $region28
      $region27: #{dual_adaptive_neural_block.1} parent=11 // pred_region
        _
      $region28: #{dual_adaptive_neural_block.1} parent=11 // pred_fallthru
        _
      // Predicated region
      $region29: #{dual_adaptive_neural_block.1} parent=11 // pred_check
        %p240 = pneg %p145
      $region30: #{dual_adaptive_neural_block.1} parent=11 // pred_check_branch
        %242 = sbr.rel (%p240) target = $region32
      $region31: #{dual_adaptive_neural_block.1} parent=11 // pred_region
        _
      $region32: #{dual_adaptive_neural_block.1} parent=11 // pred_fallthru
        _
      // Predicated region
      $region33: #{dual_adaptive_neural_block.1} parent=11 // pred_check
        %p243 = pneg %p166
      $region34: #{dual_adaptive_neural_block.1} parent=11 // pred_check_branch
        %245 = sbr.rel (%p243) target = $region36
      $region35: #{dual_adaptive_neural_block.1} parent=11 // pred_region
        _
      $region36: #{dual_adaptive_neural_block.1} parent=11 // pred_fallthru
        _
      // Predicated region
      $region37: #{dual_adaptive_neural_block.1} parent=11 // pred_check
        %p246 = pneg %p187
      $region38: #{dual_adaptive_neural_block.1} parent=11 // pred_check_branch
        %248 = sbr.rel (%p246) target = $region40
      $region39: #{dual_adaptive_neural_block.1} parent=11 // pred_region
        _
      $region40: #{dual_adaptive_neural_block.1} parent=11 // pred_fallthru
        _
    $region12: #{dual_adaptive_neural_block.1} parent=5 // pred_fallthru
      _
    %p249 = scmp.lt.s32.totalorder %s14, 2
    // Predicated region
    $region41: #{dual_adaptive_neural_block.1} parent=5 // pred_check
      %p250 = pneg %p249
    $region42: #{dual_adaptive_neural_block.1} parent=5 // pred_check_branch
      %252 = sbr.rel (%p250) target = $region44
    $region43: #{dual_adaptive_neural_block.1} parent=5 // pred_region
      // Predicated region
      $region45: #{dual_adaptive_neural_block.1} parent=43 // pred_check
        %p253 = pneg %p34
      $region46: #{dual_adaptive_neural_block.1} parent=43 // pred_check_branch
        %255 = sbr.rel (%p253) target = $region48
      $region47: #{dual_adaptive_neural_block.1} parent=43 // pred_region
        %p256 = scmp.lt.s32.totalorder %s14, 1
        %s257 = scalar_select %p256, %s14, 1
        %s258 = smul.addr %s257, 8
        %s259 = smul.addr %s258, 8
        %s260 = scalar_lea.vmem %s0, %s259
      $region48: #{dual_adaptive_neural_block.1} parent=43 // pred_fallthru
        _
    $region44: #{dual_adaptive_neural_block.1} parent=5 // pred_fallthru
      _
    %p261 = scmp.le.s32.totalorder 1, %s14
    %p262 = scmp.lt.s32.totalorder %s14, 3
    %p263 = pnand %p261, %p262
    %p264 = pneg %p263
    // Predicated region
    $region49: #{dual_adaptive_neural_block.1} parent=5 // pred_check
      _
    $region50: #{dual_adaptive_neural_block.1} parent=5 // pred_check_branch
      %266 = sbr.rel (%p263) target = $region52
    $region51: #{dual_adaptive_neural_block.1} parent=5 // pred_region
      %s267 = ssub.s32 %s14, 1
      %p268 = scmp.lt.s32.totalorder %s19, 1
      %s269 = scalar_select %p268, %s19, 1
      %s270 = smul.addr %s269, 8
      %s271 = smul.addr %s270, 8
      %s272 = scalar_lea.vmem %s0, %s271
      %p273 = pneg %p40
      %p274 = pneg %p37
      %p275 = pneg %p61
      %p276 = pneg %p58
      %p277 = pneg %p82
      %p278 = pneg %p79
      %p279 = pneg %p103
      %p280 = pneg %p100
      %p281 = pneg %p124
      %p282 = pneg %p121
      %p283 = pneg %p145
      %p284 = pneg %p142
      %p285 = pneg %p166
      %p286 = pneg %p163
      %p287 = pneg %p187
      %p288 = pneg %p184
      %p289 = pneg %p213
      %p290 = pneg %p210
      %p291 = scmp.lt.s32.totalorder %s19, 1
      %s292 = scalar_select %p291, %s19, 1
      %s293 = smul.addr %s292, 6
      %s294 = smul.addr %s293, 8
      %s295 = scalar_lea.vmem %s8, %s294
      %p296 = scmp.lt.s32.totalorder %s19, 1
      %s297 = scalar_select %p296, %s19, 1
      %s298 = smul.addr %s297, 8
      %s299 = smul.addr %s298, 8
      %s300 = scalar_lea.vmem %s0, %s299
      %p301 = scmp.lt.s32.totalorder %s19, 1
      %s302 = scalar_select %p301, %s19, 1
      %s303 = smul.addr %s302, 6
      %s304 = smul.addr %s303, 8
      %s305 = scalar_lea.vmem %s8, %s304
      %v306 = vld [vmem:[%s2] sm:$0xff]
      %v307 = vld [vmem:[%s2 + $0x8] sm:$0xff]
      %v308 = vld [vmem:[%s3] sm:$0xff]
      %v309 = vld [vmem:[%s3 + $0x8] sm:$0xff]
      %v310 = vld [vmem:[%s300] sm:$0xff]
      %v311 = vld [vmem:[%s300 + $0x8] sm:$0xff]
      %v312 = vld [vmem:[%s300 + $0x10] sm:$0xff]
      %v313 = vld [vmem:[%s300 + $0x18] sm:$0xff]
      %v314 = vld [vmem:[%s300 + $0x20] sm:$0xff]
      %v315 = vld [vmem:[%s300 + $0x28] sm:$0xff]
      %v316 = vld [vmem:[%s300 + $0x30] sm:$0xff]
      %v317 = vld [vmem:[%s300 + $0x38] sm:$0xff]
      %319 = vset.pattern.permute.xlu0 0
      %320 = vperm.xlu0 %319, %v308
      %v321 = vpop.permute.xlu0 %320
      %324 = vset.pattern.permute.xlu0 0
      %325 = vperm.xlu0 %324, %v309
      %v326 = vpop.permute.xlu0 %325
      %vm328 = vcmask 130048
      %v330 = vsel %vm328, %v306, 0
      %v333 = vsel %vm328, %v307, 0
      %335 = vmatpush.msra.mxu0 0.0
      %336 = vmatpush.msra.mxu0 0.0
      %337 = vmatpush.msra.mxu0 0.0
      %338 = vmatpush.msra.mxu0 0.0
      %339 = vmatpush.msra.mxu0 0.0
      %340 = vmatpush.msra.mxu0 0.0
      %341 = vmatpush.msra.mxu0 0.0
      %342 = vmatpush.msra.mxu0 0.0
      %343 = vmatpush.msra.mxu0 0.0
      %344 = vmatpush.msra.mxu0 0.0
      %345 = vmatpush.msra.mxu0 0.0
      %346 = vmatpush.msra.mxu0 0.0
      %347 = vmatpush.msra.mxu0 0.0
      %348 = vmatpush.msra.mxu0 0.0
      %349 = vmatpush.msra.mxu0 %v314
      %350 = vmatpush.msra.mxu0 %v310
      %351 = vmatmul.f32.gmra.mxu0 %v330
      %v352 = vpop.f32.mrf.mxu0
      %v353 = vadd.f32 %v321, %v352
      %354 = vmatmul.f32.gmra.mxu0 %v333
      %v355 = vpop.f32.mrf.mxu0
      %v356 = vadd.f32 %v326, %v355
      %357 = vdwg.mxu0
      %358 = vmatpush.msra.mxu0 0.0
      %359 = vmatpush.msra.mxu0 0.0
      %360 = vmatpush.msra.mxu0 0.0
      %361 = vmatpush.msra.mxu0 0.0
      %362 = vmatpush.msra.mxu0 0.0
      %363 = vmatpush.msra.mxu0 0.0
      %364 = vmatpush.msra.mxu0 0.0
      %365 = vmatpush.msra.mxu0 0.0
      %366 = vmatpush.msra.mxu0 0.0
      %367 = vmatpush.msra.mxu0 0.0
      %368 = vmatpush.msra.mxu0 0.0
      %369 = vmatpush.msra.mxu0 0.0
      %370 = vmatpush.msra.mxu0 0.0
      %371 = vmatpush.msra.mxu0 0.0
      %372 = vmatpush.msra.mxu0 %v315
      %373 = vmatpush.msra.mxu0 %v311
      %374 = vmatmul.f32.gmra.mxu0 %v330
      %v375 = vpop.f32.mrf.mxu0
      %v376 = vadd.f32 %v321, %v375
      %377 = vmatmul.f32.gmra.mxu0 %v333
      %v378 = vpop.f32.mrf.mxu0
      %v379 = vadd.f32 %v326, %v378
      %380 = vdwg.mxu0
      %381 = vmatpush.msra.mxu0 0.0
      %382 = vmatpush.msra.mxu0 0.0
      %383 = vmatpush.msra.mxu0 0.0
      %384 = vmatpush.msra.mxu0 0.0
      %385 = vmatpush.msra.mxu0 0.0
      %386 = vmatpush.msra.mxu0 0.0
      %387 = vmatpush.msra.mxu0 0.0
      %388 = vmatpush.msra.mxu0 0.0
      %389 = vmatpush.msra.mxu0 0.0
      %390 = vmatpush.msra.mxu0 0.0
      %391 = vmatpush.msra.mxu0 0.0
      %392 = vmatpush.msra.mxu0 0.0
      %393 = vmatpush.msra.mxu0 0.0
      %394 = vmatpush.msra.mxu0 0.0
      %395 = vmatpush.msra.mxu0 %v316
      %396 = vmatpush.msra.mxu0 %v312
      %397 = vmatmul.f32.gmra.mxu0 %v330
      %v398 = vpop.f32.mrf.mxu0
      %v399 = vadd.f32 %v321, %v398
      %400 = vmatmul.f32.gmra.mxu0 %v333
      %v401 = vpop.f32.mrf.mxu0
      %v402 = vadd.f32 %v326, %v401
      %403 = vdwg.mxu0
      %404 = vmatpush.msra.mxu0 0.0
      %405 = vmatpush.msra.mxu0 0.0
      %406 = vmatpush.msra.mxu0 0.0
      %407 = vmatpush.msra.mxu0 0.0
      %408 = vmatpush.msra.mxu0 0.0
      %409 = vmatpush.msra.mxu0 0.0
      %410 = vmatpush.msra.mxu0 0.0
      %411 = vmatpush.msra.mxu0 0.0
      %412 = vmatpush.msra.mxu0 0.0
      %413 = vmatpush.msra.mxu0 0.0
      %414 = vmatpush.msra.mxu0 0.0
      %415 = vmatpush.msra.mxu0 0.0
      %416 = vmatpush.msra.mxu0 0.0
      %417 = vmatpush.msra.mxu0 0.0
      %418 = vmatpush.msra.mxu0 %v317
      %419 = vmatpush.msra.mxu0 %v313
      %420 = vmatmul.f32.gmra.mxu0 %v330
      %v421 = vpop.f32.mrf.mxu0
      %v422 = vadd.f32 %v321, %v421
      %423 = vmatmul.f32.gmra.mxu0 %v333
      %v424 = vpop.f32.mrf.mxu0
      %v425 = vadd.f32 %v326, %v424
      %426 = vdwg.mxu0
      %v427 = vld [vmem:[%s1] sm:$0xf]
      %v429 = vperm.slane %v427, 0
      %v430 = vperm.slane %v427, 1
      %v431 = vperm.slane %v427, 2
      %v432 = vperm.slane %v427, 3
      %v437 = vmul.f32 %v353, %v429
      %v438 = vmul.f32 %v376, %v430
      %v439 = vmul.f32 %v399, %v431
      %v440 = vmul.f32 %v422, %v432
      %v441 = vmul.f32 %v356, %v429
      %v442 = vmul.f32 %v379, %v430
      %v443 = vmul.f32 %v402, %v431
      %v444 = vmul.f32 %v425, %v432
      %445 = vst [vmem:[#allocation2] sm:$0xff] %v437
      %446 = vst [vmem:[#allocation2 + $0x8] sm:$0xff] %v438
      %447 = vst [vmem:[#allocation2 + $0x10] sm:$0xff] %v439
      %vm448 = vcmask 883712
      %449 = vst.msk [vmem:[#allocation2 + $0x18] sm:$0xff] %vm448, %v440
      %450 = vst [vmem:[#allocation2 + $0x20] sm:$0xff] %v441
      %451 = vst [vmem:[#allocation2 + $0x28] sm:$0xff] %v442
      %452 = vst [vmem:[#allocation2 + $0x30] sm:$0xff] %v443
      %453 = vst.msk [vmem:[#allocation2 + $0x38] sm:$0xff] %vm448, %v444
      %v454 = vld [vmem:[%s4] sm:$0xff]
      %v455 = vld [vmem:[%s4 + $0x8] sm:$0xff]
      %v456 = vld [vmem:[%s6] sm:$0xff]
      %v457 = vld [vmem:[%s6 + $0x8] sm:$0xff]
      %v458 = vld [vmem:[%s7] sm:$0xff]
      %v459 = vld [vmem:[%s7 + $0x8] sm:$0xff]
      %v460 = vld [vmem:[#allocation2] sm:$0xff]
      %v461 = vld [vmem:[#allocation2 + $0x8] sm:$0xff]
      %v462 = vld [vmem:[#allocation2 + $0x10] sm:$0xff]
      %v463 = vld [vmem:[#allocation2 + $0x18] sm:$0xff]
      %v464 = vld [vmem:[#allocation2 + $0x20] sm:$0xff]
      %v465 = vld [vmem:[#allocation2 + $0x28] sm:$0xff]
      %v466 = vld [vmem:[#allocation2 + $0x30] sm:$0xff]
      %v467 = vld [vmem:[#allocation2 + $0x38] sm:$0xff]
      %v468 = vld [vmem:[%s5] sm:$0xff]
      %v469 = vld [vmem:[%s5 + $0x8] sm:$0xff]
      %471 = vset.pattern.permute.xlu0 0
      %472 = vperm.xlu0 %471, %v468
      %v473 = vpop.permute.xlu0 %472
      %476 = vset.pattern.permute.xlu0 0
      %477 = vperm.xlu0 %476, %v469
      %v478 = vpop.permute.xlu0 %477
      %480 = vset.pattern.permute.xlu0 1
      %481 = vperm.xlu0 %480, %v468
      %v482 = vpop.permute.xlu0 %481
      %484 = vset.pattern.permute.xlu0 1
      %485 = vperm.xlu0 %484, %v469
      %v486 = vpop.permute.xlu0 %485
      %489 = vset.pattern.permute.xlu0 0
      %490 = vperm.xlu0 %489, %v454
      %v491 = vpop.permute.xlu0 %490
      %494 = vset.pattern.permute.xlu0 0
      %495 = vperm.xlu0 %494, %v455
      %v496 = vpop.permute.xlu0 %495
      %v498 = vmul.f32 %v460, %v491
      %v499 = vmul.f32 %v461, %v491
      %v500 = vmul.f32 %v462, %v491
      %v501 = vmul.f32 %v464, %v496
      %v502 = vmul.f32 %v465, %v496
      %v503 = vmul.f32 %v466, %v496
      %v504 = vadd.f32 %v473, %v498
      %v505 = vadd.f32 %v473, %v499
      %v506 = vadd.f32 %v473, %v500
      %v507 = vadd.f32 %v478, %v501
      %v508 = vadd.f32 %v478, %v502
      %v509 = vadd.f32 %v478, %v503
      %510 = vset.pattern.permute.xlu0 49
      %511 = vperm.xlu0 %510, %v454
      %v512 = vpop.permute.xlu0 %511
      %514 = vset.pattern.permute.xlu0 49
      %515 = vperm.xlu0 %514, %v455
      %v516 = vpop.permute.xlu0 %515
      %v518 = vmul.f32 %v460, %v512
      %v519 = vmul.f32 %v461, %v512
      %v520 = vmul.f32 %v462, %v512
      %v521 = vmul.f32 %v464, %v516
      %v522 = vmul.f32 %v465, %v516
      %v523 = vmul.f32 %v466, %v516
      %v524 = vadd.f32 %v482, %v518
      %v525 = vadd.f32 %v482, %v519
      %v526 = vadd.f32 %v482, %v520
      %v527 = vadd.f32 %v486, %v521
      %v528 = vadd.f32 %v486, %v522
      %v529 = vadd.f32 %v486, %v523
      %530 = vset.pattern.permute.xlu0 1
      %531 = vperm.xlu0 %530, %v454
      %v532 = vpop.permute.xlu0 %531
      %534 = vset.pattern.permute.xlu0 1
      %535 = vperm.xlu0 %534, %v455
      %v536 = vpop.permute.xlu0 %535
      %v538 = vmul.f32 %v460, %v532
      %v539 = vmul.f32 %v461, %v532
      %v540 = vmul.f32 %v462, %v532
      %v541 = vmul.f32 %v464, %v536
      %v542 = vmul.f32 %v465, %v536
      %v543 = vmul.f32 %v466, %v536
      %550 = vrot.lane.b32.xlu0 %v538, 127
      %v551 = vpop.permute.xlu0 %550
      %552 = vrot.lane.b32.xlu0 %v539, 127
      %v553 = vpop.permute.xlu0 %552
      %554 = vrot.lane.b32.xlu0 %v540, 127
      %v555 = vpop.permute.xlu0 %554
      %556 = vrot.lane.b32.xlu0 %v541, 127
      %v557 = vpop.permute.xlu0 %556
      %558 = vrot.lane.b32.xlu0 %v542, 127
      %v559 = vpop.permute.xlu0 %558
      %560 = vrot.lane.b32.xlu0 %v543, 127
      %v561 = vpop.permute.xlu0 %560
      %vm562 = vcmask 1039360
      %v563 = vsel %vm562, %v551, %v553
      %v564 = vsel %vm562, %v553, %v555
      %v565 = vsel %vm562, %v557, %v559
      %v566 = vsel %vm562, %v559, %v561
      %v573 = vadd.f32 %v504, %v563
      %v574 = vadd.f32 %v505, %v564
      %v575 = vadd.f32 %v506, %v555
      %v576 = vadd.f32 %v507, %v565
      %v577 = vadd.f32 %v508, %v566
      %v578 = vadd.f32 %v509, %v561
      %579 = vset.pattern.permute.xlu0 50
      %580 = vperm.xlu0 %579, %v454
      %v581 = vpop.permute.xlu0 %580
      %583 = vset.pattern.permute.xlu0 50
      %584 = vperm.xlu0 %583, %v455
      %v585 = vpop.permute.xlu0 %584
      %v587 = vmul.f32 %v460, %v581
      %v588 = vmul.f32 %v461, %v581
      %v589 = vmul.f32 %v462, %v581
      %v590 = vmul.f32 %v464, %v585
      %v591 = vmul.f32 %v465, %v585
      %v592 = vmul.f32 %v466, %v585
      %599 = vrot.lane.b32.xlu0 %v587, 127
      %v600 = vpop.permute.xlu0 %599
      %601 = vrot.lane.b32.xlu0 %v588, 127
      %v602 = vpop.permute.xlu0 %601
      %603 = vrot.lane.b32.xlu0 %v589, 127
      %v604 = vpop.permute.xlu0 %603
      %605 = vrot.lane.b32.xlu0 %v590, 127
      %v606 = vpop.permute.xlu0 %605
      %607 = vrot.lane.b32.xlu0 %v591, 127
      %v608 = vpop.permute.xlu0 %607
      %609 = vrot.lane.b32.xlu0 %v592, 127
      %v610 = vpop.permute.xlu0 %609
      %v611 = vsel %vm562, %v600, %v602
      %v612 = vsel %vm562, %v602, %v604
      %v613 = vsel %vm562, %v606, %v608
      %v614 = vsel %vm562, %v608, %v610
      %v621 = vadd.f32 %v524, %v611
      %v622 = vadd.f32 %v525, %v612
      %v623 = vadd.f32 %v526, %v604
      %v624 = vadd.f32 %v527, %v613
      %v625 = vadd.f32 %v528, %v614
      %v626 = vadd.f32 %v529, %v610
      %627 = vset.pattern.permute.xlu0 2
      %628 = vperm.xlu0 %627, %v454
      %v629 = vpop.permute.xlu0 %628
      %631 = vset.pattern.permute.xlu0 2
      %632 = vperm.xlu0 %631, %v455
      %v633 = vpop.permute.xlu0 %632
      %v635 = vmul.f32 %v460, %v629
      %v636 = vmul.f32 %v461, %v629
      %v637 = vmul.f32 %v462, %v629
      %v638 = vmul.f32 %v464, %v633
      %v639 = vmul.f32 %v465, %v633
      %v640 = vmul.f32 %v466, %v633
      %647 = vrot.lane.b32.xlu0 %v635, 126
      %v648 = vpop.permute.xlu0 %647
      %649 = vrot.lane.b32.xlu0 %v636, 126
      %v650 = vpop.permute.xlu0 %649
      %651 = vrot.lane.b32.xlu0 %v637, 126
      %v652 = vpop.permute.xlu0 %651
      %653 = vrot.lane.b32.xlu0 %v638, 126
      %v654 = vpop.permute.xlu0 %653
      %655 = vrot.lane.b32.xlu0 %v639, 126
      %v656 = vpop.permute.xlu0 %655
      %657 = vrot.lane.b32.xlu0 %v640, 126
      %v658 = vpop.permute.xlu0 %657
      %vm659 = vcmask 1031168
      %v660 = vsel %vm659, %v648, %v650
      %v661 = vsel %vm659, %v650, %v652
      %v662 = vsel %vm659, %v654, %v656
      %v663 = vsel %vm659, %v656, %v658
      %v670 = vadd.f32 %v573, %v660
      %v671 = vadd.f32 %v574, %v661
      %v672 = vadd.f32 %v575, %v652
      %v673 = vadd.f32 %v576, %v662
      %v674 = vadd.f32 %v577, %v663
      %v675 = vadd.f32 %v578, %v658
      %676 = vset.pattern.permute.xlu0 51
      %677 = vperm.xlu0 %676, %v454
      %v678 = vpop.permute.xlu0 %677
      %680 = vset.pattern.permute.xlu0 51
      %681 = vperm.xlu0 %680, %v455
      %v682 = vpop.permute.xlu0 %681
      %v684 = vmul.f32 %v460, %v678
      %v685 = vmul.f32 %v461, %v678
      %v686 = vmul.f32 %v462, %v678
      %v687 = vmul.f32 %v464, %v682
      %v688 = vmul.f32 %v465, %v682
      %v689 = vmul.f32 %v466, %v682
      %696 = vrot.lane.b32.xlu0 %v684, 126
      %v697 = vpop.permute.xlu0 %696
      %698 = vrot.lane.b32.xlu0 %v685, 126
      %v699 = vpop.permute.xlu0 %698
      %700 = vrot.lane.b32.xlu0 %v686, 126
      %v701 = vpop.permute.xlu0 %700
      %702 = vrot.lane.b32.xlu0 %v687, 126
      %v703 = vpop.permute.xlu0 %702
      %704 = vrot.lane.b32.xlu0 %v688, 126
      %v705 = vpop.permute.xlu0 %704
      %706 = vrot.lane.b32.xlu0 %v689, 126
      %v707 = vpop.permute.xlu0 %706
      %v708 = vsel %vm659, %v697, %v699
      %v709 = vsel %vm659, %v699, %v701
      %v710 = vsel %vm659, %v703, %v705
      %v711 = vsel %vm659, %v705, %v707
      %v718 = vadd.f32 %v621, %v708
      %v719 = vadd.f32 %v622, %v709
      %v720 = vadd.f32 %v623, %v701
      %v721 = vadd.f32 %v624, %v710
      %v722 = vadd.f32 %v625, %v711
      %v723 = vadd.f32 %v626, %v707
      %724 = vset.pattern.permute.xlu0 3
      %725 = vperm.xlu0 %724, %v454
      %v726 = vpop.permute.xlu0 %725
      %728 = vset.pattern.permute.xlu0 3
      %729 = vperm.xlu0 %728, %v455
      %v730 = vpop.permute.xlu0 %729
      %v732 = vmul.f32 %v460, %v726
      %v733 = vmul.f32 %v461, %v726
      %v734 = vmul.f32 %v462, %v726
      %v735 = vmul.f32 %v464, %v730
      %v736 = vmul.f32 %v465, %v730
      %v737 = vmul.f32 %v466, %v730
      %744 = vrot.lane.b32.xlu0 %v732, 125
      %v745 = vpop.permute.xlu0 %744
      %746 = vrot.lane.b32.xlu0 %v733, 125
      %v747 = vpop.permute.xlu0 %746
      %748 = vrot.lane.b32.xlu0 %v734, 125
      %v749 = vpop.permute.xlu0 %748
      %750 = vrot.lane.b32.xlu0 %v735, 125
      %v751 = vpop.permute.xlu0 %750
      %752 = vrot.lane.b32.xlu0 %v736, 125
      %v753 = vpop.permute.xlu0 %752
      %754 = vrot.lane.b32.xlu0 %v737, 125
      %v755 = vpop.permute.xlu0 %754
      %vm756 = vcmask 1022976
      %v757 = vsel %vm756, %v745, %v747
      %v758 = vsel %vm756, %v747, %v749
      %v759 = vsel %vm756, %v751, %v753
      %v760 = vsel %vm756, %v753, %v755
      %v767 = vadd.f32 %v670, %v757
      %v768 = vadd.f32 %v671, %v758
      %v769 = vadd.f32 %v672, %v749
      %v770 = vadd.f32 %v673, %v759
      %v771 = vadd.f32 %v674, %v760
      %v772 = vadd.f32 %v675, %v755
      %773 = vset.pattern.permute.xlu0 52
      %774 = vperm.xlu0 %773, %v454
      %v775 = vpop.permute.xlu0 %774
      %777 = vset.pattern.permute.xlu0 52
      %778 = vperm.xlu0 %777, %v455
      %v779 = vpop.permute.xlu0 %778
      %v781 = vmul.f32 %v460, %v775
      %v782 = vmul.f32 %v461, %v775
      %v783 = vmul.f32 %v462, %v775
      %v784 = vmul.f32 %v464, %v779
      %v785 = vmul.f32 %v465, %v779
      %v786 = vmul.f32 %v466, %v779
      %793 = vrot.lane.b32.xlu0 %v781, 125
      %v794 = vpop.permute.xlu0 %793
      %795 = vrot.lane.b32.xlu0 %v782, 125
      %v796 = vpop.permute.xlu0 %795
      %797 = vrot.lane.b32.xlu0 %v783, 125
      %v798 = vpop.permute.xlu0 %797
      %799 = vrot.lane.b32.xlu0 %v784, 125
      %v800 = vpop.permute.xlu0 %799
      %801 = vrot.lane.b32.xlu0 %v785, 125
      %v802 = vpop.permute.xlu0 %801
      %803 = vrot.lane.b32.xlu0 %v786, 125
      %v804 = vpop.permute.xlu0 %803
      %v805 = vsel %vm756, %v794, %v796
      %v806 = vsel %vm756, %v796, %v798
      %v807 = vsel %vm756, %v800, %v802
      %v808 = vsel %vm756, %v802, %v804
      %v815 = vadd.f32 %v718, %v805
      %v816 = vadd.f32 %v719, %v806
      %v817 = vadd.f32 %v720, %v798
      %v818 = vadd.f32 %v721, %v807
      %v819 = vadd.f32 %v722, %v808
      %v820 = vadd.f32 %v723, %v804
      %821 = vset.pattern.permute.xlu0 4
      %822 = vperm.xlu0 %821, %v454
      %v823 = vpop.permute.xlu0 %822
      %825 = vset.pattern.permute.xlu0 4
      %826 = vperm.xlu0 %825, %v455
      %v827 = vpop.permute.xlu0 %826
      %v829 = vmul.f32 %v460, %v823
      %v830 = vmul.f32 %v461, %v823
      %v831 = vmul.f32 %v462, %v823
      %v832 = vmul.f32 %v464, %v827
      %v833 = vmul.f32 %v465, %v827
      %v834 = vmul.f32 %v466, %v827
      %841 = vrot.lane.b32.xlu0 %v829, 124
      %v842 = vpop.permute.xlu0 %841
      %843 = vrot.lane.b32.xlu0 %v830, 124
      %v844 = vpop.permute.xlu0 %843
      %845 = vrot.lane.b32.xlu0 %v831, 124
      %v846 = vpop.permute.xlu0 %845
      %847 = vrot.lane.b32.xlu0 %v832, 124
      %v848 = vpop.permute.xlu0 %847
      %849 = vrot.lane.b32.xlu0 %v833, 124
      %v850 = vpop.permute.xlu0 %849
      %851 = vrot.lane.b32.xlu0 %v834, 124
      %v852 = vpop.permute.xlu0 %851
      %vm853 = vcmask 1014784
      %v854 = vsel %vm853, %v842, %v844
      %v855 = vsel %vm853, %v844, %v846
      %v856 = vsel %vm853, %v848, %v850
      %v857 = vsel %vm853, %v850, %v852
      %v864 = vadd.f32 %v767, %v854
      %v865 = vadd.f32 %v768, %v855
      %v866 = vadd.f32 %v769, %v846
      %v867 = vadd.f32 %v770, %v856
      %v868 = vadd.f32 %v771, %v857
      %v869 = vadd.f32 %v772, %v852
      %870 = vset.pattern.permute.xlu0 53
      %871 = vperm.xlu0 %870, %v454
      %v872 = vpop.permute.xlu0 %871
      %874 = vset.pattern.permute.xlu0 53
      %875 = vperm.xlu0 %874, %v455
      %v876 = vpop.permute.xlu0 %875
      %v878 = vmul.f32 %v460, %v872
      %v879 = vmul.f32 %v461, %v872
      %v880 = vmul.f32 %v462, %v872
      %v881 = vmul.f32 %v464, %v876
      %v882 = vmul.f32 %v465, %v876
      %v883 = vmul.f32 %v466, %v876
      %890 = vrot.lane.b32.xlu0 %v878, 124
      %v891 = vpop.permute.xlu0 %890
      %892 = vrot.lane.b32.xlu0 %v879, 124
      %v893 = vpop.permute.xlu0 %892
      %894 = vrot.lane.b32.xlu0 %v880, 124
      %v895 = vpop.permute.xlu0 %894
      %896 = vrot.lane.b32.xlu0 %v881, 124
      %v897 = vpop.permute.xlu0 %896
      %898 = vrot.lane.b32.xlu0 %v882, 124
      %v899 = vpop.permute.xlu0 %898
      %900 = vrot.lane.b32.xlu0 %v883, 124
      %v901 = vpop.permute.xlu0 %900
      %v902 = vsel %vm853, %v891, %v893
      %v903 = vsel %vm853, %v893, %v895
      %v904 = vsel %vm853, %v897, %v899
      %v905 = vsel %vm853, %v899, %v901
      %v912 = vadd.f32 %v815, %v902
      %v913 = vadd.f32 %v816, %v903
      %v914 = vadd.f32 %v817, %v895
      %v915 = vadd.f32 %v818, %v904
      %v916 = vadd.f32 %v819, %v905
      %v917 = vadd.f32 %v820, %v901
      %918 = vset.pattern.permute.xlu0 5
      %919 = vperm.xlu0 %918, %v454
      %v920 = vpop.permute.xlu0 %919
      %922 = vset.pattern.permute.xlu0 5
      %923 = vperm.xlu0 %922, %v455
      %v924 = vpop.permute.xlu0 %923
      %v926 = vmul.f32 %v460, %v920
      %v927 = vmul.f32 %v461, %v920
      %v928 = vmul.f32 %v462, %v920
      %v929 = vmul.f32 %v464, %v924
      %v930 = vmul.f32 %v465, %v924
      %v931 = vmul.f32 %v466, %v924
      %938 = vrot.lane.b32.xlu0 %v926, 123
      %v939 = vpop.permute.xlu0 %938
      %940 = vrot.lane.b32.xlu0 %v927, 123
      %v941 = vpop.permute.xlu0 %940
      %942 = vrot.lane.b32.xlu0 %v928, 123
      %v943 = vpop.permute.xlu0 %942
      %944 = vrot.lane.b32.xlu0 %v929, 123
      %v945 = vpop.permute.xlu0 %944
      %946 = vrot.lane.b32.xlu0 %v930, 123
      %v947 = vpop.permute.xlu0 %946
      %948 = vrot.lane.b32.xlu0 %v931, 123
      %v949 = vpop.permute.xlu0 %948
      %vm950 = vcmask 1006592
      %v951 = vsel %vm950, %v939, %v941
      %v952 = vsel %vm950, %v941, %v943
      %v953 = vsel %vm950, %v945, %v947
      %v954 = vsel %vm950, %v947, %v949
      %v961 = vadd.f32 %v864, %v951
      %v962 = vadd.f32 %v865, %v952
      %v963 = vadd.f32 %v866, %v943
      %v964 = vadd.f32 %v867, %v953
      %v965 = vadd.f32 %v868, %v954
      %v966 = vadd.f32 %v869, %v949
      %967 = vset.pattern.permute.xlu0 54
      %968 = vperm.xlu0 %967, %v454
      %v969 = vpop.permute.xlu0 %968
      %971 = vset.pattern.permute.xlu0 54
      %972 = vperm.xlu0 %971, %v455
      %v973 = vpop.permute.xlu0 %972
      %v975 = vmul.f32 %v460, %v969
      %v976 = vmul.f32 %v461, %v969
      %v977 = vmul.f32 %v462, %v969
      %v978 = vmul.f32 %v464, %v973
      %v979 = vmul.f32 %v465, %v973
      %v980 = vmul.f32 %v466, %v973
      %987 = vrot.lane.b32.xlu0 %v975, 123
      %v988 = vpop.permute.xlu0 %987
      %989 = vrot.lane.b32.xlu0 %v976, 123
      %v990 = vpop.permute.xlu0 %989
      %991 = vrot.lane.b32.xlu0 %v977, 123
      %v992 = vpop.permute.xlu0 %991
      %993 = vrot.lane.b32.xlu0 %v978, 123
      %v994 = vpop.permute.xlu0 %993
      %995 = vrot.lane.b32.xlu0 %v979, 123
      %v996 = vpop.permute.xlu0 %995
      %997 = vrot.lane.b32.xlu0 %v980, 123
      %v998 = vpop.permute.xlu0 %997
      %v999 = vsel %vm950, %v988, %v990
      %v1000 = vsel %vm950, %v990, %v992
      %v1001 = vsel %vm950, %v994, %v996
      %v1002 = vsel %vm950, %v996, %v998
      %v1009 = vadd.f32 %v912, %v999
      %v1010 = vadd.f32 %v913, %v1000
      %v1011 = vadd.f32 %v914, %v992
      %v1012 = vadd.f32 %v915, %v1001
      %v1013 = vadd.f32 %v916, %v1002
      %v1014 = vadd.f32 %v917, %v998
      %1015 = vset.pattern.permute.xlu0 6
      %1016 = vperm.xlu0 %1015, %v454
      %v1017 = vpop.permute.xlu0 %1016
      %1019 = vset.pattern.permute.xlu0 6
      %1020 = vperm.xlu0 %1019, %v455
      %v1021 = vpop.permute.xlu0 %1020
      %v1023 = vmul.f32 %v460, %v1017
      %v1024 = vmul.f32 %v461, %v1017
      %v1025 = vmul.f32 %v462, %v1017
      %v1026 = vmul.f32 %v464, %v1021
      %v1027 = vmul.f32 %v465, %v1021
      %v1028 = vmul.f32 %v466, %v1021
      %1035 = vrot.lane.b32.xlu0 %v1023, 122
      %v1036 = vpop.permute.xlu0 %1035
      %1037 = vrot.lane.b32.xlu0 %v1024, 122
      %v1038 = vpop.permute.xlu0 %1037
      %1039 = vrot.lane.b32.xlu0 %v1025, 122
      %v1040 = vpop.permute.xlu0 %1039
      %1041 = vrot.lane.b32.xlu0 %v1026, 122
      %v1042 = vpop.permute.xlu0 %1041
      %1043 = vrot.lane.b32.xlu0 %v1027, 122
      %v1044 = vpop.permute.xlu0 %1043
      %1045 = vrot.lane.b32.xlu0 %v1028, 122
      %v1046 = vpop.permute.xlu0 %1045
      %vm1047 = vcmask 998400
      %v1048 = vsel %vm1047, %v1036, %v1038
      %v1049 = vsel %vm1047, %v1038, %v1040
      %v1050 = vsel %vm1047, %v1042, %v1044
      %v1051 = vsel %vm1047, %v1044, %v1046
      %v1058 = vadd.f32 %v961, %v1048
      %v1059 = vadd.f32 %v962, %v1049
      %v1060 = vadd.f32 %v963, %v1040
      %v1061 = vadd.f32 %v964, %v1050
      %v1062 = vadd.f32 %v965, %v1051
      %v1063 = vadd.f32 %v966, %v1046
      %1064 = vset.pattern.permute.xlu0 55
      %1065 = vperm.xlu0 %1064, %v454
      %v1066 = vpop.permute.xlu0 %1065
      %1068 = vset.pattern.permute.xlu0 55
      %1069 = vperm.xlu0 %1068, %v455
      %v1070 = vpop.permute.xlu0 %1069
      %v1072 = vmul.f32 %v460, %v1066
      %v1073 = vmul.f32 %v461, %v1066
      %v1074 = vmul.f32 %v462, %v1066
      %v1075 = vmul.f32 %v464, %v1070
      %v1076 = vmul.f32 %v465, %v1070
      %v1077 = vmul.f32 %v466, %v1070
      %1084 = vrot.lane.b32.xlu0 %v1072, 122
      %v1085 = vpop.permute.xlu0 %1084
      %1086 = vrot.lane.b32.xlu0 %v1073, 122
      %v1087 = vpop.permute.xlu0 %1086
      %1088 = vrot.lane.b32.xlu0 %v1074, 122
      %v1089 = vpop.permute.xlu0 %1088
      %1090 = vrot.lane.b32.xlu0 %v1075, 122
      %v1091 = vpop.permute.xlu0 %1090
      %1092 = vrot.lane.b32.xlu0 %v1076, 122
      %v1093 = vpop.permute.xlu0 %1092
      %1094 = vrot.lane.b32.xlu0 %v1077, 122
      %v1095 = vpop.permute.xlu0 %1094
      %v1096 = vsel %vm1047, %v1085, %v1087
      %v1097 = vsel %vm1047, %v1087, %v1089
      %v1098 = vsel %vm1047, %v1091, %v1093
      %v1099 = vsel %vm1047, %v1093, %v1095
      %v1106 = vadd.f32 %v1009, %v1096
      %v1107 = vadd.f32 %v1010, %v1097
      %v1108 = vadd.f32 %v1011, %v1089
      %v1109 = vadd.f32 %v1012, %v1098
      %v1110 = vadd.f32 %v1013, %v1099
      %v1111 = vadd.f32 %v1014, %v1095
      %1112 = vset.pattern.permute.xlu0 7
      %1113 = vperm.xlu0 %1112, %v454
      %v1114 = vpop.permute.xlu0 %1113
      %1116 = vset.pattern.permute.xlu0 7
      %1117 = vperm.xlu0 %1116, %v455
      %v1118 = vpop.permute.xlu0 %1117
      %v1120 = vmul.f32 %v460, %v1114
      %v1121 = vmul.f32 %v461, %v1114
      %v1122 = vmul.f32 %v462, %v1114
      %v1123 = vmul.f32 %v464, %v1118
      %v1124 = vmul.f32 %v465, %v1118
      %v1125 = vmul.f32 %v466, %v1118
      %1132 = vrot.lane.b32.xlu0 %v1120, 106
      %v1133 = vpop.permute.xlu0 %1132
      %1134 = vrot.lane.b32.xlu0 %v1121, 106
      %v1135 = vpop.permute.xlu0 %1134
      %1136 = vrot.lane.b32.xlu0 %v1122, 106
      %v1137 = vpop.permute.xlu0 %1136
      %1138 = vrot.lane.b32.xlu0 %v1123, 106
      %v1139 = vpop.permute.xlu0 %1138
      %1140 = vrot.lane.b32.xlu0 %v1124, 106
      %v1141 = vpop.permute.xlu0 %1140
      %1142 = vrot.lane.b32.xlu0 %v1125, 106
      %v1143 = vpop.permute.xlu0 %1142
      %vm1144 = vcmask 867328
      %v1145 = vsel %vm1144, %v1133, %v1135
      %v1146 = vsel %vm1144, %v1135, %v1137
      %v1147 = vsel %vm1144, %v1139, %v1141
      %v1148 = vsel %vm1144, %v1141, %v1143
      %v1155 = vadd.f32 %v1058, %v1145
      %v1156 = vadd.f32 %v1059, %v1146
      %v1157 = vadd.f32 %v1060, %v1137
      %v1158 = vadd.f32 %v1061, %v1147
      %v1159 = vadd.f32 %v1062, %v1148
      %v1160 = vadd.f32 %v1063, %v1143
      %1161 = vset.pattern.permute.xlu0 56
      %1162 = vperm.xlu0 %1161, %v454
      %v1163 = vpop.permute.xlu0 %1162
      %1165 = vset.pattern.permute.xlu0 56
      %1166 = vperm.xlu0 %1165, %v455
      %v1167 = vpop.permute.xlu0 %1166
      %v1169 = vmul.f32 %v460, %v1163
      %v1170 = vmul.f32 %v461, %v1163
      %v1171 = vmul.f32 %v462, %v1163
      %v1172 = vmul.f32 %v464, %v1167
      %v1173 = vmul.f32 %v465, %v1167
      %v1174 = vmul.f32 %v466, %v1167
      %1181 = vrot.lane.b32.xlu0 %v1169, 106
      %v1182 = vpop.permute.xlu0 %1181
      %1183 = vrot.lane.b32.xlu0 %v1170, 106
      %v1184 = vpop.permute.xlu0 %1183
      %1185 = vrot.lane.b32.xlu0 %v1171, 106
      %v1186 = vpop.permute.xlu0 %1185
      %1187 = vrot.lane.b32.xlu0 %v1172, 106
      %v1188 = vpop.permute.xlu0 %1187
      %1189 = vrot.lane.b32.xlu0 %v1173, 106
      %v1190 = vpop.permute.xlu0 %1189
      %1191 = vrot.lane.b32.xlu0 %v1174, 106
      %v1192 = vpop.permute.xlu0 %1191
      %v1193 = vsel %vm1144, %v1182, %v1184
      %v1194 = vsel %vm1144, %v1184, %v1186
      %v1195 = vsel %vm1144, %v1188, %v1190
      %v1196 = vsel %vm1144, %v1190, %v1192
      %v1203 = vadd.f32 %v1106, %v1193
      %v1204 = vadd.f32 %v1107, %v1194
      %v1205 = vadd.f32 %v1108, %v1186
      %v1206 = vadd.f32 %v1109, %v1195
      %v1207 = vadd.f32 %v1110, %v1196
      %v1208 = vadd.f32 %v1111, %v1192
      %1209 = vset.pattern.permute.xlu0 8
      %1210 = vperm.xlu0 %1209, %v454
      %v1211 = vpop.permute.xlu0 %1210
      %1213 = vset.pattern.permute.xlu0 8
      %1214 = vperm.xlu0 %1213, %v455
      %v1215 = vpop.permute.xlu0 %1214
      %v1217 = vmul.f32 %v460, %v1211
      %v1218 = vmul.f32 %v461, %v1211
      %v1219 = vmul.f32 %v462, %v1211
      %v1220 = vmul.f32 %v464, %v1215
      %v1221 = vmul.f32 %v465, %v1215
      %v1222 = vmul.f32 %v466, %v1215
      %1229 = vrot.lane.b32.xlu0 %v1217, 105
      %v1230 = vpop.permute.xlu0 %1229
      %1231 = vrot.lane.b32.xlu0 %v1218, 105
      %v1232 = vpop.permute.xlu0 %1231
      %1233 = vrot.lane.b32.xlu0 %v1219, 105
      %v1234 = vpop.permute.xlu0 %1233
      %1235 = vrot.lane.b32.xlu0 %v1220, 105
      %v1236 = vpop.permute.xlu0 %1235
      %1237 = vrot.lane.b32.xlu0 %v1221, 105
      %v1238 = vpop.permute.xlu0 %1237
      %1239 = vrot.lane.b32.xlu0 %v1222, 105
      %v1240 = vpop.permute.xlu0 %1239
      %vm1241 = vcmask 859136
      %v1242 = vsel %vm1241, %v1230, %v1232
      %v1243 = vsel %vm1241, %v1232, %v1234
      %v1244 = vsel %vm1241, %v1236, %v1238
      %v1245 = vsel %vm1241, %v1238, %v1240
      %v1252 = vadd.f32 %v1155, %v1242
      %v1253 = vadd.f32 %v1156, %v1243
      %v1254 = vadd.f32 %v1157, %v1234
      %v1255 = vadd.f32 %v1158, %v1244
      %v1256 = vadd.f32 %v1159, %v1245
      %v1257 = vadd.f32 %v1160, %v1240
      %1258 = vset.pattern.permute.xlu0 57
      %1259 = vperm.xlu0 %1258, %v454
      %v1260 = vpop.permute.xlu0 %1259
      %1262 = vset.pattern.permute.xlu0 57
      %1263 = vperm.xlu0 %1262, %v455
      %v1264 = vpop.permute.xlu0 %1263
      %v1266 = vmul.f32 %v460, %v1260
      %v1267 = vmul.f32 %v461, %v1260
      %v1268 = vmul.f32 %v462, %v1260
      %v1269 = vmul.f32 %v464, %v1264
      %v1270 = vmul.f32 %v465, %v1264
      %v1271 = vmul.f32 %v466, %v1264
      %1278 = vrot.lane.b32.xlu0 %v1266, 105
      %v1279 = vpop.permute.xlu0 %1278
      %1280 = vrot.lane.b32.xlu0 %v1267, 105
      %v1281 = vpop.permute.xlu0 %1280
      %1282 = vrot.lane.b32.xlu0 %v1268, 105
      %v1283 = vpop.permute.xlu0 %1282
      %1284 = vrot.lane.b32.xlu0 %v1269, 105
      %v1285 = vpop.permute.xlu0 %1284
      %1286 = vrot.lane.b32.xlu0 %v1270, 105
      %v1287 = vpop.permute.xlu0 %1286
      %1288 = vrot.lane.b32.xlu0 %v1271, 105
      %v1289 = vpop.permute.xlu0 %1288
      %v1290 = vsel %vm1241, %v1279, %v1281
      %v1291 = vsel %vm1241, %v1281, %v1283
      %v1292 = vsel %vm1241, %v1285, %v1287
      %v1293 = vsel %vm1241, %v1287, %v1289
      %v1300 = vadd.f32 %v1203, %v1290
      %v1301 = vadd.f32 %v1204, %v1291
      %v1302 = vadd.f32 %v1205, %v1283
      %v1303 = vadd.f32 %v1206, %v1292
      %v1304 = vadd.f32 %v1207, %v1293
      %v1305 = vadd.f32 %v1208, %v1289
      %1306 = vset.pattern.permute.xlu0 9
      %1307 = vperm.xlu0 %1306, %v454
      %v1308 = vpop.permute.xlu0 %1307
      %1310 = vset.pattern.permute.xlu0 9
      %1311 = vperm.xlu0 %1310, %v455
      %v1312 = vpop.permute.xlu0 %1311
      %v1314 = vmul.f32 %v460, %v1308
      %v1315 = vmul.f32 %v461, %v1308
      %v1316 = vmul.f32 %v462, %v1308
      %v1317 = vmul.f32 %v464, %v1312
      %v1318 = vmul.f32 %v465, %v1312
      %v1319 = vmul.f32 %v466, %v1312
      %1326 = vrot.lane.b32.xlu0 %v1314, 104
      %v1327 = vpop.permute.xlu0 %1326
      %1328 = vrot.lane.b32.xlu0 %v1315, 104
      %v1329 = vpop.permute.xlu0 %1328
      %1330 = vrot.lane.b32.xlu0 %v1316, 104
      %v1331 = vpop.permute.xlu0 %1330
      %1332 = vrot.lane.b32.xlu0 %v1317, 104
      %v1333 = vpop.permute.xlu0 %1332
      %1334 = vrot.lane.b32.xlu0 %v1318, 104
      %v1335 = vpop.permute.xlu0 %1334
      %1336 = vrot.lane.b32.xlu0 %v1319, 104
      %v1337 = vpop.permute.xlu0 %1336
      %vm1338 = vcmask 850944
      %v1339 = vsel %vm1338, %v1327, %v1329
      %v1340 = vsel %vm1338, %v1329, %v1331
      %v1341 = vsel %vm1338, %v1333, %v1335
      %v1342 = vsel %vm1338, %v1335, %v1337
      %v1349 = vadd.f32 %v1252, %v1339
      %v1350 = vadd.f32 %v1253, %v1340
      %v1351 = vadd.f32 %v1254, %v1331
      %v1352 = vadd.f32 %v1255, %v1341
      %v1353 = vadd.f32 %v1256, %v1342
      %v1354 = vadd.f32 %v1257, %v1337
      %1355 = vset.pattern.permute.xlu0 58
      %1356 = vperm.xlu0 %1355, %v454
      %v1357 = vpop.permute.xlu0 %1356
      %1359 = vset.pattern.permute.xlu0 58
      %1360 = vperm.xlu0 %1359, %v455
      %v1361 = vpop.permute.xlu0 %1360
      %v1363 = vmul.f32 %v460, %v1357
      %v1364 = vmul.f32 %v461, %v1357
      %v1365 = vmul.f32 %v462, %v1357
      %v1366 = vmul.f32 %v464, %v1361
      %v1367 = vmul.f32 %v465, %v1361
      %v1368 = vmul.f32 %v466, %v1361
      %1375 = vrot.lane.b32.xlu0 %v1363, 104
      %v1376 = vpop.permute.xlu0 %1375
      %1377 = vrot.lane.b32.xlu0 %v1364, 104
      %v1378 = vpop.permute.xlu0 %1377
      %1379 = vrot.lane.b32.xlu0 %v1365, 104
      %v1380 = vpop.permute.xlu0 %1379
      %1381 = vrot.lane.b32.xlu0 %v1366, 104
      %v1382 = vpop.permute.xlu0 %1381
      %1383 = vrot.lane.b32.xlu0 %v1367, 104
      %v1384 = vpop.permute.xlu0 %1383
      %1385 = vrot.lane.b32.xlu0 %v1368, 104
      %v1386 = vpop.permute.xlu0 %1385
      %v1387 = vsel %vm1338, %v1376, %v1378
      %v1388 = vsel %vm1338, %v1378, %v1380
      %v1389 = vsel %vm1338, %v1382, %v1384
      %v1390 = vsel %vm1338, %v1384, %v1386
      %v1397 = vadd.f32 %v1300, %v1387
      %v1398 = vadd.f32 %v1301, %v1388
      %v1399 = vadd.f32 %v1302, %v1380
      %v1400 = vadd.f32 %v1303, %v1389
      %v1401 = vadd.f32 %v1304, %v1390
      %v1402 = vadd.f32 %v1305, %v1386
      %1403 = vset.pattern.permute.xlu0 10
      %1404 = vperm.xlu0 %1403, %v454
      %v1405 = vpop.permute.xlu0 %1404
      %1407 = vset.pattern.permute.xlu0 10
      %1408 = vperm.xlu0 %1407, %v455
      %v1409 = vpop.permute.xlu0 %1408
      %v1411 = vmul.f32 %v460, %v1405
      %v1412 = vmul.f32 %v461, %v1405
      %v1413 = vmul.f32 %v462, %v1405
      %v1414 = vmul.f32 %v464, %v1409
      %v1415 = vmul.f32 %v465, %v1409
      %v1416 = vmul.f32 %v466, %v1409
      %1423 = vrot.lane.b32.xlu0 %v1411, 103
      %v1424 = vpop.permute.xlu0 %1423
      %1425 = vrot.lane.b32.xlu0 %v1412, 103
      %v1426 = vpop.permute.xlu0 %1425
      %1427 = vrot.lane.b32.xlu0 %v1413, 103
      %v1428 = vpop.permute.xlu0 %1427
      %1429 = vrot.lane.b32.xlu0 %v1414, 103
      %v1430 = vpop.permute.xlu0 %1429
      %1431 = vrot.lane.b32.xlu0 %v1415, 103
      %v1432 = vpop.permute.xlu0 %1431
      %1433 = vrot.lane.b32.xlu0 %v1416, 103
      %v1434 = vpop.permute.xlu0 %1433
      %vm1435 = vcmask 842752
      %v1436 = vsel %vm1435, %v1424, %v1426
      %v1437 = vsel %vm1435, %v1426, %v1428
      %v1438 = vsel %vm1435, %v1430, %v1432
      %v1439 = vsel %vm1435, %v1432, %v1434
      %v1446 = vadd.f32 %v1349, %v1436
      %v1447 = vadd.f32 %v1350, %v1437
      %v1448 = vadd.f32 %v1351, %v1428
      %v1449 = vadd.f32 %v1352, %v1438
      %v1450 = vadd.f32 %v1353, %v1439
      %v1451 = vadd.f32 %v1354, %v1434
      %1452 = vset.pattern.permute.xlu0 59
      %1453 = vperm.xlu0 %1452, %v454
      %v1454 = vpop.permute.xlu0 %1453
      %1456 = vset.pattern.permute.xlu0 59
      %1457 = vperm.xlu0 %1456, %v455
      %v1458 = vpop.permute.xlu0 %1457
      %v1460 = vmul.f32 %v460, %v1454
      %v1461 = vmul.f32 %v461, %v1454
      %v1462 = vmul.f32 %v462, %v1454
      %v1463 = vmul.f32 %v464, %v1458
      %v1464 = vmul.f32 %v465, %v1458
      %v1465 = vmul.f32 %v466, %v1458
      %1472 = vrot.lane.b32.xlu0 %v1460, 103
      %v1473 = vpop.permute.xlu0 %1472
      %1474 = vrot.lane.b32.xlu0 %v1461, 103
      %v1475 = vpop.permute.xlu0 %1474
      %1476 = vrot.lane.b32.xlu0 %v1462, 103
      %v1477 = vpop.permute.xlu0 %1476
      %1478 = vrot.lane.b32.xlu0 %v1463, 103
      %v1479 = vpop.permute.xlu0 %1478
      %1480 = vrot.lane.b32.xlu0 %v1464, 103
      %v1481 = vpop.permute.xlu0 %1480
      %1482 = vrot.lane.b32.xlu0 %v1465, 103
      %v1483 = vpop.permute.xlu0 %1482
      %v1484 = vsel %vm1435, %v1473, %v1475
      %v1485 = vsel %vm1435, %v1475, %v1477
      %v1486 = vsel %vm1435, %v1479, %v1481
      %v1487 = vsel %vm1435, %v1481, %v1483
      %v1494 = vadd.f32 %v1397, %v1484
      %v1495 = vadd.f32 %v1398, %v1485
      %v1496 = vadd.f32 %v1399, %v1477
      %v1497 = vadd.f32 %v1400, %v1486
      %v1498 = vadd.f32 %v1401, %v1487
      %v1499 = vadd.f32 %v1402, %v1483
      %1500 = vset.pattern.permute.xlu0 11
      %1501 = vperm.xlu0 %1500, %v454
      %v1502 = vpop.permute.xlu0 %1501
      %1504 = vset.pattern.permute.xlu0 11
      %1505 = vperm.xlu0 %1504, %v455
      %v1506 = vpop.permute.xlu0 %1505
      %v1508 = vmul.f32 %v460, %v1502
      %v1509 = vmul.f32 %v461, %v1502
      %v1510 = vmul.f32 %v462, %v1502
      %v1511 = vmul.f32 %v464, %v1506
      %v1512 = vmul.f32 %v465, %v1506
      %v1513 = vmul.f32 %v466, %v1506
      %1520 = vrot.lane.b32.xlu0 %v1508, 102
      %v1521 = vpop.permute.xlu0 %1520
      %1522 = vrot.lane.b32.xlu0 %v1509, 102
      %v1523 = vpop.permute.xlu0 %1522
      %1524 = vrot.lane.b32.xlu0 %v1510, 102
      %v1525 = vpop.permute.xlu0 %1524
      %1526 = vrot.lane.b32.xlu0 %v1511, 102
      %v1527 = vpop.permute.xlu0 %1526
      %1528 = vrot.lane.b32.xlu0 %v1512, 102
      %v1529 = vpop.permute.xlu0 %1528
      %1530 = vrot.lane.b32.xlu0 %v1513, 102
      %v1531 = vpop.permute.xlu0 %1530
      %vm1532 = vcmask 834560
      %v1533 = vsel %vm1532, %v1521, %v1523
      %v1534 = vsel %vm1532, %v1523, %v1525
      %v1535 = vsel %vm1532, %v1527, %v1529
      %v1536 = vsel %vm1532, %v1529, %v1531
      %v1543 = vadd.f32 %v1446, %v1533
      %v1544 = vadd.f32 %v1447, %v1534
      %v1545 = vadd.f32 %v1448, %v1525
      %v1546 = vadd.f32 %v1449, %v1535
      %v1547 = vadd.f32 %v1450, %v1536
      %v1548 = vadd.f32 %v1451, %v1531
      %1549 = vset.pattern.permute.xlu0 60
      %1550 = vperm.xlu0 %1549, %v454
      %v1551 = vpop.permute.xlu0 %1550
      %1553 = vset.pattern.permute.xlu0 60
      %1554 = vperm.xlu0 %1553, %v455
      %v1555 = vpop.permute.xlu0 %1554
      %v1557 = vmul.f32 %v460, %v1551
      %v1558 = vmul.f32 %v461, %v1551
      %v1559 = vmul.f32 %v462, %v1551
      %v1560 = vmul.f32 %v464, %v1555
      %v1561 = vmul.f32 %v465, %v1555
      %v1562 = vmul.f32 %v466, %v1555
      %1569 = vrot.lane.b32.xlu0 %v1557, 102
      %v1570 = vpop.permute.xlu0 %1569
      %1571 = vrot.lane.b32.xlu0 %v1558, 102
      %v1572 = vpop.permute.xlu0 %1571
      %1573 = vrot.lane.b32.xlu0 %v1559, 102
      %v1574 = vpop.permute.xlu0 %1573
      %1575 = vrot.lane.b32.xlu0 %v1560, 102
      %v1576 = vpop.permute.xlu0 %1575
      %1577 = vrot.lane.b32.xlu0 %v1561, 102
      %v1578 = vpop.permute.xlu0 %1577
      %1579 = vrot.lane.b32.xlu0 %v1562, 102
      %v1580 = vpop.permute.xlu0 %1579
      %v1581 = vsel %vm1532, %v1570, %v1572
      %v1582 = vsel %vm1532, %v1572, %v1574
      %v1583 = vsel %vm1532, %v1576, %v1578
      %v1584 = vsel %vm1532, %v1578, %v1580
      %v1591 = vadd.f32 %v1494, %v1581
      %v1592 = vadd.f32 %v1495, %v1582
      %v1593 = vadd.f32 %v1496, %v1574
      %v1594 = vadd.f32 %v1497, %v1583
      %v1595 = vadd.f32 %v1498, %v1584
      %v1596 = vadd.f32 %v1499, %v1580
      %1597 = vset.pattern.permute.xlu0 12
      %1598 = vperm.xlu0 %1597, %v454
      %v1599 = vpop.permute.xlu0 %1598
      %1601 = vset.pattern.permute.xlu0 12
      %1602 = vperm.xlu0 %1601, %v455
      %v1603 = vpop.permute.xlu0 %1602
      %v1605 = vmul.f32 %v460, %v1599
      %v1606 = vmul.f32 %v461, %v1599
      %v1607 = vmul.f32 %v462, %v1599
      %v1608 = vmul.f32 %v464, %v1603
      %v1609 = vmul.f32 %v465, %v1603
      %v1610 = vmul.f32 %v466, %v1603
      %1617 = vrot.lane.b32.xlu0 %v1605, 101
      %v1618 = vpop.permute.xlu0 %1617
      %1619 = vrot.lane.b32.xlu0 %v1606, 101
      %v1620 = vpop.permute.xlu0 %1619
      %1621 = vrot.lane.b32.xlu0 %v1607, 101
      %v1622 = vpop.permute.xlu0 %1621
      %1623 = vrot.lane.b32.xlu0 %v1608, 101
      %v1624 = vpop.permute.xlu0 %1623
      %1625 = vrot.lane.b32.xlu0 %v1609, 101
      %v1626 = vpop.permute.xlu0 %1625
      %1627 = vrot.lane.b32.xlu0 %v1610, 101
      %v1628 = vpop.permute.xlu0 %1627
      %vm1629 = vcmask 826368
      %v1630 = vsel %vm1629, %v1618, %v1620
      %v1631 = vsel %vm1629, %v1620, %v1622
      %v1632 = vsel %vm1629, %v1624, %v1626
      %v1633 = vsel %vm1629, %v1626, %v1628
      %v1640 = vadd.f32 %v1543, %v1630
      %v1641 = vadd.f32 %v1544, %v1631
      %v1642 = vadd.f32 %v1545, %v1622
      %v1643 = vadd.f32 %v1546, %v1632
      %v1644 = vadd.f32 %v1547, %v1633
      %v1645 = vadd.f32 %v1548, %v1628
      %1646 = vset.pattern.permute.xlu0 61
      %1647 = vperm.xlu0 %1646, %v454
      %v1648 = vpop.permute.xlu0 %1647
      %1650 = vset.pattern.permute.xlu0 61
      %1651 = vperm.xlu0 %1650, %v455
      %v1652 = vpop.permute.xlu0 %1651
      %v1654 = vmul.f32 %v460, %v1648
      %v1655 = vmul.f32 %v461, %v1648
      %v1656 = vmul.f32 %v462, %v1648
      %v1657 = vmul.f32 %v464, %v1652
      %v1658 = vmul.f32 %v465, %v1652
      %v1659 = vmul.f32 %v466, %v1652
      %1666 = vrot.lane.b32.xlu0 %v1654, 101
      %v1667 = vpop.permute.xlu0 %1666
      %1668 = vrot.lane.b32.xlu0 %v1655, 101
      %v1669 = vpop.permute.xlu0 %1668
      %1670 = vrot.lane.b32.xlu0 %v1656, 101
      %v1671 = vpop.permute.xlu0 %1670
      %1672 = vrot.lane.b32.xlu0 %v1657, 101
      %v1673 = vpop.permute.xlu0 %1672
      %1674 = vrot.lane.b32.xlu0 %v1658, 101
      %v1675 = vpop.permute.xlu0 %1674
      %1676 = vrot.lane.b32.xlu0 %v1659, 101
      %v1677 = vpop.permute.xlu0 %1676
      %v1678 = vsel %vm1629, %v1667, %v1669
      %v1679 = vsel %vm1629, %v1669, %v1671
      %v1680 = vsel %vm1629, %v1673, %v1675
      %v1681 = vsel %vm1629, %v1675, %v1677
      %v1688 = vadd.f32 %v1591, %v1678
      %v1689 = vadd.f32 %v1592, %v1679
      %v1690 = vadd.f32 %v1593, %v1671
      %v1691 = vadd.f32 %v1594, %v1680
      %v1692 = vadd.f32 %v1595, %v1681
      %v1693 = vadd.f32 %v1596, %v1677
      %1694 = vset.pattern.permute.xlu0 13
      %1695 = vperm.xlu0 %1694, %v454
      %v1696 = vpop.permute.xlu0 %1695
      %1698 = vset.pattern.permute.xlu0 13
      %1699 = vperm.xlu0 %1698, %v455
      %v1700 = vpop.permute.xlu0 %1699
      %v1702 = vmul.f32 %v460, %v1696
      %v1703 = vmul.f32 %v461, %v1696
      %v1704 = vmul.f32 %v462, %v1696
      %v1705 = vmul.f32 %v464, %v1700
      %v1706 = vmul.f32 %v465, %v1700
      %v1707 = vmul.f32 %v466, %v1700
      %1714 = vrot.lane.b32.xlu0 %v1702, 100
      %v1715 = vpop.permute.xlu0 %1714
      %1716 = vrot.lane.b32.xlu0 %v1703, 100
      %v1717 = vpop.permute.xlu0 %1716
      %1718 = vrot.lane.b32.xlu0 %v1704, 100
      %v1719 = vpop.permute.xlu0 %1718
      %1720 = vrot.lane.b32.xlu0 %v1705, 100
      %v1721 = vpop.permute.xlu0 %1720
      %1722 = vrot.lane.b32.xlu0 %v1706, 100
      %v1723 = vpop.permute.xlu0 %1722
      %1724 = vrot.lane.b32.xlu0 %v1707, 100
      %v1725 = vpop.permute.xlu0 %1724
      %vm1726 = vcmask 818176
      %v1727 = vsel %vm1726, %v1715, %v1717
      %v1728 = vsel %vm1726, %v1717, %v1719
      %v1729 = vsel %vm1726, %v1721, %v1723
      %v1730 = vsel %vm1726, %v1723, %v1725
      %v1737 = vadd.f32 %v1640, %v1727
      %v1738 = vadd.f32 %v1641, %v1728
      %v1739 = vadd.f32 %v1642, %v1719
      %v1740 = vadd.f32 %v1643, %v1729
      %v1741 = vadd.f32 %v1644, %v1730
      %v1742 = vadd.f32 %v1645, %v1725
      %1743 = vset.pattern.permute.xlu0 62
      %1744 = vperm.xlu0 %1743, %v454
      %v1745 = vpop.permute.xlu0 %1744
      %1747 = vset.pattern.permute.xlu0 62
      %1748 = vperm.xlu0 %1747, %v455
      %v1749 = vpop.permute.xlu0 %1748
      %v1751 = vmul.f32 %v460, %v1745
      %v1752 = vmul.f32 %v461, %v1745
      %v1753 = vmul.f32 %v462, %v1745
      %v1754 = vmul.f32 %v464, %v1749
      %v1755 = vmul.f32 %v465, %v1749
      %v1756 = vmul.f32 %v466, %v1749
      %1763 = vrot.lane.b32.xlu0 %v1751, 100
      %v1764 = vpop.permute.xlu0 %1763
      %1765 = vrot.lane.b32.xlu0 %v1752, 100
      %v1766 = vpop.permute.xlu0 %1765
      %1767 = vrot.lane.b32.xlu0 %v1753, 100
      %v1768 = vpop.permute.xlu0 %1767
      %1769 = vrot.lane.b32.xlu0 %v1754, 100
      %v1770 = vpop.permute.xlu0 %1769
      %1771 = vrot.lane.b32.xlu0 %v1755, 100
      %v1772 = vpop.permute.xlu0 %1771
      %1773 = vrot.lane.b32.xlu0 %v1756, 100
      %v1774 = vpop.permute.xlu0 %1773
      %v1775 = vsel %vm1726, %v1764, %v1766
      %v1776 = vsel %vm1726, %v1766, %v1768
      %v1777 = vsel %vm1726, %v1770, %v1772
      %v1778 = vsel %vm1726, %v1772, %v1774
      %v1785 = vadd.f32 %v1688, %v1775
      %v1786 = vadd.f32 %v1689, %v1776
      %v1787 = vadd.f32 %v1690, %v1768
      %v1788 = vadd.f32 %v1691, %v1777
      %v1789 = vadd.f32 %v1692, %v1778
      %v1790 = vadd.f32 %v1693, %v1774
      %1791 = vset.pattern.permute.xlu0 14
      %1792 = vperm.xlu0 %1791, %v454
      %v1793 = vpop.permute.xlu0 %1792
      %1795 = vset.pattern.permute.xlu0 14
      %1796 = vperm.xlu0 %1795, %v455
      %v1797 = vpop.permute.xlu0 %1796
      %v1799 = vmul.f32 %v460, %v1793
      %v1800 = vmul.f32 %v461, %v1793
      %v1801 = vmul.f32 %v462, %v1793
      %v1802 = vmul.f32 %v463, %v1793
      %v1803 = vmul.f32 %v464, %v1797
      %v1804 = vmul.f32 %v465, %v1797
      %v1805 = vmul.f32 %v466, %v1797
      %v1806 = vmul.f32 %v467, %v1797
      %1815 = vrot.lane.b32.xlu0 %v1799, 84
      %v1816 = vpop.permute.xlu0 %1815
      %1817 = vrot.lane.b32.xlu0 %v1800, 84
      %v1818 = vpop.permute.xlu0 %1817
      %1819 = vrot.lane.b32.xlu0 %v1801, 84
      %v1820 = vpop.permute.xlu0 %1819
      %1821 = vrot.lane.b32.xlu0 %v1802, 84
      %v1822 = vpop.permute.xlu0 %1821
      %1823 = vrot.lane.b32.xlu0 %v1803, 84
      %v1824 = vpop.permute.xlu0 %1823
      %1825 = vrot.lane.b32.xlu0 %v1804, 84
      %v1826 = vpop.permute.xlu0 %1825
      %1827 = vrot.lane.b32.xlu0 %v1805, 84
      %v1828 = vpop.permute.xlu0 %1827
      %1829 = vrot.lane.b32.xlu0 %v1806, 84
      %v1830 = vpop.permute.xlu0 %1829
      %vm1831 = vcmask 687104
      %v1832 = vsel %vm1831, %v1816, %v1818
      %v1833 = vsel %vm1831, %v1818, %v1820
      %v1834 = vsel %vm1831, %v1820, %v1822
      %v1835 = vsel %vm1831, %v1824, %v1826
      %v1836 = vsel %vm1831, %v1826, %v1828
      %v1837 = vsel %vm1831, %v1828, %v1830
      %v1844 = vadd.f32 %v1737, %v1832
      %v1845 = vadd.f32 %v1738, %v1833
      %v1846 = vadd.f32 %v1739, %v1834
      %v1847 = vadd.f32 %v1740, %v1835
      %v1848 = vadd.f32 %v1741, %v1836
      %v1849 = vadd.f32 %v1742, %v1837
      %1850 = vset.pattern.permute.xlu0 63
      %1851 = vperm.xlu0 %1850, %v454
      %v1852 = vpop.permute.xlu0 %1851
      %1854 = vset.pattern.permute.xlu0 63
      %1855 = vperm.xlu0 %1854, %v455
      %v1856 = vpop.permute.xlu0 %1855
      %v1858 = vmul.f32 %v460, %v1852
      %v1859 = vmul.f32 %v461, %v1852
      %v1860 = vmul.f32 %v462, %v1852
      %v1861 = vmul.f32 %v463, %v1852
      %v1862 = vmul.f32 %v464, %v1856
      %v1863 = vmul.f32 %v465, %v1856
      %v1864 = vmul.f32 %v466, %v1856
      %v1865 = vmul.f32 %v467, %v1856
      %1874 = vrot.lane.b32.xlu0 %v1858, 84
      %v1875 = vpop.permute.xlu0 %1874
      %1876 = vrot.lane.b32.xlu0 %v1859, 84
      %v1877 = vpop.permute.xlu0 %1876
      %1878 = vrot.lane.b32.xlu0 %v1860, 84
      %v1879 = vpop.permute.xlu0 %1878
      %1880 = vrot.lane.b32.xlu0 %v1861, 84
      %v1881 = vpop.permute.xlu0 %1880
      %1882 = vrot.lane.b32.xlu0 %v1862, 84
      %v1883 = vpop.permute.xlu0 %1882
      %1884 = vrot.lane.b32.xlu0 %v1863, 84
      %v1885 = vpop.permute.xlu0 %1884
      %1886 = vrot.lane.b32.xlu0 %v1864, 84
      %v1887 = vpop.permute.xlu0 %1886
      %1888 = vrot.lane.b32.xlu0 %v1865, 84
      %v1889 = vpop.permute.xlu0 %1888
      %v1890 = vsel %vm1831, %v1875, %v1877
      %v1891 = vsel %vm1831, %v1877, %v1879
      %v1892 = vsel %vm1831, %v1879, %v1881
      %v1893 = vsel %vm1831, %v1883, %v1885
      %v1894 = vsel %vm1831, %v1885, %v1887
      %v1895 = vsel %vm1831, %v1887, %v1889
      %v1902 = vadd.f32 %v1785, %v1890
      %v1903 = vadd.f32 %v1786, %v1891
      %v1904 = vadd.f32 %v1787, %v1892
      %v1905 = vadd.f32 %v1788, %v1893
      %v1906 = vadd.f32 %v1789, %v1894
      %v1907 = vadd.f32 %v1790, %v1895
      %1908 = vset.pattern.permute.xlu0 15
      %1909 = vperm.xlu0 %1908, %v454
      %v1910 = vpop.permute.xlu0 %1909
      %1912 = vset.pattern.permute.xlu0 15
      %1913 = vperm.xlu0 %1912, %v455
      %v1914 = vpop.permute.xlu0 %1913
      %v1916 = vmul.f32 %v460, %v1910
      %v1917 = vmul.f32 %v461, %v1910
      %v1918 = vmul.f32 %v462, %v1910
      %v1919 = vmul.f32 %v463, %v1910
      %v1920 = vmul.f32 %v464, %v1914
      %v1921 = vmul.f32 %v465, %v1914
      %v1922 = vmul.f32 %v466, %v1914
      %v1923 = vmul.f32 %v467, %v1914
      %1932 = vrot.lane.b32.xlu0 %v1916, 83
      %v1933 = vpop.permute.xlu0 %1932
      %1934 = vrot.lane.b32.xlu0 %v1917, 83
      %v1935 = vpop.permute.xlu0 %1934
      %1936 = vrot.lane.b32.xlu0 %v1918, 83
      %v1937 = vpop.permute.xlu0 %1936
      %1938 = vrot.lane.b32.xlu0 %v1919, 83
      %v1939 = vpop.permute.xlu0 %1938
      %1940 = vrot.lane.b32.xlu0 %v1920, 83
      %v1941 = vpop.permute.xlu0 %1940
      %1942 = vrot.lane.b32.xlu0 %v1921, 83
      %v1943 = vpop.permute.xlu0 %1942
      %1944 = vrot.lane.b32.xlu0 %v1922, 83
      %v1945 = vpop.permute.xlu0 %1944
      %1946 = vrot.lane.b32.xlu0 %v1923, 83
      %v1947 = vpop.permute.xlu0 %1946
      %vm1948 = vcmask 678912
      %v1949 = vsel %vm1948, %v1933, %v1935
      %v1950 = vsel %vm1948, %v1935, %v1937
      %v1951 = vsel %vm1948, %v1937, %v1939
      %v1952 = vsel %vm1948, %v1941, %v1943
      %v1953 = vsel %vm1948, %v1943, %v1945
      %v1954 = vsel %vm1948, %v1945, %v1947
      %v1961 = vadd.f32 %v1844, %v1949
      %v1962 = vadd.f32 %v1845, %v1950
      %v1963 = vadd.f32 %v1846, %v1951
      %v1964 = vadd.f32 %v1847, %v1952
      %v1965 = vadd.f32 %v1848, %v1953
      %v1966 = vadd.f32 %v1849, %v1954
      %1967 = vset.pattern.permute.xlu0 64
      %1968 = vperm.xlu0 %1967, %v454
      %v1969 = vpop.permute.xlu0 %1968
      %1971 = vset.pattern.permute.xlu0 64
      %1972 = vperm.xlu0 %1971, %v455
      %v1973 = vpop.permute.xlu0 %1972
      %v1975 = vmul.f32 %v460, %v1969
      %v1976 = vmul.f32 %v461, %v1969
      %v1977 = vmul.f32 %v462, %v1969
      %v1978 = vmul.f32 %v463, %v1969
      %v1979 = vmul.f32 %v464, %v1973
      %v1980 = vmul.f32 %v465, %v1973
      %v1981 = vmul.f32 %v466, %v1973
      %v1982 = vmul.f32 %v467, %v1973
      %1991 = vrot.lane.b32.xlu0 %v1975, 83
      %v1992 = vpop.permute.xlu0 %1991
      %1993 = vrot.lane.b32.xlu0 %v1976, 83
      %v1994 = vpop.permute.xlu0 %1993
      %1995 = vrot.lane.b32.xlu0 %v1977, 83
      %v1996 = vpop.permute.xlu0 %1995
      %1997 = vrot.lane.b32.xlu0 %v1978, 83
      %v1998 = vpop.permute.xlu0 %1997
      %1999 = vrot.lane.b32.xlu0 %v1979, 83
      %v2000 = vpop.permute.xlu0 %1999
      %2001 = vrot.lane.b32.xlu0 %v1980, 83
      %v2002 = vpop.permute.xlu0 %2001
      %2003 = vrot.lane.b32.xlu0 %v1981, 83
      %v2004 = vpop.permute.xlu0 %2003
      %2005 = vrot.lane.b32.xlu0 %v1982, 83
      %v2006 = vpop.permute.xlu0 %2005
      %v2007 = vsel %vm1948, %v1992, %v1994
      %v2008 = vsel %vm1948, %v1994, %v1996
      %v2009 = vsel %vm1948, %v1996, %v1998
      %v2010 = vsel %vm1948, %v2000, %v2002
      %v2011 = vsel %vm1948, %v2002, %v2004
      %v2012 = vsel %vm1948, %v2004, %v2006
      %v2019 = vadd.f32 %v1902, %v2007
      %v2020 = vadd.f32 %v1903, %v2008
      %v2021 = vadd.f32 %v1904, %v2009
      %v2022 = vadd.f32 %v1905, %v2010
      %v2023 = vadd.f32 %v1906, %v2011
      %v2024 = vadd.f32 %v1907, %v2012
      %2025 = vset.pattern.permute.xlu0 16
      %2026 = vperm.xlu0 %2025, %v454
      %v2027 = vpop.permute.xlu0 %2026
      %2029 = vset.pattern.permute.xlu0 16
      %2030 = vperm.xlu0 %2029, %v455
      %v2031 = vpop.permute.xlu0 %2030
      %v2033 = vmul.f32 %v460, %v2027
      %v2034 = vmul.f32 %v461, %v2027
      %v2035 = vmul.f32 %v462, %v2027
      %v2036 = vmul.f32 %v463, %v2027
      %v2037 = vmul.f32 %v464, %v2031
      %v2038 = vmul.f32 %v465, %v2031
      %v2039 = vmul.f32 %v466, %v2031
      %v2040 = vmul.f32 %v467, %v2031
      %2049 = vrot.lane.b32.xlu0 %v2033, 82
      %v2050 = vpop.permute.xlu0 %2049
      %2051 = vrot.lane.b32.xlu0 %v2034, 82
      %v2052 = vpop.permute.xlu0 %2051
      %2053 = vrot.lane.b32.xlu0 %v2035, 82
      %v2054 = vpop.permute.xlu0 %2053
      %2055 = vrot.lane.b32.xlu0 %v2036, 82
      %v2056 = vpop.permute.xlu0 %2055
      %2057 = vrot.lane.b32.xlu0 %v2037, 82
      %v2058 = vpop.permute.xlu0 %2057
      %2059 = vrot.lane.b32.xlu0 %v2038, 82
      %v2060 = vpop.permute.xlu0 %2059
      %2061 = vrot.lane.b32.xlu0 %v2039, 82
      %v2062 = vpop.permute.xlu0 %2061
      %2063 = vrot.lane.b32.xlu0 %v2040, 82
      %v2064 = vpop.permute.xlu0 %2063
      %vm2065 = vcmask 670720
      %v2066 = vsel %vm2065, %v2050, %v2052
      %v2067 = vsel %vm2065, %v2052, %v2054
      %v2068 = vsel %vm2065, %v2054, %v2056
      %v2069 = vsel %vm2065, %v2058, %v2060
      %v2070 = vsel %vm2065, %v2060, %v2062
      %v2071 = vsel %vm2065, %v2062, %v2064
      %v2078 = vadd.f32 %v1961, %v2066
      %v2079 = vadd.f32 %v1962, %v2067
      %v2080 = vadd.f32 %v1963, %v2068
      %v2081 = vadd.f32 %v1964, %v2069
      %v2082 = vadd.f32 %v1965, %v2070
      %v2083 = vadd.f32 %v1966, %v2071
      %2084 = vset.pattern.permute.xlu0 65
      %2085 = vperm.xlu0 %2084, %v454
      %v2086 = vpop.permute.xlu0 %2085
      %2088 = vset.pattern.permute.xlu0 65
      %2089 = vperm.xlu0 %2088, %v455
      %v2090 = vpop.permute.xlu0 %2089
      %v2092 = vmul.f32 %v460, %v2086
      %v2093 = vmul.f32 %v461, %v2086
      %v2094 = vmul.f32 %v462, %v2086
      %v2095 = vmul.f32 %v463, %v2086
      %v2096 = vmul.f32 %v464, %v2090
      %v2097 = vmul.f32 %v465, %v2090
      %v2098 = vmul.f32 %v466, %v2090
      %v2099 = vmul.f32 %v467, %v2090
      %2108 = vrot.lane.b32.xlu0 %v2092, 82
      %v2109 = vpop.permute.xlu0 %2108
      %2110 = vrot.lane.b32.xlu0 %v2093, 82
      %v2111 = vpop.permute.xlu0 %2110
      %2112 = vrot.lane.b32.xlu0 %v2094, 82
      %v2113 = vpop.permute.xlu0 %2112
      %2114 = vrot.lane.b32.xlu0 %v2095, 82
      %v2115 = vpop.permute.xlu0 %2114
      %2116 = vrot.lane.b32.xlu0 %v2096, 82
      %v2117 = vpop.permute.xlu0 %2116
      %2118 = vrot.lane.b32.xlu0 %v2097, 82
      %v2119 = vpop.permute.xlu0 %2118
      %2120 = vrot.lane.b32.xlu0 %v2098, 82
      %v2121 = vpop.permute.xlu0 %2120
      %2122 = vrot.lane.b32.xlu0 %v2099, 82
      %v2123 = vpop.permute.xlu0 %2122
      %v2124 = vsel %vm2065, %v2109, %v2111
      %v2125 = vsel %vm2065, %v2111, %v2113
      %v2126 = vsel %vm2065, %v2113, %v2115
      %v2127 = vsel %vm2065, %v2117, %v2119
      %v2128 = vsel %vm2065, %v2119, %v2121
      %v2129 = vsel %vm2065, %v2121, %v2123
      %v2136 = vadd.f32 %v2019, %v2124
      %v2137 = vadd.f32 %v2020, %v2125
      %v2138 = vadd.f32 %v2021, %v2126
      %v2139 = vadd.f32 %v2022, %v2127
      %v2140 = vadd.f32 %v2023, %v2128
      %v2141 = vadd.f32 %v2024, %v2129
      %2142 = vset.pattern.permute.xlu0 17
      %2143 = vperm.xlu0 %2142, %v454
      %v2144 = vpop.permute.xlu0 %2143
      %2146 = vset.pattern.permute.xlu0 17
      %2147 = vperm.xlu0 %2146, %v455
      %v2148 = vpop.permute.xlu0 %2147
      %v2150 = vmul.f32 %v460, %v2144
      %v2151 = vmul.f32 %v461, %v2144
      %v2152 = vmul.f32 %v462, %v2144
      %v2153 = vmul.f32 %v463, %v2144
      %v2154 = vmul.f32 %v464, %v2148
      %v2155 = vmul.f32 %v465, %v2148
      %v2156 = vmul.f32 %v466, %v2148
      %v2157 = vmul.f32 %v467, %v2148
      %2166 = vrot.lane.b32.xlu0 %v2150, 81
      %v2167 = vpop.permute.xlu0 %2166
      %2168 = vrot.lane.b32.xlu0 %v2151, 81
      %v2169 = vpop.permute.xlu0 %2168
      %2170 = vrot.lane.b32.xlu0 %v2152, 81
      %v2171 = vpop.permute.xlu0 %2170
      %2172 = vrot.lane.b32.xlu0 %v2153, 81
      %v2173 = vpop.permute.xlu0 %2172
      %2174 = vrot.lane.b32.xlu0 %v2154, 81
      %v2175 = vpop.permute.xlu0 %2174
      %2176 = vrot.lane.b32.xlu0 %v2155, 81
      %v2177 = vpop.permute.xlu0 %2176
      %2178 = vrot.lane.b32.xlu0 %v2156, 81
      %v2179 = vpop.permute.xlu0 %2178
      %2180 = vrot.lane.b32.xlu0 %v2157, 81
      %v2181 = vpop.permute.xlu0 %2180
      %vm2182 = vcmask 662528
      %v2183 = vsel %vm2182, %v2167, %v2169
      %v2184 = vsel %vm2182, %v2169, %v2171
      %v2185 = vsel %vm2182, %v2171, %v2173
      %v2186 = vsel %vm2182, %v2175, %v2177
      %v2187 = vsel %vm2182, %v2177, %v2179
      %v2188 = vsel %vm2182, %v2179, %v2181
      %v2195 = vadd.f32 %v2078, %v2183
      %v2196 = vadd.f32 %v2079, %v2184
      %v2197 = vadd.f32 %v2080, %v2185
      %v2198 = vadd.f32 %v2081, %v2186
      %v2199 = vadd.f32 %v2082, %v2187
      %v2200 = vadd.f32 %v2083, %v2188
      %2201 = vset.pattern.permute.xlu0 66
      %2202 = vperm.xlu0 %2201, %v454
      %v2203 = vpop.permute.xlu0 %2202
      %2205 = vset.pattern.permute.xlu0 66
      %2206 = vperm.xlu0 %2205, %v455
      %v2207 = vpop.permute.xlu0 %2206
      %v2209 = vmul.f32 %v460, %v2203
      %v2210 = vmul.f32 %v461, %v2203
      %v2211 = vmul.f32 %v462, %v2203
      %v2212 = vmul.f32 %v463, %v2203
      %v2213 = vmul.f32 %v464, %v2207
      %v2214 = vmul.f32 %v465, %v2207
      %v2215 = vmul.f32 %v466, %v2207
      %v2216 = vmul.f32 %v467, %v2207
      %2225 = vrot.lane.b32.xlu0 %v2209, 81
      %v2226 = vpop.permute.xlu0 %2225
      %2227 = vrot.lane.b32.xlu0 %v2210, 81
      %v2228 = vpop.permute.xlu0 %2227
      %2229 = vrot.lane.b32.xlu0 %v2211, 81
      %v2230 = vpop.permute.xlu0 %2229
      %2231 = vrot.lane.b32.xlu0 %v2212, 81
      %v2232 = vpop.permute.xlu0 %2231
      %2233 = vrot.lane.b32.xlu0 %v2213, 81
      %v2234 = vpop.permute.xlu0 %2233
      %2235 = vrot.lane.b32.xlu0 %v2214, 81
      %v2236 = vpop.permute.xlu0 %2235
      %2237 = vrot.lane.b32.xlu0 %v2215, 81
      %v2238 = vpop.permute.xlu0 %2237
      %2239 = vrot.lane.b32.xlu0 %v2216, 81
      %v2240 = vpop.permute.xlu0 %2239
      %v2241 = vsel %vm2182, %v2226, %v2228
      %v2242 = vsel %vm2182, %v2228, %v2230
      %v2243 = vsel %vm2182, %v2230, %v2232
      %v2244 = vsel %vm2182, %v2234, %v2236
      %v2245 = vsel %vm2182, %v2236, %v2238
      %v2246 = vsel %vm2182, %v2238, %v2240
      %v2253 = vadd.f32 %v2136, %v2241
      %v2254 = vadd.f32 %v2137, %v2242
      %v2255 = vadd.f32 %v2138, %v2243
      %v2256 = vadd.f32 %v2139, %v2244
      %v2257 = vadd.f32 %v2140, %v2245
      %v2258 = vadd.f32 %v2141, %v2246
      %2259 = vset.pattern.permute.xlu0 18
      %2260 = vperm.xlu0 %2259, %v454
      %v2261 = vpop.permute.xlu0 %2260
      %2263 = vset.pattern.permute.xlu0 18
      %2264 = vperm.xlu0 %2263, %v455
      %v2265 = vpop.permute.xlu0 %2264
      %v2267 = vmul.f32 %v460, %v2261
      %v2268 = vmul.f32 %v461, %v2261
      %v2269 = vmul.f32 %v462, %v2261
      %v2270 = vmul.f32 %v463, %v2261
      %v2271 = vmul.f32 %v464, %v2265
      %v2272 = vmul.f32 %v465, %v2265
      %v2273 = vmul.f32 %v466, %v2265
      %v2274 = vmul.f32 %v467, %v2265
      %2283 = vrot.lane.b32.xlu0 %v2267, 80
      %v2284 = vpop.permute.xlu0 %2283
      %2285 = vrot.lane.b32.xlu0 %v2268, 80
      %v2286 = vpop.permute.xlu0 %2285
      %2287 = vrot.lane.b32.xlu0 %v2269, 80
      %v2288 = vpop.permute.xlu0 %2287
      %2289 = vrot.lane.b32.xlu0 %v2270, 80
      %v2290 = vpop.permute.xlu0 %2289
      %2291 = vrot.lane.b32.xlu0 %v2271, 80
      %v2292 = vpop.permute.xlu0 %2291
      %2293 = vrot.lane.b32.xlu0 %v2272, 80
      %v2294 = vpop.permute.xlu0 %2293
      %2295 = vrot.lane.b32.xlu0 %v2273, 80
      %v2296 = vpop.permute.xlu0 %2295
      %2297 = vrot.lane.b32.xlu0 %v2274, 80
      %v2298 = vpop.permute.xlu0 %2297
      %vm2299 = vcmask 654336
      %v2300 = vsel %vm2299, %v2284, %v2286
      %v2301 = vsel %vm2299, %v2286, %v2288
      %v2302 = vsel %vm2299, %v2288, %v2290
      %v2303 = vsel %vm2299, %v2292, %v2294
      %v2304 = vsel %vm2299, %v2294, %v2296
      %v2305 = vsel %vm2299, %v2296, %v2298
      %v2312 = vadd.f32 %v2195, %v2300
      %v2313 = vadd.f32 %v2196, %v2301
      %v2314 = vadd.f32 %v2197, %v2302
      %v2315 = vadd.f32 %v2198, %v2303
      %v2316 = vadd.f32 %v2199, %v2304
      %v2317 = vadd.f32 %v2200, %v2305
      %2318 = vset.pattern.permute.xlu0 67
      %2319 = vperm.xlu0 %2318, %v454
      %v2320 = vpop.permute.xlu0 %2319
      %2322 = vset.pattern.permute.xlu0 67
      %2323 = vperm.xlu0 %2322, %v455
      %v2324 = vpop.permute.xlu0 %2323
      %v2326 = vmul.f32 %v460, %v2320
      %v2327 = vmul.f32 %v461, %v2320
      %v2328 = vmul.f32 %v462, %v2320
      %v2329 = vmul.f32 %v463, %v2320
      %v2330 = vmul.f32 %v464, %v2324
      %v2331 = vmul.f32 %v465, %v2324
      %v2332 = vmul.f32 %v466, %v2324
      %v2333 = vmul.f32 %v467, %v2324
      %2342 = vrot.lane.b32.xlu0 %v2326, 80
      %v2343 = vpop.permute.xlu0 %2342
      %2344 = vrot.lane.b32.xlu0 %v2327, 80
      %v2345 = vpop.permute.xlu0 %2344
      %2346 = vrot.lane.b32.xlu0 %v2328, 80
      %v2347 = vpop.permute.xlu0 %2346
      %2348 = vrot.lane.b32.xlu0 %v2329, 80
      %v2349 = vpop.permute.xlu0 %2348
      %2350 = vrot.lane.b32.xlu0 %v2330, 80
      %v2351 = vpop.permute.xlu0 %2350
      %2352 = vrot.lane.b32.xlu0 %v2331, 80
      %v2353 = vpop.permute.xlu0 %2352
      %2354 = vrot.lane.b32.xlu0 %v2332, 80
      %v2355 = vpop.permute.xlu0 %2354
      %2356 = vrot.lane.b32.xlu0 %v2333, 80
      %v2357 = vpop.permute.xlu0 %2356
      %v2358 = vsel %vm2299, %v2343, %v2345
      %v2359 = vsel %vm2299, %v2345, %v2347
      %v2360 = vsel %vm2299, %v2347, %v2349
      %v2361 = vsel %vm2299, %v2351, %v2353
      %v2362 = vsel %vm2299, %v2353, %v2355
      %v2363 = vsel %vm2299, %v2355, %v2357
      %v2370 = vadd.f32 %v2253, %v2358
      %v2371 = vadd.f32 %v2254, %v2359
      %v2372 = vadd.f32 %v2255, %v2360
      %v2373 = vadd.f32 %v2256, %v2361
      %v2374 = vadd.f32 %v2257, %v2362
      %v2375 = vadd.f32 %v2258, %v2363
      %2376 = vset.pattern.permute.xlu0 19
      %2377 = vperm.xlu0 %2376, %v454
      %v2378 = vpop.permute.xlu0 %2377
      %2380 = vset.pattern.permute.xlu0 19
      %2381 = vperm.xlu0 %2380, %v455
      %v2382 = vpop.permute.xlu0 %2381
      %v2384 = vmul.f32 %v460, %v2378
      %v2385 = vmul.f32 %v461, %v2378
      %v2386 = vmul.f32 %v462, %v2378
      %v2387 = vmul.f32 %v463, %v2378
      %v2388 = vmul.f32 %v464, %v2382
      %v2389 = vmul.f32 %v465, %v2382
      %v2390 = vmul.f32 %v466, %v2382
      %v2391 = vmul.f32 %v467, %v2382
      %2400 = vrot.lane.b32.xlu0 %v2384, 79
      %v2401 = vpop.permute.xlu0 %2400
      %2402 = vrot.lane.b32.xlu0 %v2385, 79
      %v2403 = vpop.permute.xlu0 %2402
      %2404 = vrot.lane.b32.xlu0 %v2386, 79
      %v2405 = vpop.permute.xlu0 %2404
      %2406 = vrot.lane.b32.xlu0 %v2387, 79
      %v2407 = vpop.permute.xlu0 %2406
      %2408 = vrot.lane.b32.xlu0 %v2388, 79
      %v2409 = vpop.permute.xlu0 %2408
      %2410 = vrot.lane.b32.xlu0 %v2389, 79
      %v2411 = vpop.permute.xlu0 %2410
      %2412 = vrot.lane.b32.xlu0 %v2390, 79
      %v2413 = vpop.permute.xlu0 %2412
      %2414 = vrot.lane.b32.xlu0 %v2391, 79
      %v2415 = vpop.permute.xlu0 %2414
      %vm2416 = vcmask 646144
      %v2417 = vsel %vm2416, %v2401, %v2403
      %v2418 = vsel %vm2416, %v2403, %v2405
      %v2419 = vsel %vm2416, %v2405, %v2407
      %v2420 = vsel %vm2416, %v2409, %v2411
      %v2421 = vsel %vm2416, %v2411, %v2413
      %v2422 = vsel %vm2416, %v2413, %v2415
      %v2429 = vadd.f32 %v2312, %v2417
      %v2430 = vadd.f32 %v2313, %v2418
      %v2431 = vadd.f32 %v2314, %v2419
      %v2432 = vadd.f32 %v2315, %v2420
      %v2433 = vadd.f32 %v2316, %v2421
      %v2434 = vadd.f32 %v2317, %v2422
      %2435 = vset.pattern.permute.xlu0 68
      %2436 = vperm.xlu0 %2435, %v454
      %v2437 = vpop.permute.xlu0 %2436
      %2439 = vset.pattern.permute.xlu0 68
      %2440 = vperm.xlu0 %2439, %v455
      %v2441 = vpop.permute.xlu0 %2440
      %v2443 = vmul.f32 %v460, %v2437
      %v2444 = vmul.f32 %v461, %v2437
      %v2445 = vmul.f32 %v462, %v2437
      %v2446 = vmul.f32 %v463, %v2437
      %v2447 = vmul.f32 %v464, %v2441
      %v2448 = vmul.f32 %v465, %v2441
      %v2449 = vmul.f32 %v466, %v2441
      %v2450 = vmul.f32 %v467, %v2441
      %2459 = vrot.lane.b32.xlu0 %v2443, 79
      %v2460 = vpop.permute.xlu0 %2459
      %2461 = vrot.lane.b32.xlu0 %v2444, 79
      %v2462 = vpop.permute.xlu0 %2461
      %2463 = vrot.lane.b32.xlu0 %v2445, 79
      %v2464 = vpop.permute.xlu0 %2463
      %2465 = vrot.lane.b32.xlu0 %v2446, 79
      %v2466 = vpop.permute.xlu0 %2465
      %2467 = vrot.lane.b32.xlu0 %v2447, 79
      %v2468 = vpop.permute.xlu0 %2467
      %2469 = vrot.lane.b32.xlu0 %v2448, 79
      %v2470 = vpop.permute.xlu0 %2469
      %2471 = vrot.lane.b32.xlu0 %v2449, 79
      %v2472 = vpop.permute.xlu0 %2471
      %2473 = vrot.lane.b32.xlu0 %v2450, 79
      %v2474 = vpop.permute.xlu0 %2473
      %v2475 = vsel %vm2416, %v2460, %v2462
      %v2476 = vsel %vm2416, %v2462, %v2464
      %v2477 = vsel %vm2416, %v2464, %v2466
      %v2478 = vsel %vm2416, %v2468, %v2470
      %v2479 = vsel %vm2416, %v2470, %v2472
      %v2480 = vsel %vm2416, %v2472, %v2474
      %v2487 = vadd.f32 %v2370, %v2475
      %v2488 = vadd.f32 %v2371, %v2476
      %v2489 = vadd.f32 %v2372, %v2477
      %v2490 = vadd.f32 %v2373, %v2478
      %v2491 = vadd.f32 %v2374, %v2479
      %v2492 = vadd.f32 %v2375, %v2480
      %2493 = vset.pattern.permute.xlu0 20
      %2494 = vperm.xlu0 %2493, %v454
      %v2495 = vpop.permute.xlu0 %2494
      %2497 = vset.pattern.permute.xlu0 20
      %2498 = vperm.xlu0 %2497, %v455
      %v2499 = vpop.permute.xlu0 %2498
      %v2501 = vmul.f32 %v460, %v2495
      %v2502 = vmul.f32 %v461, %v2495
      %v2503 = vmul.f32 %v462, %v2495
      %v2504 = vmul.f32 %v463, %v2495
      %v2505 = vmul.f32 %v464, %v2499
      %v2506 = vmul.f32 %v465, %v2499
      %v2507 = vmul.f32 %v466, %v2499
      %v2508 = vmul.f32 %v467, %v2499
      %2517 = vrot.lane.b32.xlu0 %v2501, 78
      %v2518 = vpop.permute.xlu0 %2517
      %2519 = vrot.lane.b32.xlu0 %v2502, 78
      %v2520 = vpop.permute.xlu0 %2519
      %2521 = vrot.lane.b32.xlu0 %v2503, 78
      %v2522 = vpop.permute.xlu0 %2521
      %2523 = vrot.lane.b32.xlu0 %v2504, 78
      %v2524 = vpop.permute.xlu0 %2523
      %2525 = vrot.lane.b32.xlu0 %v2505, 78
      %v2526 = vpop.permute.xlu0 %2525
      %2527 = vrot.lane.b32.xlu0 %v2506, 78
      %v2528 = vpop.permute.xlu0 %2527
      %2529 = vrot.lane.b32.xlu0 %v2507, 78
      %v2530 = vpop.permute.xlu0 %2529
      %2531 = vrot.lane.b32.xlu0 %v2508, 78
      %v2532 = vpop.permute.xlu0 %2531
      %vm2533 = vcmask 637952
      %v2534 = vsel %vm2533, %v2518, %v2520
      %v2535 = vsel %vm2533, %v2520, %v2522
      %v2536 = vsel %vm2533, %v2522, %v2524
      %v2537 = vsel %vm2533, %v2526, %v2528
      %v2538 = vsel %vm2533, %v2528, %v2530
      %v2539 = vsel %vm2533, %v2530, %v2532
      %v2546 = vadd.f32 %v2429, %v2534
      %v2547 = vadd.f32 %v2430, %v2535
      %v2548 = vadd.f32 %v2431, %v2536
      %v2549 = vadd.f32 %v2432, %v2537
      %v2550 = vadd.f32 %v2433, %v2538
      %v2551 = vadd.f32 %v2434, %v2539
      %2552 = vset.pattern.permute.xlu0 69
      %2553 = vperm.xlu0 %2552, %v454
      %v2554 = vpop.permute.xlu0 %2553
      %2556 = vset.pattern.permute.xlu0 69
      %2557 = vperm.xlu0 %2556, %v455
      %v2558 = vpop.permute.xlu0 %2557
      %v2560 = vmul.f32 %v460, %v2554
      %v2561 = vmul.f32 %v461, %v2554
      %v2562 = vmul.f32 %v462, %v2554
      %v2563 = vmul.f32 %v463, %v2554
      %v2564 = vmul.f32 %v464, %v2558
      %v2565 = vmul.f32 %v465, %v2558
      %v2566 = vmul.f32 %v466, %v2558
      %v2567 = vmul.f32 %v467, %v2558
      %2576 = vrot.lane.b32.xlu0 %v2560, 78
      %v2577 = vpop.permute.xlu0 %2576
      %2578 = vrot.lane.b32.xlu0 %v2561, 78
      %v2579 = vpop.permute.xlu0 %2578
      %2580 = vrot.lane.b32.xlu0 %v2562, 78
      %v2581 = vpop.permute.xlu0 %2580
      %2582 = vrot.lane.b32.xlu0 %v2563, 78
      %v2583 = vpop.permute.xlu0 %2582
      %2584 = vrot.lane.b32.xlu0 %v2564, 78
      %v2585 = vpop.permute.xlu0 %2584
      %2586 = vrot.lane.b32.xlu0 %v2565, 78
      %v2587 = vpop.permute.xlu0 %2586
      %2588 = vrot.lane.b32.xlu0 %v2566, 78
      %v2589 = vpop.permute.xlu0 %2588
      %2590 = vrot.lane.b32.xlu0 %v2567, 78
      %v2591 = vpop.permute.xlu0 %2590
      %v2592 = vsel %vm2533, %v2577, %v2579
      %v2593 = vsel %vm2533, %v2579, %v2581
      %v2594 = vsel %vm2533, %v2581, %v2583
      %v2595 = vsel %vm2533, %v2585, %v2587
      %v2596 = vsel %vm2533, %v2587, %v2589
      %v2597 = vsel %vm2533, %v2589, %v2591
      %v2604 = vadd.f32 %v2487, %v2592
      %v2605 = vadd.f32 %v2488, %v2593
      %v2606 = vadd.f32 %v2489, %v2594
      %v2607 = vadd.f32 %v2490, %v2595
      %v2608 = vadd.f32 %v2491, %v2596
      %v2609 = vadd.f32 %v2492, %v2597
      %2610 = vset.pattern.permute.xlu0 21
      %2611 = vperm.xlu0 %2610, %v454
      %v2612 = vpop.permute.xlu0 %2611
      %2614 = vset.pattern.permute.xlu0 21
      %2615 = vperm.xlu0 %2614, %v455
      %v2616 = vpop.permute.xlu0 %2615
      %v2618 = vmul.f32 %v460, %v2612
      %v2619 = vmul.f32 %v461, %v2612
      %v2620 = vmul.f32 %v462, %v2612
      %v2621 = vmul.f32 %v463, %v2612
      %v2622 = vmul.f32 %v464, %v2616
      %v2623 = vmul.f32 %v465, %v2616
      %v2624 = vmul.f32 %v466, %v2616
      %v2625 = vmul.f32 %v467, %v2616
      %2634 = vrot.lane.b32.xlu0 %v2618, 62
      %v2635 = vpop.permute.xlu0 %2634
      %2636 = vrot.lane.b32.xlu0 %v2619, 62
      %v2637 = vpop.permute.xlu0 %2636
      %2638 = vrot.lane.b32.xlu0 %v2620, 62
      %v2639 = vpop.permute.xlu0 %2638
      %2640 = vrot.lane.b32.xlu0 %v2621, 62
      %v2641 = vpop.permute.xlu0 %2640
      %2642 = vrot.lane.b32.xlu0 %v2622, 62
      %v2643 = vpop.permute.xlu0 %2642
      %2644 = vrot.lane.b32.xlu0 %v2623, 62
      %v2645 = vpop.permute.xlu0 %2644
      %2646 = vrot.lane.b32.xlu0 %v2624, 62
      %v2647 = vpop.permute.xlu0 %2646
      %2648 = vrot.lane.b32.xlu0 %v2625, 62
      %v2649 = vpop.permute.xlu0 %2648
      %vm2650 = vcmask 506880
      %v2651 = vsel %vm2650, %v2635, %v2637
      %v2652 = vsel %vm2650, %v2637, %v2639
      %v2653 = vsel %vm2650, %v2639, %v2641
      %v2654 = vsel %vm2650, %v2643, %v2645
      %v2655 = vsel %vm2650, %v2645, %v2647
      %v2656 = vsel %vm2650, %v2647, %v2649
      %v2663 = vadd.f32 %v2546, %v2651
      %v2664 = vadd.f32 %v2547, %v2652
      %v2665 = vadd.f32 %v2548, %v2653
      %v2666 = vadd.f32 %v2549, %v2654
      %v2667 = vadd.f32 %v2550, %v2655
      %v2668 = vadd.f32 %v2551, %v2656
      %2669 = vset.pattern.permute.xlu0 70
      %2670 = vperm.xlu0 %2669, %v454
      %v2671 = vpop.permute.xlu0 %2670
      %2673 = vset.pattern.permute.xlu0 70
      %2674 = vperm.xlu0 %2673, %v455
      %v2675 = vpop.permute.xlu0 %2674
      %v2677 = vmul.f32 %v460, %v2671
      %v2678 = vmul.f32 %v461, %v2671
      %v2679 = vmul.f32 %v462, %v2671
      %v2680 = vmul.f32 %v463, %v2671
      %v2681 = vmul.f32 %v464, %v2675
      %v2682 = vmul.f32 %v465, %v2675
      %v2683 = vmul.f32 %v466, %v2675
      %v2684 = vmul.f32 %v467, %v2675
      %2693 = vrot.lane.b32.xlu0 %v2677, 62
      %v2694 = vpop.permute.xlu0 %2693
      %2695 = vrot.lane.b32.xlu0 %v2678, 62
      %v2696 = vpop.permute.xlu0 %2695
      %2697 = vrot.lane.b32.xlu0 %v2679, 62
      %v2698 = vpop.permute.xlu0 %2697
      %2699 = vrot.lane.b32.xlu0 %v2680, 62
      %v2700 = vpop.permute.xlu0 %2699
      %2701 = vrot.lane.b32.xlu0 %v2681, 62
      %v2702 = vpop.permute.xlu0 %2701
      %2703 = vrot.lane.b32.xlu0 %v2682, 62
      %v2704 = vpop.permute.xlu0 %2703
      %2705 = vrot.lane.b32.xlu0 %v2683, 62
      %v2706 = vpop.permute.xlu0 %2705
      %2707 = vrot.lane.b32.xlu0 %v2684, 62
      %v2708 = vpop.permute.xlu0 %2707
      %v2709 = vsel %vm2650, %v2694, %v2696
      %v2710 = vsel %vm2650, %v2696, %v2698
      %v2711 = vsel %vm2650, %v2698, %v2700
      %v2712 = vsel %vm2650, %v2702, %v2704
      %v2713 = vsel %vm2650, %v2704, %v2706
      %v2714 = vsel %vm2650, %v2706, %v2708
      %v2721 = vadd.f32 %v2604, %v2709
      %v2722 = vadd.f32 %v2605, %v2710
      %v2723 = vadd.f32 %v2606, %v2711
      %v2724 = vadd.f32 %v2607, %v2712
      %v2725 = vadd.f32 %v2608, %v2713
      %v2726 = vadd.f32 %v2609, %v2714
      %2727 = vset.pattern.permute.xlu0 22
      %2728 = vperm.xlu0 %2727, %v454
      %v2729 = vpop.permute.xlu0 %2728
      %2731 = vset.pattern.permute.xlu0 22
      %2732 = vperm.xlu0 %2731, %v455
      %v2733 = vpop.permute.xlu0 %2732
      %v2735 = vmul.f32 %v460, %v2729
      %v2736 = vmul.f32 %v461, %v2729
      %v2737 = vmul.f32 %v462, %v2729
      %v2738 = vmul.f32 %v463, %v2729
      %v2739 = vmul.f32 %v464, %v2733
      %v2740 = vmul.f32 %v465, %v2733
      %v2741 = vmul.f32 %v466, %v2733
      %v2742 = vmul.f32 %v467, %v2733
      %2751 = vrot.lane.b32.xlu0 %v2735, 61
      %v2752 = vpop.permute.xlu0 %2751
      %2753 = vrot.lane.b32.xlu0 %v2736, 61
      %v2754 = vpop.permute.xlu0 %2753
      %2755 = vrot.lane.b32.xlu0 %v2737, 61
      %v2756 = vpop.permute.xlu0 %2755
      %2757 = vrot.lane.b32.xlu0 %v2738, 61
      %v2758 = vpop.permute.xlu0 %2757
      %2759 = vrot.lane.b32.xlu0 %v2739, 61
      %v2760 = vpop.permute.xlu0 %2759
      %2761 = vrot.lane.b32.xlu0 %v2740, 61
      %v2762 = vpop.permute.xlu0 %2761
      %2763 = vrot.lane.b32.xlu0 %v2741, 61
      %v2764 = vpop.permute.xlu0 %2763
      %2765 = vrot.lane.b32.xlu0 %v2742, 61
      %v2766 = vpop.permute.xlu0 %2765
      %vm2767 = vcmask 498688
      %v2768 = vsel %vm2767, %v2752, %v2754
      %v2769 = vsel %vm2767, %v2754, %v2756
      %v2770 = vsel %vm2767, %v2756, %v2758
      %v2771 = vsel %vm2767, %v2760, %v2762
      %v2772 = vsel %vm2767, %v2762, %v2764
      %v2773 = vsel %vm2767, %v2764, %v2766
      %v2780 = vadd.f32 %v2663, %v2768
      %v2781 = vadd.f32 %v2664, %v2769
      %v2782 = vadd.f32 %v2665, %v2770
      %v2783 = vadd.f32 %v2666, %v2771
      %v2784 = vadd.f32 %v2667, %v2772
      %v2785 = vadd.f32 %v2668, %v2773
      %2786 = vset.pattern.permute.xlu0 71
      %2787 = vperm.xlu0 %2786, %v454
      %v2788 = vpop.permute.xlu0 %2787
      %2790 = vset.pattern.permute.xlu0 71
      %2791 = vperm.xlu0 %2790, %v455
      %v2792 = vpop.permute.xlu0 %2791
      %v2794 = vmul.f32 %v460, %v2788
      %v2795 = vmul.f32 %v461, %v2788
      %v2796 = vmul.f32 %v462, %v2788
      %v2797 = vmul.f32 %v463, %v2788
      %v2798 = vmul.f32 %v464, %v2792
      %v2799 = vmul.f32 %v465, %v2792
      %v2800 = vmul.f32 %v466, %v2792
      %v2801 = vmul.f32 %v467, %v2792
      %2810 = vrot.lane.b32.xlu0 %v2794, 61
      %v2811 = vpop.permute.xlu0 %2810
      %2812 = vrot.lane.b32.xlu0 %v2795, 61
      %v2813 = vpop.permute.xlu0 %2812
      %2814 = vrot.lane.b32.xlu0 %v2796, 61
      %v2815 = vpop.permute.xlu0 %2814
      %2816 = vrot.lane.b32.xlu0 %v2797, 61
      %v2817 = vpop.permute.xlu0 %2816
      %2818 = vrot.lane.b32.xlu0 %v2798, 61
      %v2819 = vpop.permute.xlu0 %2818
      %2820 = vrot.lane.b32.xlu0 %v2799, 61
      %v2821 = vpop.permute.xlu0 %2820
      %2822 = vrot.lane.b32.xlu0 %v2800, 61
      %v2823 = vpop.permute.xlu0 %2822
      %2824 = vrot.lane.b32.xlu0 %v2801, 61
      %v2825 = vpop.permute.xlu0 %2824
      %v2826 = vsel %vm2767, %v2811, %v2813
      %v2827 = vsel %vm2767, %v2813, %v2815
      %v2828 = vsel %vm2767, %v2815, %v2817
      %v2829 = vsel %vm2767, %v2819, %v2821
      %v2830 = vsel %vm2767, %v2821, %v2823
      %v2831 = vsel %vm2767, %v2823, %v2825
      %v2838 = vadd.f32 %v2721, %v2826
      %v2839 = vadd.f32 %v2722, %v2827
      %v2840 = vadd.f32 %v2723, %v2828
      %v2841 = vadd.f32 %v2724, %v2829
      %v2842 = vadd.f32 %v2725, %v2830
      %v2843 = vadd.f32 %v2726, %v2831
      %2844 = vset.pattern.permute.xlu0 23
      %2845 = vperm.xlu0 %2844, %v454
      %v2846 = vpop.permute.xlu0 %2845
      %2848 = vset.pattern.permute.xlu0 23
      %2849 = vperm.xlu0 %2848, %v455
      %v2850 = vpop.permute.xlu0 %2849
      %v2852 = vmul.f32 %v460, %v2846
      %v2853 = vmul.f32 %v461, %v2846
      %v2854 = vmul.f32 %v462, %v2846
      %v2855 = vmul.f32 %v463, %v2846
      %v2856 = vmul.f32 %v464, %v2850
      %v2857 = vmul.f32 %v465, %v2850
      %v2858 = vmul.f32 %v466, %v2850
      %v2859 = vmul.f32 %v467, %v2850
      %2868 = vrot.lane.b32.xlu0 %v2852, 60
      %v2869 = vpop.permute.xlu0 %2868
      %2870 = vrot.lane.b32.xlu0 %v2853, 60
      %v2871 = vpop.permute.xlu0 %2870
      %2872 = vrot.lane.b32.xlu0 %v2854, 60
      %v2873 = vpop.permute.xlu0 %2872
      %2874 = vrot.lane.b32.xlu0 %v2855, 60
      %v2875 = vpop.permute.xlu0 %2874
      %2876 = vrot.lane.b32.xlu0 %v2856, 60
      %v2877 = vpop.permute.xlu0 %2876
      %2878 = vrot.lane.b32.xlu0 %v2857, 60
      %v2879 = vpop.permute.xlu0 %2878
      %2880 = vrot.lane.b32.xlu0 %v2858, 60
      %v2881 = vpop.permute.xlu0 %2880
      %2882 = vrot.lane.b32.xlu0 %v2859, 60
      %v2883 = vpop.permute.xlu0 %2882
      %vm2884 = vcmask 490496
      %v2885 = vsel %vm2884, %v2869, %v2871
      %v2886 = vsel %vm2884, %v2871, %v2873
      %v2887 = vsel %vm2884, %v2873, %v2875
      %v2888 = vsel %vm2884, %v2877, %v2879
      %v2889 = vsel %vm2884, %v2879, %v2881
      %v2890 = vsel %vm2884, %v2881, %v2883
      %v2897 = vadd.f32 %v2780, %v2885
      %v2898 = vadd.f32 %v2781, %v2886
      %v2899 = vadd.f32 %v2782, %v2887
      %v2900 = vadd.f32 %v2783, %v2888
      %v2901 = vadd.f32 %v2784, %v2889
      %v2902 = vadd.f32 %v2785, %v2890
      %2903 = vset.pattern.permute.xlu0 72
      %2904 = vperm.xlu0 %2903, %v454
      %v2905 = vpop.permute.xlu0 %2904
      %2907 = vset.pattern.permute.xlu0 72
      %2908 = vperm.xlu0 %2907, %v455
      %v2909 = vpop.permute.xlu0 %2908
      %v2911 = vmul.f32 %v460, %v2905
      %v2912 = vmul.f32 %v461, %v2905
      %v2913 = vmul.f32 %v462, %v2905
      %v2914 = vmul.f32 %v463, %v2905
      %v2915 = vmul.f32 %v464, %v2909
      %v2916 = vmul.f32 %v465, %v2909
      %v2917 = vmul.f32 %v466, %v2909
      %v2918 = vmul.f32 %v467, %v2909
      %2927 = vrot.lane.b32.xlu0 %v2911, 60
      %v2928 = vpop.permute.xlu0 %2927
      %2929 = vrot.lane.b32.xlu0 %v2912, 60
      %v2930 = vpop.permute.xlu0 %2929
      %2931 = vrot.lane.b32.xlu0 %v2913, 60
      %v2932 = vpop.permute.xlu0 %2931
      %2933 = vrot.lane.b32.xlu0 %v2914, 60
      %v2934 = vpop.permute.xlu0 %2933
      %2935 = vrot.lane.b32.xlu0 %v2915, 60
      %v2936 = vpop.permute.xlu0 %2935
      %2937 = vrot.lane.b32.xlu0 %v2916, 60
      %v2938 = vpop.permute.xlu0 %2937
      %2939 = vrot.lane.b32.xlu0 %v2917, 60
      %v2940 = vpop.permute.xlu0 %2939
      %2941 = vrot.lane.b32.xlu0 %v2918, 60
      %v2942 = vpop.permute.xlu0 %2941
      %v2943 = vsel %vm2884, %v2928, %v2930
      %v2944 = vsel %vm2884, %v2930, %v2932
      %v2945 = vsel %vm2884, %v2932, %v2934
      %v2946 = vsel %vm2884, %v2936, %v2938
      %v2947 = vsel %vm2884, %v2938, %v2940
      %v2948 = vsel %vm2884, %v2940, %v2942
      %v2955 = vadd.f32 %v2838, %v2943
      %v2956 = vadd.f32 %v2839, %v2944
      %v2957 = vadd.f32 %v2840, %v2945
      %v2958 = vadd.f32 %v2841, %v2946
      %v2959 = vadd.f32 %v2842, %v2947
      %v2960 = vadd.f32 %v2843, %v2948
      %2961 = vset.pattern.permute.xlu0 24
      %2962 = vperm.xlu0 %2961, %v454
      %v2963 = vpop.permute.xlu0 %2962
      %2965 = vset.pattern.permute.xlu0 24
      %2966 = vperm.xlu0 %2965, %v455
      %v2967 = vpop.permute.xlu0 %2966
      %v2969 = vmul.f32 %v460, %v2963
      %v2970 = vmul.f32 %v461, %v2963
      %v2971 = vmul.f32 %v462, %v2963
      %v2972 = vmul.f32 %v463, %v2963
      %v2973 = vmul.f32 %v464, %v2967
      %v2974 = vmul.f32 %v465, %v2967
      %v2975 = vmul.f32 %v466, %v2967
      %v2976 = vmul.f32 %v467, %v2967
      %2985 = vrot.lane.b32.xlu0 %v2969, 59
      %v2986 = vpop.permute.xlu0 %2985
      %2987 = vrot.lane.b32.xlu0 %v2970, 59
      %v2988 = vpop.permute.xlu0 %2987
      %2989 = vrot.lane.b32.xlu0 %v2971, 59
      %v2990 = vpop.permute.xlu0 %2989
      %2991 = vrot.lane.b32.xlu0 %v2972, 59
      %v2992 = vpop.permute.xlu0 %2991
      %2993 = vrot.lane.b32.xlu0 %v2973, 59
      %v2994 = vpop.permute.xlu0 %2993
      %2995 = vrot.lane.b32.xlu0 %v2974, 59
      %v2996 = vpop.permute.xlu0 %2995
      %2997 = vrot.lane.b32.xlu0 %v2975, 59
      %v2998 = vpop.permute.xlu0 %2997
      %2999 = vrot.lane.b32.xlu0 %v2976, 59
      %v3000 = vpop.permute.xlu0 %2999
      %vm3001 = vcmask 482304
      %v3002 = vsel %vm3001, %v2986, %v2988
      %v3003 = vsel %vm3001, %v2988, %v2990
      %v3004 = vsel %vm3001, %v2990, %v2992
      %v3005 = vsel %vm3001, %v2994, %v2996
      %v3006 = vsel %vm3001, %v2996, %v2998
      %v3007 = vsel %vm3001, %v2998, %v3000
      %v3014 = vadd.f32 %v2897, %v3002
      %v3015 = vadd.f32 %v2898, %v3003
      %v3016 = vadd.f32 %v2899, %v3004
      %v3017 = vadd.f32 %v2900, %v3005
      %v3018 = vadd.f32 %v2901, %v3006
      %v3019 = vadd.f32 %v2902, %v3007
      %3020 = vset.pattern.permute.xlu0 73
      %3021 = vperm.xlu0 %3020, %v454
      %v3022 = vpop.permute.xlu0 %3021
      %3024 = vset.pattern.permute.xlu0 73
      %3025 = vperm.xlu0 %3024, %v455
      %v3026 = vpop.permute.xlu0 %3025
      %v3028 = vmul.f32 %v460, %v3022
      %v3029 = vmul.f32 %v461, %v3022
      %v3030 = vmul.f32 %v462, %v3022
      %v3031 = vmul.f32 %v463, %v3022
      %v3032 = vmul.f32 %v464, %v3026
      %v3033 = vmul.f32 %v465, %v3026
      %v3034 = vmul.f32 %v466, %v3026
      %v3035 = vmul.f32 %v467, %v3026
      %3044 = vrot.lane.b32.xlu0 %v3028, 59
      %v3045 = vpop.permute.xlu0 %3044
      %3046 = vrot.lane.b32.xlu0 %v3029, 59
      %v3047 = vpop.permute.xlu0 %3046
      %3048 = vrot.lane.b32.xlu0 %v3030, 59
      %v3049 = vpop.permute.xlu0 %3048
      %3050 = vrot.lane.b32.xlu0 %v3031, 59
      %v3051 = vpop.permute.xlu0 %3050
      %3052 = vrot.lane.b32.xlu0 %v3032, 59
      %v3053 = vpop.permute.xlu0 %3052
      %3054 = vrot.lane.b32.xlu0 %v3033, 59
      %v3055 = vpop.permute.xlu0 %3054
      %3056 = vrot.lane.b32.xlu0 %v3034, 59
      %v3057 = vpop.permute.xlu0 %3056
      %3058 = vrot.lane.b32.xlu0 %v3035, 59
      %v3059 = vpop.permute.xlu0 %3058
      %v3060 = vsel %vm3001, %v3045, %v3047
      %v3061 = vsel %vm3001, %v3047, %v3049
      %v3062 = vsel %vm3001, %v3049, %v3051
      %v3063 = vsel %vm3001, %v3053, %v3055
      %v3064 = vsel %vm3001, %v3055, %v3057
      %v3065 = vsel %vm3001, %v3057, %v3059
      %v3072 = vadd.f32 %v2955, %v3060
      %v3073 = vadd.f32 %v2956, %v3061
      %v3074 = vadd.f32 %v2957, %v3062
      %v3075 = vadd.f32 %v2958, %v3063
      %v3076 = vadd.f32 %v2959, %v3064
      %v3077 = vadd.f32 %v2960, %v3065
      %3078 = vset.pattern.permute.xlu0 25
      %3079 = vperm.xlu0 %3078, %v454
      %v3080 = vpop.permute.xlu0 %3079
      %3082 = vset.pattern.permute.xlu0 25
      %3083 = vperm.xlu0 %3082, %v455
      %v3084 = vpop.permute.xlu0 %3083
      %v3086 = vmul.f32 %v460, %v3080
      %v3087 = vmul.f32 %v461, %v3080
      %v3088 = vmul.f32 %v462, %v3080
      %v3089 = vmul.f32 %v463, %v3080
      %v3090 = vmul.f32 %v464, %v3084
      %v3091 = vmul.f32 %v465, %v3084
      %v3092 = vmul.f32 %v466, %v3084
      %v3093 = vmul.f32 %v467, %v3084
      %3102 = vrot.lane.b32.xlu0 %v3086, 58
      %v3103 = vpop.permute.xlu0 %3102
      %3104 = vrot.lane.b32.xlu0 %v3087, 58
      %v3105 = vpop.permute.xlu0 %3104
      %3106 = vrot.lane.b32.xlu0 %v3088, 58
      %v3107 = vpop.permute.xlu0 %3106
      %3108 = vrot.lane.b32.xlu0 %v3089, 58
      %v3109 = vpop.permute.xlu0 %3108
      %3110 = vrot.lane.b32.xlu0 %v3090, 58
      %v3111 = vpop.permute.xlu0 %3110
      %3112 = vrot.lane.b32.xlu0 %v3091, 58
      %v3113 = vpop.permute.xlu0 %3112
      %3114 = vrot.lane.b32.xlu0 %v3092, 58
      %v3115 = vpop.permute.xlu0 %3114
      %3116 = vrot.lane.b32.xlu0 %v3093, 58
      %v3117 = vpop.permute.xlu0 %3116
      %vm3118 = vcmask 474112
      %v3119 = vsel %vm3118, %v3103, %v3105
      %v3120 = vsel %vm3118, %v3105, %v3107
      %v3121 = vsel %vm3118, %v3107, %v3109
      %v3122 = vsel %vm3118, %v3111, %v3113
      %v3123 = vsel %vm3118, %v3113, %v3115
      %v3124 = vsel %vm3118, %v3115, %v3117
      %v3131 = vadd.f32 %v3014, %v3119
      %v3132 = vadd.f32 %v3015, %v3120
      %v3133 = vadd.f32 %v3016, %v3121
      %v3134 = vadd.f32 %v3017, %v3122
      %v3135 = vadd.f32 %v3018, %v3123
      %v3136 = vadd.f32 %v3019, %v3124
      %3137 = vset.pattern.permute.xlu0 74
      %3138 = vperm.xlu0 %3137, %v454
      %v3139 = vpop.permute.xlu0 %3138
      %3141 = vset.pattern.permute.xlu0 74
      %3142 = vperm.xlu0 %3141, %v455
      %v3143 = vpop.permute.xlu0 %3142
      %v3145 = vmul.f32 %v460, %v3139
      %v3146 = vmul.f32 %v461, %v3139
      %v3147 = vmul.f32 %v462, %v3139
      %v3148 = vmul.f32 %v463, %v3139
      %v3149 = vmul.f32 %v464, %v3143
      %v3150 = vmul.f32 %v465, %v3143
      %v3151 = vmul.f32 %v466, %v3143
      %v3152 = vmul.f32 %v467, %v3143
      %3161 = vrot.lane.b32.xlu0 %v3145, 58
      %v3162 = vpop.permute.xlu0 %3161
      %3163 = vrot.lane.b32.xlu0 %v3146, 58
      %v3164 = vpop.permute.xlu0 %3163
      %3165 = vrot.lane.b32.xlu0 %v3147, 58
      %v3166 = vpop.permute.xlu0 %3165
      %3167 = vrot.lane.b32.xlu0 %v3148, 58
      %v3168 = vpop.permute.xlu0 %3167
      %3169 = vrot.lane.b32.xlu0 %v3149, 58
      %v3170 = vpop.permute.xlu0 %3169
      %3171 = vrot.lane.b32.xlu0 %v3150, 58
      %v3172 = vpop.permute.xlu0 %3171
      %3173 = vrot.lane.b32.xlu0 %v3151, 58
      %v3174 = vpop.permute.xlu0 %3173
      %3175 = vrot.lane.b32.xlu0 %v3152, 58
      %v3176 = vpop.permute.xlu0 %3175
      %v3177 = vsel %vm3118, %v3162, %v3164
      %v3178 = vsel %vm3118, %v3164, %v3166
      %v3179 = vsel %vm3118, %v3166, %v3168
      %v3180 = vsel %vm3118, %v3170, %v3172
      %v3181 = vsel %vm3118, %v3172, %v3174
      %v3182 = vsel %vm3118, %v3174, %v3176
      %v3189 = vadd.f32 %v3072, %v3177
      %v3190 = vadd.f32 %v3073, %v3178
      %v3191 = vadd.f32 %v3074, %v3179
      %v3192 = vadd.f32 %v3075, %v3180
      %v3193 = vadd.f32 %v3076, %v3181
      %v3194 = vadd.f32 %v3077, %v3182
      %3195 = vset.pattern.permute.xlu0 26
      %3196 = vperm.xlu0 %3195, %v454
      %v3197 = vpop.permute.xlu0 %3196
      %3199 = vset.pattern.permute.xlu0 26
      %3200 = vperm.xlu0 %3199, %v455
      %v3201 = vpop.permute.xlu0 %3200
      %v3203 = vmul.f32 %v460, %v3197
      %v3204 = vmul.f32 %v461, %v3197
      %v3205 = vmul.f32 %v462, %v3197
      %v3206 = vmul.f32 %v463, %v3197
      %v3207 = vmul.f32 %v464, %v3201
      %v3208 = vmul.f32 %v465, %v3201
      %v3209 = vmul.f32 %v466, %v3201
      %v3210 = vmul.f32 %v467, %v3201
      %3219 = vrot.lane.b32.xlu0 %v3203, 57
      %v3220 = vpop.permute.xlu0 %3219
      %3221 = vrot.lane.b32.xlu0 %v3204, 57
      %v3222 = vpop.permute.xlu0 %3221
      %3223 = vrot.lane.b32.xlu0 %v3205, 57
      %v3224 = vpop.permute.xlu0 %3223
      %3225 = vrot.lane.b32.xlu0 %v3206, 57
      %v3226 = vpop.permute.xlu0 %3225
      %3227 = vrot.lane.b32.xlu0 %v3207, 57
      %v3228 = vpop.permute.xlu0 %3227
      %3229 = vrot.lane.b32.xlu0 %v3208, 57
      %v3230 = vpop.permute.xlu0 %3229
      %3231 = vrot.lane.b32.xlu0 %v3209, 57
      %v3232 = vpop.permute.xlu0 %3231
      %3233 = vrot.lane.b32.xlu0 %v3210, 57
      %v3234 = vpop.permute.xlu0 %3233
      %vm3235 = vcmask 465920
      %v3236 = vsel %vm3235, %v3220, %v3222
      %v3237 = vsel %vm3235, %v3222, %v3224
      %v3238 = vsel %vm3235, %v3224, %v3226
      %v3239 = vsel %vm3235, %v3228, %v3230
      %v3240 = vsel %vm3235, %v3230, %v3232
      %v3241 = vsel %vm3235, %v3232, %v3234
      %v3248 = vadd.f32 %v3131, %v3236
      %v3249 = vadd.f32 %v3132, %v3237
      %v3250 = vadd.f32 %v3133, %v3238
      %v3251 = vadd.f32 %v3134, %v3239
      %v3252 = vadd.f32 %v3135, %v3240
      %v3253 = vadd.f32 %v3136, %v3241
      %3254 = vset.pattern.permute.xlu0 75
      %3255 = vperm.xlu0 %3254, %v454
      %v3256 = vpop.permute.xlu0 %3255
      %3258 = vset.pattern.permute.xlu0 75
      %3259 = vperm.xlu0 %3258, %v455
      %v3260 = vpop.permute.xlu0 %3259
      %v3262 = vmul.f32 %v460, %v3256
      %v3263 = vmul.f32 %v461, %v3256
      %v3264 = vmul.f32 %v462, %v3256
      %v3265 = vmul.f32 %v463, %v3256
      %v3266 = vmul.f32 %v464, %v3260
      %v3267 = vmul.f32 %v465, %v3260
      %v3268 = vmul.f32 %v466, %v3260
      %v3269 = vmul.f32 %v467, %v3260
      %3278 = vrot.lane.b32.xlu0 %v3262, 57
      %v3279 = vpop.permute.xlu0 %3278
      %3280 = vrot.lane.b32.xlu0 %v3263, 57
      %v3281 = vpop.permute.xlu0 %3280
      %3282 = vrot.lane.b32.xlu0 %v3264, 57
      %v3283 = vpop.permute.xlu0 %3282
      %3284 = vrot.lane.b32.xlu0 %v3265, 57
      %v3285 = vpop.permute.xlu0 %3284
      %3286 = vrot.lane.b32.xlu0 %v3266, 57
      %v3287 = vpop.permute.xlu0 %3286
      %3288 = vrot.lane.b32.xlu0 %v3267, 57
      %v3289 = vpop.permute.xlu0 %3288
      %3290 = vrot.lane.b32.xlu0 %v3268, 57
      %v3291 = vpop.permute.xlu0 %3290
      %3292 = vrot.lane.b32.xlu0 %v3269, 57
      %v3293 = vpop.permute.xlu0 %3292
      %v3294 = vsel %vm3235, %v3279, %v3281
      %v3295 = vsel %vm3235, %v3281, %v3283
      %v3296 = vsel %vm3235, %v3283, %v3285
      %v3297 = vsel %vm3235, %v3287, %v3289
      %v3298 = vsel %vm3235, %v3289, %v3291
      %v3299 = vsel %vm3235, %v3291, %v3293
      %v3306 = vadd.f32 %v3189, %v3294
      %v3307 = vadd.f32 %v3190, %v3295
      %v3308 = vadd.f32 %v3191, %v3296
      %v3309 = vadd.f32 %v3192, %v3297
      %v3310 = vadd.f32 %v3193, %v3298
      %v3311 = vadd.f32 %v3194, %v3299
      %3312 = vset.pattern.permute.xlu0 27
      %3313 = vperm.xlu0 %3312, %v454
      %v3314 = vpop.permute.xlu0 %3313
      %3316 = vset.pattern.permute.xlu0 27
      %3317 = vperm.xlu0 %3316, %v455
      %v3318 = vpop.permute.xlu0 %3317
      %v3320 = vmul.f32 %v460, %v3314
      %v3321 = vmul.f32 %v461, %v3314
      %v3322 = vmul.f32 %v462, %v3314
      %v3323 = vmul.f32 %v463, %v3314
      %v3324 = vmul.f32 %v464, %v3318
      %v3325 = vmul.f32 %v465, %v3318
      %v3326 = vmul.f32 %v466, %v3318
      %v3327 = vmul.f32 %v467, %v3318
      %3336 = vrot.lane.b32.xlu0 %v3320, 56
      %v3337 = vpop.permute.xlu0 %3336
      %3338 = vrot.lane.b32.xlu0 %v3321, 56
      %v3339 = vpop.permute.xlu0 %3338
      %3340 = vrot.lane.b32.xlu0 %v3322, 56
      %v3341 = vpop.permute.xlu0 %3340
      %3342 = vrot.lane.b32.xlu0 %v3323, 56
      %v3343 = vpop.permute.xlu0 %3342
      %3344 = vrot.lane.b32.xlu0 %v3324, 56
      %v3345 = vpop.permute.xlu0 %3344
      %3346 = vrot.lane.b32.xlu0 %v3325, 56
      %v3347 = vpop.permute.xlu0 %3346
      %3348 = vrot.lane.b32.xlu0 %v3326, 56
      %v3349 = vpop.permute.xlu0 %3348
      %3350 = vrot.lane.b32.xlu0 %v3327, 56
      %v3351 = vpop.permute.xlu0 %3350
      %vm3352 = vcmask 457728
      %v3353 = vsel %vm3352, %v3337, %v3339
      %v3354 = vsel %vm3352, %v3339, %v3341
      %v3355 = vsel %vm3352, %v3341, %v3343
      %v3356 = vsel %vm3352, %v3345, %v3347
      %v3357 = vsel %vm3352, %v3347, %v3349
      %v3358 = vsel %vm3352, %v3349, %v3351
      %v3365 = vadd.f32 %v3248, %v3353
      %v3366 = vadd.f32 %v3249, %v3354
      %v3367 = vadd.f32 %v3250, %v3355
      %v3368 = vadd.f32 %v3251, %v3356
      %v3369 = vadd.f32 %v3252, %v3357
      %v3370 = vadd.f32 %v3253, %v3358
      %3371 = vset.pattern.permute.xlu0 76
      %3372 = vperm.xlu0 %3371, %v454
      %v3373 = vpop.permute.xlu0 %3372
      %3375 = vset.pattern.permute.xlu0 76
      %3376 = vperm.xlu0 %3375, %v455
      %v3377 = vpop.permute.xlu0 %3376
      %v3379 = vmul.f32 %v460, %v3373
      %v3380 = vmul.f32 %v461, %v3373
      %v3381 = vmul.f32 %v462, %v3373
      %v3382 = vmul.f32 %v463, %v3373
      %v3383 = vmul.f32 %v464, %v3377
      %v3384 = vmul.f32 %v465, %v3377
      %v3385 = vmul.f32 %v466, %v3377
      %v3386 = vmul.f32 %v467, %v3377
      %3395 = vrot.lane.b32.xlu0 %v3379, 56
      %v3396 = vpop.permute.xlu0 %3395
      %3397 = vrot.lane.b32.xlu0 %v3380, 56
      %v3398 = vpop.permute.xlu0 %3397
      %3399 = vrot.lane.b32.xlu0 %v3381, 56
      %v3400 = vpop.permute.xlu0 %3399
      %3401 = vrot.lane.b32.xlu0 %v3382, 56
      %v3402 = vpop.permute.xlu0 %3401
      %3403 = vrot.lane.b32.xlu0 %v3383, 56
      %v3404 = vpop.permute.xlu0 %3403
      %3405 = vrot.lane.b32.xlu0 %v3384, 56
      %v3406 = vpop.permute.xlu0 %3405
      %3407 = vrot.lane.b32.xlu0 %v3385, 56
      %v3408 = vpop.permute.xlu0 %3407
      %3409 = vrot.lane.b32.xlu0 %v3386, 56
      %v3410 = vpop.permute.xlu0 %3409
      %v3411 = vsel %vm3352, %v3396, %v3398
      %v3412 = vsel %vm3352, %v3398, %v3400
      %v3413 = vsel %vm3352, %v3400, %v3402
      %v3414 = vsel %vm3352, %v3404, %v3406
      %v3415 = vsel %vm3352, %v3406, %v3408
      %v3416 = vsel %vm3352, %v3408, %v3410
      %v3423 = vadd.f32 %v3306, %v3411
      %v3424 = vadd.f32 %v3307, %v3412
      %v3425 = vadd.f32 %v3308, %v3413
      %v3426 = vadd.f32 %v3309, %v3414
      %v3427 = vadd.f32 %v3310, %v3415
      %v3428 = vadd.f32 %v3311, %v3416
      %3429 = vset.pattern.permute.xlu0 28
      %3430 = vperm.xlu0 %3429, %v454
      %v3431 = vpop.permute.xlu0 %3430
      %3433 = vset.pattern.permute.xlu0 28
      %3434 = vperm.xlu0 %3433, %v455
      %v3435 = vpop.permute.xlu0 %3434
      %v3437 = vmul.f32 %v460, %v3431
      %v3438 = vmul.f32 %v461, %v3431
      %v3439 = vmul.f32 %v462, %v3431
      %v3440 = vmul.f32 %v463, %v3431
      %v3441 = vmul.f32 %v464, %v3435
      %v3442 = vmul.f32 %v465, %v3435
      %v3443 = vmul.f32 %v466, %v3435
      %v3444 = vmul.f32 %v467, %v3435
      %3453 = vrot.lane.b32.xlu0 %v3437, 40
      %v3454 = vpop.permute.xlu0 %3453
      %3455 = vrot.lane.b32.xlu0 %v3438, 40
      %v3456 = vpop.permute.xlu0 %3455
      %3457 = vrot.lane.b32.xlu0 %v3439, 40
      %v3458 = vpop.permute.xlu0 %3457
      %3459 = vrot.lane.b32.xlu0 %v3440, 40
      %v3460 = vpop.permute.xlu0 %3459
      %3461 = vrot.lane.b32.xlu0 %v3441, 40
      %v3462 = vpop.permute.xlu0 %3461
      %3463 = vrot.lane.b32.xlu0 %v3442, 40
      %v3464 = vpop.permute.xlu0 %3463
      %3465 = vrot.lane.b32.xlu0 %v3443, 40
      %v3466 = vpop.permute.xlu0 %3465
      %3467 = vrot.lane.b32.xlu0 %v3444, 40
      %v3468 = vpop.permute.xlu0 %3467
      %vm3469 = vcmask 326656
      %v3470 = vsel %vm3469, %v3454, %v3456
      %v3471 = vsel %vm3469, %v3456, %v3458
      %v3472 = vsel %vm3469, %v3458, %v3460
      %v3473 = vsel %vm3469, %v3462, %v3464
      %v3474 = vsel %vm3469, %v3464, %v3466
      %v3475 = vsel %vm3469, %v3466, %v3468
      %v3482 = vadd.f32 %v3365, %v3470
      %v3483 = vadd.f32 %v3366, %v3471
      %v3484 = vadd.f32 %v3367, %v3472
      %v3485 = vadd.f32 %v3368, %v3473
      %v3486 = vadd.f32 %v3369, %v3474
      %v3487 = vadd.f32 %v3370, %v3475
      %3488 = vset.pattern.permute.xlu0 77
      %3489 = vperm.xlu0 %3488, %v454
      %v3490 = vpop.permute.xlu0 %3489
      %3492 = vset.pattern.permute.xlu0 77
      %3493 = vperm.xlu0 %3492, %v455
      %v3494 = vpop.permute.xlu0 %3493
      %v3496 = vmul.f32 %v460, %v3490
      %v3497 = vmul.f32 %v461, %v3490
      %v3498 = vmul.f32 %v462, %v3490
      %v3499 = vmul.f32 %v463, %v3490
      %v3500 = vmul.f32 %v464, %v3494
      %v3501 = vmul.f32 %v465, %v3494
      %v3502 = vmul.f32 %v466, %v3494
      %v3503 = vmul.f32 %v467, %v3494
      %3512 = vrot.lane.b32.xlu0 %v3496, 40
      %v3513 = vpop.permute.xlu0 %3512
      %3514 = vrot.lane.b32.xlu0 %v3497, 40
      %v3515 = vpop.permute.xlu0 %3514
      %3516 = vrot.lane.b32.xlu0 %v3498, 40
      %v3517 = vpop.permute.xlu0 %3516
      %3518 = vrot.lane.b32.xlu0 %v3499, 40
      %v3519 = vpop.permute.xlu0 %3518
      %3520 = vrot.lane.b32.xlu0 %v3500, 40
      %v3521 = vpop.permute.xlu0 %3520
      %3522 = vrot.lane.b32.xlu0 %v3501, 40
      %v3523 = vpop.permute.xlu0 %3522
      %3524 = vrot.lane.b32.xlu0 %v3502, 40
      %v3525 = vpop.permute.xlu0 %3524
      %3526 = vrot.lane.b32.xlu0 %v3503, 40
      %v3527 = vpop.permute.xlu0 %3526
      %v3528 = vsel %vm3469, %v3513, %v3515
      %v3529 = vsel %vm3469, %v3515, %v3517
      %v3530 = vsel %vm3469, %v3517, %v3519
      %v3531 = vsel %vm3469, %v3521, %v3523
      %v3532 = vsel %vm3469, %v3523, %v3525
      %v3533 = vsel %vm3469, %v3525, %v3527
      %v3540 = vadd.f32 %v3423, %v3528
      %v3541 = vadd.f32 %v3424, %v3529
      %v3542 = vadd.f32 %v3425, %v3530
      %v3543 = vadd.f32 %v3426, %v3531
      %v3544 = vadd.f32 %v3427, %v3532
      %v3545 = vadd.f32 %v3428, %v3533
      %3546 = vset.pattern.permute.xlu0 29
      %3547 = vperm.xlu0 %3546, %v454
      %v3548 = vpop.permute.xlu0 %3547
      %3550 = vset.pattern.permute.xlu0 29
      %3551 = vperm.xlu0 %3550, %v455
      %v3552 = vpop.permute.xlu0 %3551
      %v3554 = vmul.f32 %v460, %v3548
      %v3555 = vmul.f32 %v461, %v3548
      %v3556 = vmul.f32 %v462, %v3548
      %v3557 = vmul.f32 %v463, %v3548
      %v3558 = vmul.f32 %v464, %v3552
      %v3559 = vmul.f32 %v465, %v3552
      %v3560 = vmul.f32 %v466, %v3552
      %v3561 = vmul.f32 %v467, %v3552
      %3570 = vrot.lane.b32.xlu0 %v3554, 39
      %v3571 = vpop.permute.xlu0 %3570
      %3572 = vrot.lane.b32.xlu0 %v3555, 39
      %v3573 = vpop.permute.xlu0 %3572
      %3574 = vrot.lane.b32.xlu0 %v3556, 39
      %v3575 = vpop.permute.xlu0 %3574
      %3576 = vrot.lane.b32.xlu0 %v3557, 39
      %v3577 = vpop.permute.xlu0 %3576
      %3578 = vrot.lane.b32.xlu0 %v3558, 39
      %v3579 = vpop.permute.xlu0 %3578
      %3580 = vrot.lane.b32.xlu0 %v3559, 39
      %v3581 = vpop.permute.xlu0 %3580
      %3582 = vrot.lane.b32.xlu0 %v3560, 39
      %v3583 = vpop.permute.xlu0 %3582
      %3584 = vrot.lane.b32.xlu0 %v3561, 39
      %v3585 = vpop.permute.xlu0 %3584
      %vm3586 = vcmask 318464
      %v3587 = vsel %vm3586, %v3571, %v3573
      %v3588 = vsel %vm3586, %v3573, %v3575
      %v3589 = vsel %vm3586, %v3575, %v3577
      %v3590 = vsel %vm3586, %v3579, %v3581
      %v3591 = vsel %vm3586, %v3581, %v3583
      %v3592 = vsel %vm3586, %v3583, %v3585
      %v3599 = vadd.f32 %v3482, %v3587
      %v3600 = vadd.f32 %v3483, %v3588
      %v3601 = vadd.f32 %v3484, %v3589
      %v3602 = vadd.f32 %v3485, %v3590
      %v3603 = vadd.f32 %v3486, %v3591
      %v3604 = vadd.f32 %v3487, %v3592
      %3605 = vset.pattern.permute.xlu0 78
      %3606 = vperm.xlu0 %3605, %v454
      %v3607 = vpop.permute.xlu0 %3606
      %3609 = vset.pattern.permute.xlu0 78
      %3610 = vperm.xlu0 %3609, %v455
      %v3611 = vpop.permute.xlu0 %3610
      %v3613 = vmul.f32 %v460, %v3607
      %v3614 = vmul.f32 %v461, %v3607
      %v3615 = vmul.f32 %v462, %v3607
      %v3616 = vmul.f32 %v463, %v3607
      %v3617 = vmul.f32 %v464, %v3611
      %v3618 = vmul.f32 %v465, %v3611
      %v3619 = vmul.f32 %v466, %v3611
      %v3620 = vmul.f32 %v467, %v3611
      %3629 = vrot.lane.b32.xlu0 %v3613, 39
      %v3630 = vpop.permute.xlu0 %3629
      %3631 = vrot.lane.b32.xlu0 %v3614, 39
      %v3632 = vpop.permute.xlu0 %3631
      %3633 = vrot.lane.b32.xlu0 %v3615, 39
      %v3634 = vpop.permute.xlu0 %3633
      %3635 = vrot.lane.b32.xlu0 %v3616, 39
      %v3636 = vpop.permute.xlu0 %3635
      %3637 = vrot.lane.b32.xlu0 %v3617, 39
      %v3638 = vpop.permute.xlu0 %3637
      %3639 = vrot.lane.b32.xlu0 %v3618, 39
      %v3640 = vpop.permute.xlu0 %3639
      %3641 = vrot.lane.b32.xlu0 %v3619, 39
      %v3642 = vpop.permute.xlu0 %3641
      %3643 = vrot.lane.b32.xlu0 %v3620, 39
      %v3644 = vpop.permute.xlu0 %3643
      %v3645 = vsel %vm3586, %v3630, %v3632
      %v3646 = vsel %vm3586, %v3632, %v3634
      %v3647 = vsel %vm3586, %v3634, %v3636
      %v3648 = vsel %vm3586, %v3638, %v3640
      %v3649 = vsel %vm3586, %v3640, %v3642
      %v3650 = vsel %vm3586, %v3642, %v3644
      %v3657 = vadd.f32 %v3540, %v3645
      %v3658 = vadd.f32 %v3541, %v3646
      %v3659 = vadd.f32 %v3542, %v3647
      %v3660 = vadd.f32 %v3543, %v3648
      %v3661 = vadd.f32 %v3544, %v3649
      %v3662 = vadd.f32 %v3545, %v3650
      %3663 = vset.pattern.permute.xlu0 30
      %3664 = vperm.xlu0 %3663, %v454
      %v3665 = vpop.permute.xlu0 %3664
      %3667 = vset.pattern.permute.xlu0 30
      %3668 = vperm.xlu0 %3667, %v455
      %v3669 = vpop.permute.xlu0 %3668
      %v3671 = vmul.f32 %v460, %v3665
      %v3672 = vmul.f32 %v461, %v3665
      %v3673 = vmul.f32 %v462, %v3665
      %v3674 = vmul.f32 %v463, %v3665
      %v3675 = vmul.f32 %v464, %v3669
      %v3676 = vmul.f32 %v465, %v3669
      %v3677 = vmul.f32 %v466, %v3669
      %v3678 = vmul.f32 %v467, %v3669
      %3687 = vrot.lane.b32.xlu0 %v3671, 38
      %v3688 = vpop.permute.xlu0 %3687
      %3689 = vrot.lane.b32.xlu0 %v3672, 38
      %v3690 = vpop.permute.xlu0 %3689
      %3691 = vrot.lane.b32.xlu0 %v3673, 38
      %v3692 = vpop.permute.xlu0 %3691
      %3693 = vrot.lane.b32.xlu0 %v3674, 38
      %v3694 = vpop.permute.xlu0 %3693
      %3695 = vrot.lane.b32.xlu0 %v3675, 38
      %v3696 = vpop.permute.xlu0 %3695
      %3697 = vrot.lane.b32.xlu0 %v3676, 38
      %v3698 = vpop.permute.xlu0 %3697
      %3699 = vrot.lane.b32.xlu0 %v3677, 38
      %v3700 = vpop.permute.xlu0 %3699
      %3701 = vrot.lane.b32.xlu0 %v3678, 38
      %v3702 = vpop.permute.xlu0 %3701
      %vm3703 = vcmask 310272
      %v3704 = vsel %vm3703, %v3688, %v3690
      %v3705 = vsel %vm3703, %v3690, %v3692
      %v3706 = vsel %vm3703, %v3692, %v3694
      %v3707 = vsel %vm3703, %v3696, %v3698
      %v3708 = vsel %vm3703, %v3698, %v3700
      %v3709 = vsel %vm3703, %v3700, %v3702
      %v3716 = vadd.f32 %v3599, %v3704
      %v3717 = vadd.f32 %v3600, %v3705
      %v3718 = vadd.f32 %v3601, %v3706
      %v3719 = vadd.f32 %v3602, %v3707
      %v3720 = vadd.f32 %v3603, %v3708
      %v3721 = vadd.f32 %v3604, %v3709
      %3722 = vset.pattern.permute.xlu0 79
      %3723 = vperm.xlu0 %3722, %v454
      %v3724 = vpop.permute.xlu0 %3723
      %3726 = vset.pattern.permute.xlu0 79
      %3727 = vperm.xlu0 %3726, %v455
      %v3728 = vpop.permute.xlu0 %3727
      %v3730 = vmul.f32 %v460, %v3724
      %v3731 = vmul.f32 %v461, %v3724
      %v3732 = vmul.f32 %v462, %v3724
      %v3733 = vmul.f32 %v463, %v3724
      %v3734 = vmul.f32 %v464, %v3728
      %v3735 = vmul.f32 %v465, %v3728
      %v3736 = vmul.f32 %v466, %v3728
      %v3737 = vmul.f32 %v467, %v3728
      %3746 = vrot.lane.b32.xlu0 %v3730, 38
      %v3747 = vpop.permute.xlu0 %3746
      %3748 = vrot.lane.b32.xlu0 %v3731, 38
      %v3749 = vpop.permute.xlu0 %3748
      %3750 = vrot.lane.b32.xlu0 %v3732, 38
      %v3751 = vpop.permute.xlu0 %3750
      %3752 = vrot.lane.b32.xlu0 %v3733, 38
      %v3753 = vpop.permute.xlu0 %3752
      %3754 = vrot.lane.b32.xlu0 %v3734, 38
      %v3755 = vpop.permute.xlu0 %3754
      %3756 = vrot.lane.b32.xlu0 %v3735, 38
      %v3757 = vpop.permute.xlu0 %3756
      %3758 = vrot.lane.b32.xlu0 %v3736, 38
      %v3759 = vpop.permute.xlu0 %3758
      %3760 = vrot.lane.b32.xlu0 %v3737, 38
      %v3761 = vpop.permute.xlu0 %3760
      %v3762 = vsel %vm3703, %v3747, %v3749
      %v3763 = vsel %vm3703, %v3749, %v3751
      %v3764 = vsel %vm3703, %v3751, %v3753
      %v3765 = vsel %vm3703, %v3755, %v3757
      %v3766 = vsel %vm3703, %v3757, %v3759
      %v3767 = vsel %vm3703, %v3759, %v3761
      %v3774 = vadd.f32 %v3657, %v3762
      %v3775 = vadd.f32 %v3658, %v3763
      %v3776 = vadd.f32 %v3659, %v3764
      %v3777 = vadd.f32 %v3660, %v3765
      %v3778 = vadd.f32 %v3661, %v3766
      %v3779 = vadd.f32 %v3662, %v3767
      %3780 = vset.pattern.permute.xlu0 31
      %3781 = vperm.xlu0 %3780, %v454
      %v3782 = vpop.permute.xlu0 %3781
      %3784 = vset.pattern.permute.xlu0 31
      %3785 = vperm.xlu0 %3784, %v455
      %v3786 = vpop.permute.xlu0 %3785
      %v3788 = vmul.f32 %v460, %v3782
      %v3789 = vmul.f32 %v461, %v3782
      %v3790 = vmul.f32 %v462, %v3782
      %v3791 = vmul.f32 %v463, %v3782
      %v3792 = vmul.f32 %v464, %v3786
      %v3793 = vmul.f32 %v465, %v3786
      %v3794 = vmul.f32 %v466, %v3786
      %v3795 = vmul.f32 %v467, %v3786
      %3804 = vrot.lane.b32.xlu0 %v3788, 37
      %v3805 = vpop.permute.xlu0 %3804
      %3806 = vrot.lane.b32.xlu0 %v3789, 37
      %v3807 = vpop.permute.xlu0 %3806
      %3808 = vrot.lane.b32.xlu0 %v3790, 37
      %v3809 = vpop.permute.xlu0 %3808
      %3810 = vrot.lane.b32.xlu0 %v3791, 37
      %v3811 = vpop.permute.xlu0 %3810
      %3812 = vrot.lane.b32.xlu0 %v3792, 37
      %v3813 = vpop.permute.xlu0 %3812
      %3814 = vrot.lane.b32.xlu0 %v3793, 37
      %v3815 = vpop.permute.xlu0 %3814
      %3816 = vrot.lane.b32.xlu0 %v3794, 37
      %v3817 = vpop.permute.xlu0 %3816
      %3818 = vrot.lane.b32.xlu0 %v3795, 37
      %v3819 = vpop.permute.xlu0 %3818
      %vm3820 = vcmask 302080
      %v3821 = vsel %vm3820, %v3805, %v3807
      %v3822 = vsel %vm3820, %v3807, %v3809
      %v3823 = vsel %vm3820, %v3809, %v3811
      %v3824 = vsel %vm3820, %v3813, %v3815
      %v3825 = vsel %vm3820, %v3815, %v3817
      %v3826 = vsel %vm3820, %v3817, %v3819
      %v3833 = vadd.f32 %v3716, %v3821
      %v3834 = vadd.f32 %v3717, %v3822
      %v3835 = vadd.f32 %v3718, %v3823
      %v3836 = vadd.f32 %v3719, %v3824
      %v3837 = vadd.f32 %v3720, %v3825
      %v3838 = vadd.f32 %v3721, %v3826
      %3839 = vset.pattern.permute.xlu0 80
      %3840 = vperm.xlu0 %3839, %v454
      %v3841 = vpop.permute.xlu0 %3840
      %3843 = vset.pattern.permute.xlu0 80
      %3844 = vperm.xlu0 %3843, %v455
      %v3845 = vpop.permute.xlu0 %3844
      %v3847 = vmul.f32 %v460, %v3841
      %v3848 = vmul.f32 %v461, %v3841
      %v3849 = vmul.f32 %v462, %v3841
      %v3850 = vmul.f32 %v463, %v3841
      %v3851 = vmul.f32 %v464, %v3845
      %v3852 = vmul.f32 %v465, %v3845
      %v3853 = vmul.f32 %v466, %v3845
      %v3854 = vmul.f32 %v467, %v3845
      %3863 = vrot.lane.b32.xlu0 %v3847, 37
      %v3864 = vpop.permute.xlu0 %3863
      %3865 = vrot.lane.b32.xlu0 %v3848, 37
      %v3866 = vpop.permute.xlu0 %3865
      %3867 = vrot.lane.b32.xlu0 %v3849, 37
      %v3868 = vpop.permute.xlu0 %3867
      %3869 = vrot.lane.b32.xlu0 %v3850, 37
      %v3870 = vpop.permute.xlu0 %3869
      %3871 = vrot.lane.b32.xlu0 %v3851, 37
      %v3872 = vpop.permute.xlu0 %3871
      %3873 = vrot.lane.b32.xlu0 %v3852, 37
      %v3874 = vpop.permute.xlu0 %3873
      %3875 = vrot.lane.b32.xlu0 %v3853, 37
      %v3876 = vpop.permute.xlu0 %3875
      %3877 = vrot.lane.b32.xlu0 %v3854, 37
      %v3878 = vpop.permute.xlu0 %3877
      %v3879 = vsel %vm3820, %v3864, %v3866
      %v3880 = vsel %vm3820, %v3866, %v3868
      %v3881 = vsel %vm3820, %v3868, %v3870
      %v3882 = vsel %vm3820, %v3872, %v3874
      %v3883 = vsel %vm3820, %v3874, %v3876
      %v3884 = vsel %vm3820, %v3876, %v3878
      %v3891 = vadd.f32 %v3774, %v3879
      %v3892 = vadd.f32 %v3775, %v3880
      %v3893 = vadd.f32 %v3776, %v3881
      %v3894 = vadd.f32 %v3777, %v3882
      %v3895 = vadd.f32 %v3778, %v3883
      %v3896 = vadd.f32 %v3779, %v3884
      %3897 = vset.pattern.permute.xlu0 32
      %3898 = vperm.xlu0 %3897, %v454
      %v3899 = vpop.permute.xlu0 %3898
      %3901 = vset.pattern.permute.xlu0 32
      %3902 = vperm.xlu0 %3901, %v455
      %v3903 = vpop.permute.xlu0 %3902
      %v3905 = vmul.f32 %v460, %v3899
      %v3906 = vmul.f32 %v461, %v3899
      %v3907 = vmul.f32 %v462, %v3899
      %v3908 = vmul.f32 %v463, %v3899
      %v3909 = vmul.f32 %v464, %v3903
      %v3910 = vmul.f32 %v465, %v3903
      %v3911 = vmul.f32 %v466, %v3903
      %v3912 = vmul.f32 %v467, %v3903
      %3921 = vrot.lane.b32.xlu0 %v3905, 36
      %v3922 = vpop.permute.xlu0 %3921
      %3923 = vrot.lane.b32.xlu0 %v3906, 36
      %v3924 = vpop.permute.xlu0 %3923
      %3925 = vrot.lane.b32.xlu0 %v3907, 36
      %v3926 = vpop.permute.xlu0 %3925
      %3927 = vrot.lane.b32.xlu0 %v3908, 36
      %v3928 = vpop.permute.xlu0 %3927
      %3929 = vrot.lane.b32.xlu0 %v3909, 36
      %v3930 = vpop.permute.xlu0 %3929
      %3931 = vrot.lane.b32.xlu0 %v3910, 36
      %v3932 = vpop.permute.xlu0 %3931
      %3933 = vrot.lane.b32.xlu0 %v3911, 36
      %v3934 = vpop.permute.xlu0 %3933
      %3935 = vrot.lane.b32.xlu0 %v3912, 36
      %v3936 = vpop.permute.xlu0 %3935
      %vm3937 = vcmask 293888
      %v3938 = vsel %vm3937, %v3922, %v3924
      %v3939 = vsel %vm3937, %v3924, %v3926
      %v3940 = vsel %vm3937, %v3926, %v3928
      %v3941 = vsel %vm3937, %v3930, %v3932
      %v3942 = vsel %vm3937, %v3932, %v3934
      %v3943 = vsel %vm3937, %v3934, %v3936
      %v3950 = vadd.f32 %v3833, %v3938
      %v3951 = vadd.f32 %v3834, %v3939
      %v3952 = vadd.f32 %v3835, %v3940
      %v3953 = vadd.f32 %v3836, %v3941
      %v3954 = vadd.f32 %v3837, %v3942
      %v3955 = vadd.f32 %v3838, %v3943
      %3956 = vset.pattern.permute.xlu0 81
      %3957 = vperm.xlu0 %3956, %v454
      %v3958 = vpop.permute.xlu0 %3957
      %3960 = vset.pattern.permute.xlu0 81
      %3961 = vperm.xlu0 %3960, %v455
      %v3962 = vpop.permute.xlu0 %3961
      %v3964 = vmul.f32 %v460, %v3958
      %v3965 = vmul.f32 %v461, %v3958
      %v3966 = vmul.f32 %v462, %v3958
      %v3967 = vmul.f32 %v463, %v3958
      %v3968 = vmul.f32 %v464, %v3962
      %v3969 = vmul.f32 %v465, %v3962
      %v3970 = vmul.f32 %v466, %v3962
      %v3971 = vmul.f32 %v467, %v3962
      %3980 = vrot.lane.b32.xlu0 %v3964, 36
      %v3981 = vpop.permute.xlu0 %3980
      %3982 = vrot.lane.b32.xlu0 %v3965, 36
      %v3983 = vpop.permute.xlu0 %3982
      %3984 = vrot.lane.b32.xlu0 %v3966, 36
      %v3985 = vpop.permute.xlu0 %3984
      %3986 = vrot.lane.b32.xlu0 %v3967, 36
      %v3987 = vpop.permute.xlu0 %3986
      %3988 = vrot.lane.b32.xlu0 %v3968, 36
      %v3989 = vpop.permute.xlu0 %3988
      %3990 = vrot.lane.b32.xlu0 %v3969, 36
      %v3991 = vpop.permute.xlu0 %3990
      %3992 = vrot.lane.b32.xlu0 %v3970, 36
      %v3993 = vpop.permute.xlu0 %3992
      %3994 = vrot.lane.b32.xlu0 %v3971, 36
      %v3995 = vpop.permute.xlu0 %3994
      %v3996 = vsel %vm3937, %v3981, %v3983
      %v3997 = vsel %vm3937, %v3983, %v3985
      %v3998 = vsel %vm3937, %v3985, %v3987
      %v3999 = vsel %vm3937, %v3989, %v3991
      %v4000 = vsel %vm3937, %v3991, %v3993
      %v4001 = vsel %vm3937, %v3993, %v3995
      %v4008 = vadd.f32 %v3891, %v3996
      %v4009 = vadd.f32 %v3892, %v3997
      %v4010 = vadd.f32 %v3893, %v3998
      %v4011 = vadd.f32 %v3894, %v3999
      %v4012 = vadd.f32 %v3895, %v4000
      %v4013 = vadd.f32 %v3896, %v4001
      %4014 = vset.pattern.permute.xlu0 33
      %4015 = vperm.xlu0 %4014, %v454
      %v4016 = vpop.permute.xlu0 %4015
      %4018 = vset.pattern.permute.xlu0 33
      %4019 = vperm.xlu0 %4018, %v455
      %v4020 = vpop.permute.xlu0 %4019
      %v4022 = vmul.f32 %v460, %v4016
      %v4023 = vmul.f32 %v461, %v4016
      %v4024 = vmul.f32 %v462, %v4016
      %v4025 = vmul.f32 %v463, %v4016
      %v4026 = vmul.f32 %v464, %v4020
      %v4027 = vmul.f32 %v465, %v4020
      %v4028 = vmul.f32 %v466, %v4020
      %v4029 = vmul.f32 %v467, %v4020
      %4038 = vrot.lane.b32.xlu0 %v4022, 35
      %v4039 = vpop.permute.xlu0 %4038
      %4040 = vrot.lane.b32.xlu0 %v4023, 35
      %v4041 = vpop.permute.xlu0 %4040
      %4042 = vrot.lane.b32.xlu0 %v4024, 35
      %v4043 = vpop.permute.xlu0 %4042
      %4044 = vrot.lane.b32.xlu0 %v4025, 35
      %v4045 = vpop.permute.xlu0 %4044
      %4046 = vrot.lane.b32.xlu0 %v4026, 35
      %v4047 = vpop.permute.xlu0 %4046
      %4048 = vrot.lane.b32.xlu0 %v4027, 35
      %v4049 = vpop.permute.xlu0 %4048
      %4050 = vrot.lane.b32.xlu0 %v4028, 35
      %v4051 = vpop.permute.xlu0 %4050
      %4052 = vrot.lane.b32.xlu0 %v4029, 35
      %v4053 = vpop.permute.xlu0 %4052
      %vm4054 = vcmask 285696
      %v4055 = vsel %vm4054, %v4039, %v4041
      %v4056 = vsel %vm4054, %v4041, %v4043
      %v4057 = vsel %vm4054, %v4043, %v4045
      %v4058 = vsel %vm4054, %v4047, %v4049
      %v4059 = vsel %vm4054, %v4049, %v4051
      %v4060 = vsel %vm4054, %v4051, %v4053
      %v4067 = vadd.f32 %v3950, %v4055
      %v4068 = vadd.f32 %v3951, %v4056
      %v4069 = vadd.f32 %v3952, %v4057
      %v4070 = vadd.f32 %v3953, %v4058
      %v4071 = vadd.f32 %v3954, %v4059
      %v4072 = vadd.f32 %v3955, %v4060
      %4073 = vset.pattern.permute.xlu0 82
      %4074 = vperm.xlu0 %4073, %v454
      %v4075 = vpop.permute.xlu0 %4074
      %4077 = vset.pattern.permute.xlu0 82
      %4078 = vperm.xlu0 %4077, %v455
      %v4079 = vpop.permute.xlu0 %4078
      %v4081 = vmul.f32 %v460, %v4075
      %v4082 = vmul.f32 %v461, %v4075
      %v4083 = vmul.f32 %v462, %v4075
      %v4084 = vmul.f32 %v463, %v4075
      %v4085 = vmul.f32 %v464, %v4079
      %v4086 = vmul.f32 %v465, %v4079
      %v4087 = vmul.f32 %v466, %v4079
      %v4088 = vmul.f32 %v467, %v4079
      %4097 = vrot.lane.b32.xlu0 %v4081, 35
      %v4098 = vpop.permute.xlu0 %4097
      %4099 = vrot.lane.b32.xlu0 %v4082, 35
      %v4100 = vpop.permute.xlu0 %4099
      %4101 = vrot.lane.b32.xlu0 %v4083, 35
      %v4102 = vpop.permute.xlu0 %4101
      %4103 = vrot.lane.b32.xlu0 %v4084, 35
      %v4104 = vpop.permute.xlu0 %4103
      %4105 = vrot.lane.b32.xlu0 %v4085, 35
      %v4106 = vpop.permute.xlu0 %4105
      %4107 = vrot.lane.b32.xlu0 %v4086, 35
      %v4108 = vpop.permute.xlu0 %4107
      %4109 = vrot.lane.b32.xlu0 %v4087, 35
      %v4110 = vpop.permute.xlu0 %4109
      %4111 = vrot.lane.b32.xlu0 %v4088, 35
      %v4112 = vpop.permute.xlu0 %4111
      %v4113 = vsel %vm4054, %v4098, %v4100
      %v4114 = vsel %vm4054, %v4100, %v4102
      %v4115 = vsel %vm4054, %v4102, %v4104
      %v4116 = vsel %vm4054, %v4106, %v4108
      %v4117 = vsel %vm4054, %v4108, %v4110
      %v4118 = vsel %vm4054, %v4110, %v4112
      %v4125 = vadd.f32 %v4008, %v4113
      %v4126 = vadd.f32 %v4009, %v4114
      %v4127 = vadd.f32 %v4010, %v4115
      %v4128 = vadd.f32 %v4011, %v4116
      %v4129 = vadd.f32 %v4012, %v4117
      %v4130 = vadd.f32 %v4013, %v4118
      %4131 = vset.pattern.permute.xlu0 34
      %4132 = vperm.xlu0 %4131, %v454
      %v4133 = vpop.permute.xlu0 %4132
      %4135 = vset.pattern.permute.xlu0 34
      %4136 = vperm.xlu0 %4135, %v455
      %v4137 = vpop.permute.xlu0 %4136
      %v4139 = vmul.f32 %v460, %v4133
      %v4140 = vmul.f32 %v461, %v4133
      %v4141 = vmul.f32 %v462, %v4133
      %v4142 = vmul.f32 %v463, %v4133
      %v4143 = vmul.f32 %v464, %v4137
      %v4144 = vmul.f32 %v465, %v4137
      %v4145 = vmul.f32 %v466, %v4137
      %v4146 = vmul.f32 %v467, %v4137
      %4155 = vrot.lane.b32.xlu0 %v4139, 34
      %v4156 = vpop.permute.xlu0 %4155
      %4157 = vrot.lane.b32.xlu0 %v4140, 34
      %v4158 = vpop.permute.xlu0 %4157
      %4159 = vrot.lane.b32.xlu0 %v4141, 34
      %v4160 = vpop.permute.xlu0 %4159
      %4161 = vrot.lane.b32.xlu0 %v4142, 34
      %v4162 = vpop.permute.xlu0 %4161
      %4163 = vrot.lane.b32.xlu0 %v4143, 34
      %v4164 = vpop.permute.xlu0 %4163
      %4165 = vrot.lane.b32.xlu0 %v4144, 34
      %v4166 = vpop.permute.xlu0 %4165
      %4167 = vrot.lane.b32.xlu0 %v4145, 34
      %v4168 = vpop.permute.xlu0 %4167
      %4169 = vrot.lane.b32.xlu0 %v4146, 34
      %v4170 = vpop.permute.xlu0 %4169
      %vm4171 = vcmask 277504
      %v4172 = vsel %vm4171, %v4156, %v4158
      %v4173 = vsel %vm4171, %v4158, %v4160
      %v4174 = vsel %vm4171, %v4160, %v4162
      %v4175 = vsel %vm4171, %v4164, %v4166
      %v4176 = vsel %vm4171, %v4166, %v4168
      %v4177 = vsel %vm4171, %v4168, %v4170
      %v4184 = vadd.f32 %v4067, %v4172
      %v4185 = vadd.f32 %v4068, %v4173
      %v4186 = vadd.f32 %v4069, %v4174
      %v4187 = vadd.f32 %v4070, %v4175
      %v4188 = vadd.f32 %v4071, %v4176
      %v4189 = vadd.f32 %v4072, %v4177
      %4190 = vset.pattern.permute.xlu0 83
      %4191 = vperm.xlu0 %4190, %v454
      %v4192 = vpop.permute.xlu0 %4191
      %4194 = vset.pattern.permute.xlu0 83
      %4195 = vperm.xlu0 %4194, %v455
      %v4196 = vpop.permute.xlu0 %4195
      %v4198 = vmul.f32 %v460, %v4192
      %v4199 = vmul.f32 %v461, %v4192
      %v4200 = vmul.f32 %v462, %v4192
      %v4201 = vmul.f32 %v463, %v4192
      %v4202 = vmul.f32 %v464, %v4196
      %v4203 = vmul.f32 %v465, %v4196
      %v4204 = vmul.f32 %v466, %v4196
      %v4205 = vmul.f32 %v467, %v4196
      %4214 = vrot.lane.b32.xlu0 %v4198, 34
      %v4215 = vpop.permute.xlu0 %4214
      %4216 = vrot.lane.b32.xlu0 %v4199, 34
      %v4217 = vpop.permute.xlu0 %4216
      %4218 = vrot.lane.b32.xlu0 %v4200, 34
      %v4219 = vpop.permute.xlu0 %4218
      %4220 = vrot.lane.b32.xlu0 %v4201, 34
      %v4221 = vpop.permute.xlu0 %4220
      %4222 = vrot.lane.b32.xlu0 %v4202, 34
      %v4223 = vpop.permute.xlu0 %4222
      %4224 = vrot.lane.b32.xlu0 %v4203, 34
      %v4225 = vpop.permute.xlu0 %4224
      %4226 = vrot.lane.b32.xlu0 %v4204, 34
      %v4227 = vpop.permute.xlu0 %4226
      %4228 = vrot.lane.b32.xlu0 %v4205, 34
      %v4229 = vpop.permute.xlu0 %4228
      %v4230 = vsel %vm4171, %v4215, %v4217
      %v4231 = vsel %vm4171, %v4217, %v4219
      %v4232 = vsel %vm4171, %v4219, %v4221
      %v4233 = vsel %vm4171, %v4223, %v4225
      %v4234 = vsel %vm4171, %v4225, %v4227
      %v4235 = vsel %vm4171, %v4227, %v4229
      %v4242 = vadd.f32 %v4125, %v4230
      %v4243 = vadd.f32 %v4126, %v4231
      %v4244 = vadd.f32 %v4127, %v4232
      %v4245 = vadd.f32 %v4128, %v4233
      %v4246 = vadd.f32 %v4129, %v4234
      %v4247 = vadd.f32 %v4130, %v4235
      %4248 = vset.pattern.permute.xlu0 35
      %4249 = vperm.xlu0 %4248, %v454
      %v4250 = vpop.permute.xlu0 %4249
      %4252 = vset.pattern.permute.xlu0 35
      %4253 = vperm.xlu0 %4252, %v455
      %v4254 = vpop.permute.xlu0 %4253
      %v4256 = vmul.f32 %v460, %v4250
      %v4257 = vmul.f32 %v461, %v4250
      %v4258 = vmul.f32 %v462, %v4250
      %v4259 = vmul.f32 %v463, %v4250
      %v4260 = vmul.f32 %v464, %v4254
      %v4261 = vmul.f32 %v465, %v4254
      %v4262 = vmul.f32 %v466, %v4254
      %v4263 = vmul.f32 %v467, %v4254
      %4272 = vrot.lane.b32.xlu0 %v4256, 18
      %v4273 = vpop.permute.xlu0 %4272
      %4274 = vrot.lane.b32.xlu0 %v4257, 18
      %v4275 = vpop.permute.xlu0 %4274
      %4276 = vrot.lane.b32.xlu0 %v4258, 18
      %v4277 = vpop.permute.xlu0 %4276
      %4278 = vrot.lane.b32.xlu0 %v4259, 18
      %v4279 = vpop.permute.xlu0 %4278
      %4280 = vrot.lane.b32.xlu0 %v4260, 18
      %v4281 = vpop.permute.xlu0 %4280
      %4282 = vrot.lane.b32.xlu0 %v4261, 18
      %v4283 = vpop.permute.xlu0 %4282
      %4284 = vrot.lane.b32.xlu0 %v4262, 18
      %v4285 = vpop.permute.xlu0 %4284
      %4286 = vrot.lane.b32.xlu0 %v4263, 18
      %v4287 = vpop.permute.xlu0 %4286
      %vm4288 = vcmask 146432
      %v4289 = vsel %vm4288, %v4273, %v4275
      %v4290 = vsel %vm4288, %v4275, %v4277
      %v4291 = vsel %vm4288, %v4277, %v4279
      %v4292 = vsel %vm4288, %v4281, %v4283
      %v4293 = vsel %vm4288, %v4283, %v4285
      %v4294 = vsel %vm4288, %v4285, %v4287
      %v4301 = vadd.f32 %v4184, %v4289
      %v4302 = vadd.f32 %v4185, %v4290
      %v4303 = vadd.f32 %v4186, %v4291
      %v4304 = vadd.f32 %v4187, %v4292
      %v4305 = vadd.f32 %v4188, %v4293
      %v4306 = vadd.f32 %v4189, %v4294
      %4307 = vset.pattern.permute.xlu0 84
      %4308 = vperm.xlu0 %4307, %v454
      %v4309 = vpop.permute.xlu0 %4308
      %4311 = vset.pattern.permute.xlu0 84
      %4312 = vperm.xlu0 %4311, %v455
      %v4313 = vpop.permute.xlu0 %4312
      %v4315 = vmul.f32 %v460, %v4309
      %v4316 = vmul.f32 %v461, %v4309
      %v4317 = vmul.f32 %v462, %v4309
      %v4318 = vmul.f32 %v463, %v4309
      %v4319 = vmul.f32 %v464, %v4313
      %v4320 = vmul.f32 %v465, %v4313
      %v4321 = vmul.f32 %v466, %v4313
      %v4322 = vmul.f32 %v467, %v4313
      %4331 = vrot.lane.b32.xlu0 %v4315, 18
      %v4332 = vpop.permute.xlu0 %4331
      %4333 = vrot.lane.b32.xlu0 %v4316, 18
      %v4334 = vpop.permute.xlu0 %4333
      %4335 = vrot.lane.b32.xlu0 %v4317, 18
      %v4336 = vpop.permute.xlu0 %4335
      %4337 = vrot.lane.b32.xlu0 %v4318, 18
      %v4338 = vpop.permute.xlu0 %4337
      %4339 = vrot.lane.b32.xlu0 %v4319, 18
      %v4340 = vpop.permute.xlu0 %4339
      %4341 = vrot.lane.b32.xlu0 %v4320, 18
      %v4342 = vpop.permute.xlu0 %4341
      %4343 = vrot.lane.b32.xlu0 %v4321, 18
      %v4344 = vpop.permute.xlu0 %4343
      %4345 = vrot.lane.b32.xlu0 %v4322, 18
      %v4346 = vpop.permute.xlu0 %4345
      %v4347 = vsel %vm4288, %v4332, %v4334
      %v4348 = vsel %vm4288, %v4334, %v4336
      %v4349 = vsel %vm4288, %v4336, %v4338
      %v4350 = vsel %vm4288, %v4340, %v4342
      %v4351 = vsel %vm4288, %v4342, %v4344
      %v4352 = vsel %vm4288, %v4344, %v4346
      %v4359 = vadd.f32 %v4242, %v4347
      %v4360 = vadd.f32 %v4243, %v4348
      %v4361 = vadd.f32 %v4244, %v4349
      %v4362 = vadd.f32 %v4245, %v4350
      %v4363 = vadd.f32 %v4246, %v4351
      %v4364 = vadd.f32 %v4247, %v4352
      %4365 = vset.pattern.permute.xlu0 36
      %4366 = vperm.xlu0 %4365, %v454
      %v4367 = vpop.permute.xlu0 %4366
      %4369 = vset.pattern.permute.xlu0 36
      %4370 = vperm.xlu0 %4369, %v455
      %v4371 = vpop.permute.xlu0 %4370
      %v4373 = vmul.f32 %v460, %v4367
      %v4374 = vmul.f32 %v461, %v4367
      %v4375 = vmul.f32 %v462, %v4367
      %v4376 = vmul.f32 %v463, %v4367
      %v4377 = vmul.f32 %v464, %v4371
      %v4378 = vmul.f32 %v465, %v4371
      %v4379 = vmul.f32 %v466, %v4371
      %v4380 = vmul.f32 %v467, %v4371
      %4389 = vrot.lane.b32.xlu0 %v4373, 17
      %v4390 = vpop.permute.xlu0 %4389
      %4391 = vrot.lane.b32.xlu0 %v4374, 17
      %v4392 = vpop.permute.xlu0 %4391
      %4393 = vrot.lane.b32.xlu0 %v4375, 17
      %v4394 = vpop.permute.xlu0 %4393
      %4395 = vrot.lane.b32.xlu0 %v4376, 17
      %v4396 = vpop.permute.xlu0 %4395
      %4397 = vrot.lane.b32.xlu0 %v4377, 17
      %v4398 = vpop.permute.xlu0 %4397
      %4399 = vrot.lane.b32.xlu0 %v4378, 17
      %v4400 = vpop.permute.xlu0 %4399
      %4401 = vrot.lane.b32.xlu0 %v4379, 17
      %v4402 = vpop.permute.xlu0 %4401
      %4403 = vrot.lane.b32.xlu0 %v4380, 17
      %v4404 = vpop.permute.xlu0 %4403
      %vm4405 = vcmask 138240
      %v4406 = vsel %vm4405, %v4390, %v4392
      %v4407 = vsel %vm4405, %v4392, %v4394
      %v4408 = vsel %vm4405, %v4394, %v4396
      %v4409 = vsel %vm4405, %v4398, %v4400
      %v4410 = vsel %vm4405, %v4400, %v4402
      %v4411 = vsel %vm4405, %v4402, %v4404
      %v4418 = vadd.f32 %v4301, %v4406
      %v4419 = vadd.f32 %v4302, %v4407
      %v4420 = vadd.f32 %v4303, %v4408
      %v4421 = vadd.f32 %v4304, %v4409
      %v4422 = vadd.f32 %v4305, %v4410
      %v4423 = vadd.f32 %v4306, %v4411
      %4424 = vset.pattern.permute.xlu0 85
      %4425 = vperm.xlu0 %4424, %v454
      %v4426 = vpop.permute.xlu0 %4425
      %4428 = vset.pattern.permute.xlu0 85
      %4429 = vperm.xlu0 %4428, %v455
      %v4430 = vpop.permute.xlu0 %4429
      %v4432 = vmul.f32 %v460, %v4426
      %v4433 = vmul.f32 %v461, %v4426
      %v4434 = vmul.f32 %v462, %v4426
      %v4435 = vmul.f32 %v463, %v4426
      %v4436 = vmul.f32 %v464, %v4430
      %v4437 = vmul.f32 %v465, %v4430
      %v4438 = vmul.f32 %v466, %v4430
      %v4439 = vmul.f32 %v467, %v4430
      %4448 = vrot.lane.b32.xlu0 %v4432, 17
      %v4449 = vpop.permute.xlu0 %4448
      %4450 = vrot.lane.b32.xlu0 %v4433, 17
      %v4451 = vpop.permute.xlu0 %4450
      %4452 = vrot.lane.b32.xlu0 %v4434, 17
      %v4453 = vpop.permute.xlu0 %4452
      %4454 = vrot.lane.b32.xlu0 %v4435, 17
      %v4455 = vpop.permute.xlu0 %4454
      %4456 = vrot.lane.b32.xlu0 %v4436, 17
      %v4457 = vpop.permute.xlu0 %4456
      %4458 = vrot.lane.b32.xlu0 %v4437, 17
      %v4459 = vpop.permute.xlu0 %4458
      %4460 = vrot.lane.b32.xlu0 %v4438, 17
      %v4461 = vpop.permute.xlu0 %4460
      %4462 = vrot.lane.b32.xlu0 %v4439, 17
      %v4463 = vpop.permute.xlu0 %4462
      %v4464 = vsel %vm4405, %v4449, %v4451
      %v4465 = vsel %vm4405, %v4451, %v4453
      %v4466 = vsel %vm4405, %v4453, %v4455
      %v4467 = vsel %vm4405, %v4457, %v4459
      %v4468 = vsel %vm4405, %v4459, %v4461
      %v4469 = vsel %vm4405, %v4461, %v4463
      %v4476 = vadd.f32 %v4359, %v4464
      %v4477 = vadd.f32 %v4360, %v4465
      %v4478 = vadd.f32 %v4361, %v4466
      %v4479 = vadd.f32 %v4362, %v4467
      %v4480 = vadd.f32 %v4363, %v4468
      %v4481 = vadd.f32 %v4364, %v4469
      %4482 = vset.pattern.permute.xlu0 37
      %4483 = vperm.xlu0 %4482, %v454
      %v4484 = vpop.permute.xlu0 %4483
      %4486 = vset.pattern.permute.xlu0 37
      %4487 = vperm.xlu0 %4486, %v455
      %v4488 = vpop.permute.xlu0 %4487
      %v4490 = vmul.f32 %v460, %v4484
      %v4491 = vmul.f32 %v461, %v4484
      %v4492 = vmul.f32 %v462, %v4484
      %v4493 = vmul.f32 %v463, %v4484
      %v4494 = vmul.f32 %v464, %v4488
      %v4495 = vmul.f32 %v465, %v4488
      %v4496 = vmul.f32 %v466, %v4488
      %v4497 = vmul.f32 %v467, %v4488
      %4506 = vrot.lane.b32.xlu0 %v4490, 16
      %v4507 = vpop.permute.xlu0 %4506
      %4508 = vrot.lane.b32.xlu0 %v4491, 16
      %v4509 = vpop.permute.xlu0 %4508
      %4510 = vrot.lane.b32.xlu0 %v4492, 16
      %v4511 = vpop.permute.xlu0 %4510
      %4512 = vrot.lane.b32.xlu0 %v4493, 16
      %v4513 = vpop.permute.xlu0 %4512
      %4514 = vrot.lane.b32.xlu0 %v4494, 16
      %v4515 = vpop.permute.xlu0 %4514
      %4516 = vrot.lane.b32.xlu0 %v4495, 16
      %v4517 = vpop.permute.xlu0 %4516
      %4518 = vrot.lane.b32.xlu0 %v4496, 16
      %v4519 = vpop.permute.xlu0 %4518
      %4520 = vrot.lane.b32.xlu0 %v4497, 16
      %v4521 = vpop.permute.xlu0 %4520
      %v4522 = vsel %vm328, %v4507, %v4509
      %v4523 = vsel %vm328, %v4509, %v4511
      %v4524 = vsel %vm328, %v4511, %v4513
      %v4525 = vsel %vm328, %v4515, %v4517
      %v4526 = vsel %vm328, %v4517, %v4519
      %v4527 = vsel %vm328, %v4519, %v4521
      %v4534 = vadd.f32 %v4418, %v4522
      %v4535 = vadd.f32 %v4419, %v4523
      %v4536 = vadd.f32 %v4420, %v4524
      %v4537 = vadd.f32 %v4421, %v4525
      %v4538 = vadd.f32 %v4422, %v4526
      %v4539 = vadd.f32 %v4423, %v4527
      %4540 = vset.pattern.permute.xlu0 86
      %4541 = vperm.xlu0 %4540, %v454
      %v4542 = vpop.permute.xlu0 %4541
      %4544 = vset.pattern.permute.xlu0 86
      %4545 = vperm.xlu0 %4544, %v455
      %v4546 = vpop.permute.xlu0 %4545
      %v4548 = vmul.f32 %v460, %v4542
      %v4549 = vmul.f32 %v461, %v4542
      %v4550 = vmul.f32 %v462, %v4542
      %v4551 = vmul.f32 %v463, %v4542
      %v4552 = vmul.f32 %v464, %v4546
      %v4553 = vmul.f32 %v465, %v4546
      %v4554 = vmul.f32 %v466, %v4546
      %v4555 = vmul.f32 %v467, %v4546
      %4564 = vrot.lane.b32.xlu0 %v4548, 16
      %v4565 = vpop.permute.xlu0 %4564
      %4566 = vrot.lane.b32.xlu0 %v4549, 16
      %v4567 = vpop.permute.xlu0 %4566
      %4568 = vrot.lane.b32.xlu0 %v4550, 16
      %v4569 = vpop.permute.xlu0 %4568
      %4570 = vrot.lane.b32.xlu0 %v4551, 16
      %v4571 = vpop.permute.xlu0 %4570
      %4572 = vrot.lane.b32.xlu0 %v4552, 16
      %v4573 = vpop.permute.xlu0 %4572
      %4574 = vrot.lane.b32.xlu0 %v4553, 16
      %v4575 = vpop.permute.xlu0 %4574
      %4576 = vrot.lane.b32.xlu0 %v4554, 16
      %v4577 = vpop.permute.xlu0 %4576
      %4578 = vrot.lane.b32.xlu0 %v4555, 16
      %v4579 = vpop.permute.xlu0 %4578
      %v4580 = vsel %vm328, %v4565, %v4567
      %v4581 = vsel %vm328, %v4567, %v4569
      %v4582 = vsel %vm328, %v4569, %v4571
      %v4583 = vsel %vm328, %v4573, %v4575
      %v4584 = vsel %vm328, %v4575, %v4577
      %v4585 = vsel %vm328, %v4577, %v4579
      %v4592 = vadd.f32 %v4476, %v4580
      %v4593 = vadd.f32 %v4477, %v4581
      %v4594 = vadd.f32 %v4478, %v4582
      %v4595 = vadd.f32 %v4479, %v4583
      %v4596 = vadd.f32 %v4480, %v4584
      %v4597 = vadd.f32 %v4481, %v4585
      %4598 = vset.pattern.permute.xlu0 38
      %4599 = vperm.xlu0 %4598, %v454
      %v4600 = vpop.permute.xlu0 %4599
      %4602 = vset.pattern.permute.xlu0 38
      %4603 = vperm.xlu0 %4602, %v455
      %v4604 = vpop.permute.xlu0 %4603
      %v4606 = vmul.f32 %v460, %v4600
      %v4607 = vmul.f32 %v461, %v4600
      %v4608 = vmul.f32 %v462, %v4600
      %v4609 = vmul.f32 %v463, %v4600
      %v4610 = vmul.f32 %v464, %v4604
      %v4611 = vmul.f32 %v465, %v4604
      %v4612 = vmul.f32 %v466, %v4604
      %v4613 = vmul.f32 %v467, %v4604
      %4622 = vrot.lane.b32.xlu0 %v4606, 15
      %v4623 = vpop.permute.xlu0 %4622
      %4624 = vrot.lane.b32.xlu0 %v4607, 15
      %v4625 = vpop.permute.xlu0 %4624
      %4626 = vrot.lane.b32.xlu0 %v4608, 15
      %v4627 = vpop.permute.xlu0 %4626
      %4628 = vrot.lane.b32.xlu0 %v4609, 15
      %v4629 = vpop.permute.xlu0 %4628
      %4630 = vrot.lane.b32.xlu0 %v4610, 15
      %v4631 = vpop.permute.xlu0 %4630
      %4632 = vrot.lane.b32.xlu0 %v4611, 15
      %v4633 = vpop.permute.xlu0 %4632
      %4634 = vrot.lane.b32.xlu0 %v4612, 15
      %v4635 = vpop.permute.xlu0 %4634
      %4636 = vrot.lane.b32.xlu0 %v4613, 15
      %v4637 = vpop.permute.xlu0 %4636
      %vm4638 = vcmask 121856
      %v4639 = vsel %vm4638, %v4623, %v4625
      %v4640 = vsel %vm4638, %v4625, %v4627
      %v4641 = vsel %vm4638, %v4627, %v4629
      %v4642 = vsel %vm4638, %v4631, %v4633
      %v4643 = vsel %vm4638, %v4633, %v4635
      %v4644 = vsel %vm4638, %v4635, %v4637
      %v4651 = vadd.f32 %v4534, %v4639
      %v4652 = vadd.f32 %v4535, %v4640
      %v4653 = vadd.f32 %v4536, %v4641
      %v4654 = vadd.f32 %v4537, %v4642
      %v4655 = vadd.f32 %v4538, %v4643
      %v4656 = vadd.f32 %v4539, %v4644
      %4657 = vset.pattern.permute.xlu0 87
      %4658 = vperm.xlu0 %4657, %v454
      %v4659 = vpop.permute.xlu0 %4658
      %4661 = vset.pattern.permute.xlu0 87
      %4662 = vperm.xlu0 %4661, %v455
      %v4663 = vpop.permute.xlu0 %4662
      %v4665 = vmul.f32 %v460, %v4659
      %v4666 = vmul.f32 %v461, %v4659
      %v4667 = vmul.f32 %v462, %v4659
      %v4668 = vmul.f32 %v463, %v4659
      %v4669 = vmul.f32 %v464, %v4663
      %v4670 = vmul.f32 %v465, %v4663
      %v4671 = vmul.f32 %v466, %v4663
      %v4672 = vmul.f32 %v467, %v4663
      %4681 = vrot.lane.b32.xlu0 %v4665, 15
      %v4682 = vpop.permute.xlu0 %4681
      %4683 = vrot.lane.b32.xlu0 %v4666, 15
      %v4684 = vpop.permute.xlu0 %4683
      %4685 = vrot.lane.b32.xlu0 %v4667, 15
      %v4686 = vpop.permute.xlu0 %4685
      %4687 = vrot.lane.b32.xlu0 %v4668, 15
      %v4688 = vpop.permute.xlu0 %4687
      %4689 = vrot.lane.b32.xlu0 %v4669, 15
      %v4690 = vpop.permute.xlu0 %4689
      %4691 = vrot.lane.b32.xlu0 %v4670, 15
      %v4692 = vpop.permute.xlu0 %4691
      %4693 = vrot.lane.b32.xlu0 %v4671, 15
      %v4694 = vpop.permute.xlu0 %4693
      %4695 = vrot.lane.b32.xlu0 %v4672, 15
      %v4696 = vpop.permute.xlu0 %4695
      %v4697 = vsel %vm4638, %v4682, %v4684
      %v4698 = vsel %vm4638, %v4684, %v4686
      %v4699 = vsel %vm4638, %v4686, %v4688
      %v4700 = vsel %vm4638, %v4690, %v4692
      %v4701 = vsel %vm4638, %v4692, %v4694
      %v4702 = vsel %vm4638, %v4694, %v4696
      %v4709 = vadd.f32 %v4592, %v4697
      %v4710 = vadd.f32 %v4593, %v4698
      %v4711 = vadd.f32 %v4594, %v4699
      %v4712 = vadd.f32 %v4595, %v4700
      %v4713 = vadd.f32 %v4596, %v4701
      %v4714 = vadd.f32 %v4597, %v4702
      %4715 = vset.pattern.permute.xlu0 39
      %4716 = vperm.xlu0 %4715, %v454
      %v4717 = vpop.permute.xlu0 %4716
      %4719 = vset.pattern.permute.xlu0 39
      %4720 = vperm.xlu0 %4719, %v455
      %v4721 = vpop.permute.xlu0 %4720
      %v4723 = vmul.f32 %v460, %v4717
      %v4724 = vmul.f32 %v461, %v4717
      %v4725 = vmul.f32 %v462, %v4717
      %v4726 = vmul.f32 %v463, %v4717
      %v4727 = vmul.f32 %v464, %v4721
      %v4728 = vmul.f32 %v465, %v4721
      %v4729 = vmul.f32 %v466, %v4721
      %v4730 = vmul.f32 %v467, %v4721
      %4739 = vrot.lane.b32.xlu0 %v4723, 14
      %v4740 = vpop.permute.xlu0 %4739
      %4741 = vrot.lane.b32.xlu0 %v4724, 14
      %v4742 = vpop.permute.xlu0 %4741
      %4743 = vrot.lane.b32.xlu0 %v4725, 14
      %v4744 = vpop.permute.xlu0 %4743
      %4745 = vrot.lane.b32.xlu0 %v4726, 14
      %v4746 = vpop.permute.xlu0 %4745
      %4747 = vrot.lane.b32.xlu0 %v4727, 14
      %v4748 = vpop.permute.xlu0 %4747
      %4749 = vrot.lane.b32.xlu0 %v4728, 14
      %v4750 = vpop.permute.xlu0 %4749
      %4751 = vrot.lane.b32.xlu0 %v4729, 14
      %v4752 = vpop.permute.xlu0 %4751
      %4753 = vrot.lane.b32.xlu0 %v4730, 14
      %v4754 = vpop.permute.xlu0 %4753
      %vm4755 = vcmask 113664
      %v4756 = vsel %vm4755, %v4740, %v4742
      %v4757 = vsel %vm4755, %v4742, %v4744
      %v4758 = vsel %vm4755, %v4744, %v4746
      %v4759 = vsel %vm4755, %v4748, %v4750
      %v4760 = vsel %vm4755, %v4750, %v4752
      %v4761 = vsel %vm4755, %v4752, %v4754
      %v4768 = vadd.f32 %v4651, %v4756
      %v4769 = vadd.f32 %v4652, %v4757
      %v4770 = vadd.f32 %v4653, %v4758
      %v4771 = vadd.f32 %v4654, %v4759
      %v4772 = vadd.f32 %v4655, %v4760
      %v4773 = vadd.f32 %v4656, %v4761
      %4774 = vset.pattern.permute.xlu0 88
      %4775 = vperm.xlu0 %4774, %v454
      %v4776 = vpop.permute.xlu0 %4775
      %4778 = vset.pattern.permute.xlu0 88
      %4779 = vperm.xlu0 %4778, %v455
      %v4780 = vpop.permute.xlu0 %4779
      %v4782 = vmul.f32 %v460, %v4776
      %v4783 = vmul.f32 %v461, %v4776
      %v4784 = vmul.f32 %v462, %v4776
      %v4785 = vmul.f32 %v463, %v4776
      %v4786 = vmul.f32 %v464, %v4780
      %v4787 = vmul.f32 %v465, %v4780
      %v4788 = vmul.f32 %v466, %v4780
      %v4789 = vmul.f32 %v467, %v4780
      %4798 = vrot.lane.b32.xlu0 %v4782, 14
      %v4799 = vpop.permute.xlu0 %4798
      %4800 = vrot.lane.b32.xlu0 %v4783, 14
      %v4801 = vpop.permute.xlu0 %4800
      %4802 = vrot.lane.b32.xlu0 %v4784, 14
      %v4803 = vpop.permute.xlu0 %4802
      %4804 = vrot.lane.b32.xlu0 %v4785, 14
      %v4805 = vpop.permute.xlu0 %4804
      %4806 = vrot.lane.b32.xlu0 %v4786, 14
      %v4807 = vpop.permute.xlu0 %4806
      %4808 = vrot.lane.b32.xlu0 %v4787, 14
      %v4809 = vpop.permute.xlu0 %4808
      %4810 = vrot.lane.b32.xlu0 %v4788, 14
      %v4811 = vpop.permute.xlu0 %4810
      %4812 = vrot.lane.b32.xlu0 %v4789, 14
      %v4813 = vpop.permute.xlu0 %4812
      %v4814 = vsel %vm4755, %v4799, %v4801
      %v4815 = vsel %vm4755, %v4801, %v4803
      %v4816 = vsel %vm4755, %v4803, %v4805
      %v4817 = vsel %vm4755, %v4807, %v4809
      %v4818 = vsel %vm4755, %v4809, %v4811
      %v4819 = vsel %vm4755, %v4811, %v4813
      %v4826 = vadd.f32 %v4709, %v4814
      %v4827 = vadd.f32 %v4710, %v4815
      %v4828 = vadd.f32 %v4711, %v4816
      %v4829 = vadd.f32 %v4712, %v4817
      %v4830 = vadd.f32 %v4713, %v4818
      %v4831 = vadd.f32 %v4714, %v4819
      %4832 = vset.pattern.permute.xlu0 40
      %4833 = vperm.xlu0 %4832, %v454
      %v4834 = vpop.permute.xlu0 %4833
      %4836 = vset.pattern.permute.xlu0 40
      %4837 = vperm.xlu0 %4836, %v455
      %v4838 = vpop.permute.xlu0 %4837
      %v4840 = vmul.f32 %v460, %v4834
      %v4841 = vmul.f32 %v461, %v4834
      %v4842 = vmul.f32 %v462, %v4834
      %v4843 = vmul.f32 %v463, %v4834
      %v4844 = vmul.f32 %v464, %v4838
      %v4845 = vmul.f32 %v465, %v4838
      %v4846 = vmul.f32 %v466, %v4838
      %v4847 = vmul.f32 %v467, %v4838
      %4856 = vrot.lane.b32.xlu0 %v4840, 13
      %v4857 = vpop.permute.xlu0 %4856
      %4858 = vrot.lane.b32.xlu0 %v4841, 13
      %v4859 = vpop.permute.xlu0 %4858
      %4860 = vrot.lane.b32.xlu0 %v4842, 13
      %v4861 = vpop.permute.xlu0 %4860
      %4862 = vrot.lane.b32.xlu0 %v4843, 13
      %v4863 = vpop.permute.xlu0 %4862
      %4864 = vrot.lane.b32.xlu0 %v4844, 13
      %v4865 = vpop.permute.xlu0 %4864
      %4866 = vrot.lane.b32.xlu0 %v4845, 13
      %v4867 = vpop.permute.xlu0 %4866
      %4868 = vrot.lane.b32.xlu0 %v4846, 13
      %v4869 = vpop.permute.xlu0 %4868
      %4870 = vrot.lane.b32.xlu0 %v4847, 13
      %v4871 = vpop.permute.xlu0 %4870
      %vm4872 = vcmask 105472
      %v4873 = vsel %vm4872, %v4857, %v4859
      %v4874 = vsel %vm4872, %v4859, %v4861
      %v4875 = vsel %vm4872, %v4861, %v4863
      %v4876 = vsel %vm4872, %v4865, %v4867
      %v4877 = vsel %vm4872, %v4867, %v4869
      %v4878 = vsel %vm4872, %v4869, %v4871
      %v4885 = vadd.f32 %v4768, %v4873
      %v4886 = vadd.f32 %v4769, %v4874
      %v4887 = vadd.f32 %v4770, %v4875
      %v4888 = vadd.f32 %v4771, %v4876
      %v4889 = vadd.f32 %v4772, %v4877
      %v4890 = vadd.f32 %v4773, %v4878
      %4891 = vset.pattern.permute.xlu0 89
      %4892 = vperm.xlu0 %4891, %v454
      %v4893 = vpop.permute.xlu0 %4892
      %4895 = vset.pattern.permute.xlu0 89
      %4896 = vperm.xlu0 %4895, %v455
      %v4897 = vpop.permute.xlu0 %4896
      %v4899 = vmul.f32 %v460, %v4893
      %v4900 = vmul.f32 %v461, %v4893
      %v4901 = vmul.f32 %v462, %v4893
      %v4902 = vmul.f32 %v463, %v4893
      %v4903 = vmul.f32 %v464, %v4897
      %v4904 = vmul.f32 %v465, %v4897
      %v4905 = vmul.f32 %v466, %v4897
      %v4906 = vmul.f32 %v467, %v4897
      %4915 = vrot.lane.b32.xlu0 %v4899, 13
      %v4916 = vpop.permute.xlu0 %4915
      %4917 = vrot.lane.b32.xlu0 %v4900, 13
      %v4918 = vpop.permute.xlu0 %4917
      %4919 = vrot.lane.b32.xlu0 %v4901, 13
      %v4920 = vpop.permute.xlu0 %4919
      %4921 = vrot.lane.b32.xlu0 %v4902, 13
      %v4922 = vpop.permute.xlu0 %4921
      %4923 = vrot.lane.b32.xlu0 %v4903, 13
      %v4924 = vpop.permute.xlu0 %4923
      %4925 = vrot.lane.b32.xlu0 %v4904, 13
      %v4926 = vpop.permute.xlu0 %4925
      %4927 = vrot.lane.b32.xlu0 %v4905, 13
      %v4928 = vpop.permute.xlu0 %4927
      %4929 = vrot.lane.b32.xlu0 %v4906, 13
      %v4930 = vpop.permute.xlu0 %4929
      %v4931 = vsel %vm4872, %v4916, %v4918
      %v4932 = vsel %vm4872, %v4918, %v4920
      %v4933 = vsel %vm4872, %v4920, %v4922
      %v4934 = vsel %vm4872, %v4924, %v4926
      %v4935 = vsel %vm4872, %v4926, %v4928
      %v4936 = vsel %vm4872, %v4928, %v4930
      %v4943 = vadd.f32 %v4826, %v4931
      %v4944 = vadd.f32 %v4827, %v4932
      %v4945 = vadd.f32 %v4828, %v4933
      %v4946 = vadd.f32 %v4829, %v4934
      %v4947 = vadd.f32 %v4830, %v4935
      %v4948 = vadd.f32 %v4831, %v4936
      %4949 = vset.pattern.permute.xlu0 41
      %4950 = vperm.xlu0 %4949, %v454
      %v4951 = vpop.permute.xlu0 %4950
      %4953 = vset.pattern.permute.xlu0 41
      %4954 = vperm.xlu0 %4953, %v455
      %v4955 = vpop.permute.xlu0 %4954
      %v4957 = vmul.f32 %v460, %v4951
      %v4958 = vmul.f32 %v461, %v4951
      %v4959 = vmul.f32 %v462, %v4951
      %v4960 = vmul.f32 %v463, %v4951
      %v4961 = vmul.f32 %v464, %v4955
      %v4962 = vmul.f32 %v465, %v4955
      %v4963 = vmul.f32 %v466, %v4955
      %v4964 = vmul.f32 %v467, %v4955
      %4973 = vrot.lane.b32.xlu0 %v4957, 12
      %v4974 = vpop.permute.xlu0 %4973
      %4975 = vrot.lane.b32.xlu0 %v4958, 12
      %v4976 = vpop.permute.xlu0 %4975
      %4977 = vrot.lane.b32.xlu0 %v4959, 12
      %v4978 = vpop.permute.xlu0 %4977
      %4979 = vrot.lane.b32.xlu0 %v4960, 12
      %v4980 = vpop.permute.xlu0 %4979
      %4981 = vrot.lane.b32.xlu0 %v4961, 12
      %v4982 = vpop.permute.xlu0 %4981
      %4983 = vrot.lane.b32.xlu0 %v4962, 12
      %v4984 = vpop.permute.xlu0 %4983
      %4985 = vrot.lane.b32.xlu0 %v4963, 12
      %v4986 = vpop.permute.xlu0 %4985
      %4987 = vrot.lane.b32.xlu0 %v4964, 12
      %v4988 = vpop.permute.xlu0 %4987
      %vm4989 = vcmask 97280
      %v4990 = vsel %vm4989, %v4974, %v4976
      %v4991 = vsel %vm4989, %v4976, %v4978
      %v4992 = vsel %vm4989, %v4978, %v4980
      %v4993 = vsel %vm4989, %v4982, %v4984
      %v4994 = vsel %vm4989, %v4984, %v4986
      %v4995 = vsel %vm4989, %v4986, %v4988
      %v5002 = vadd.f32 %v4885, %v4990
      %v5003 = vadd.f32 %v4886, %v4991
      %v5004 = vadd.f32 %v4887, %v4992
      %v5005 = vadd.f32 %v4888, %v4993
      %v5006 = vadd.f32 %v4889, %v4994
      %v5007 = vadd.f32 %v4890, %v4995
      %5008 = vset.pattern.permute.xlu0 90
      %5009 = vperm.xlu0 %5008, %v454
      %v5010 = vpop.permute.xlu0 %5009
      %5012 = vset.pattern.permute.xlu0 90
      %5013 = vperm.xlu0 %5012, %v455
      %v5014 = vpop.permute.xlu0 %5013
      %v5016 = vmul.f32 %v460, %v5010
      %v5017 = vmul.f32 %v461, %v5010
      %v5018 = vmul.f32 %v462, %v5010
      %v5019 = vmul.f32 %v463, %v5010
      %v5020 = vmul.f32 %v464, %v5014
      %v5021 = vmul.f32 %v465, %v5014
      %v5022 = vmul.f32 %v466, %v5014
      %v5023 = vmul.f32 %v467, %v5014
      %5032 = vrot.lane.b32.xlu0 %v5016, 12
      %v5033 = vpop.permute.xlu0 %5032
      %5034 = vrot.lane.b32.xlu0 %v5017, 12
      %v5035 = vpop.permute.xlu0 %5034
      %5036 = vrot.lane.b32.xlu0 %v5018, 12
      %v5037 = vpop.permute.xlu0 %5036
      %5038 = vrot.lane.b32.xlu0 %v5019, 12
      %v5039 = vpop.permute.xlu0 %5038
      %5040 = vrot.lane.b32.xlu0 %v5020, 12
      %v5041 = vpop.permute.xlu0 %5040
      %5042 = vrot.lane.b32.xlu0 %v5021, 12
      %v5043 = vpop.permute.xlu0 %5042
      %5044 = vrot.lane.b32.xlu0 %v5022, 12
      %v5045 = vpop.permute.xlu0 %5044
      %5046 = vrot.lane.b32.xlu0 %v5023, 12
      %v5047 = vpop.permute.xlu0 %5046
      %v5048 = vsel %vm4989, %v5033, %v5035
      %v5049 = vsel %vm4989, %v5035, %v5037
      %v5050 = vsel %vm4989, %v5037, %v5039
      %v5051 = vsel %vm4989, %v5041, %v5043
      %v5052 = vsel %vm4989, %v5043, %v5045
      %v5053 = vsel %vm4989, %v5045, %v5047
      %v5060 = vadd.f32 %v4943, %v5048
      %v5061 = vadd.f32 %v4944, %v5049
      %v5062 = vadd.f32 %v4945, %v5050
      %v5063 = vadd.f32 %v4946, %v5051
      %v5064 = vadd.f32 %v4947, %v5052
      %v5065 = vadd.f32 %v4948, %v5053
      %5066 = vset.pattern.permute.xlu0 42
      %5067 = vperm.xlu0 %5066, %v454
      %v5068 = vpop.permute.xlu0 %5067
      %5070 = vset.pattern.permute.xlu0 42
      %5071 = vperm.xlu0 %5070, %v455
      %v5072 = vpop.permute.xlu0 %5071
      %v5074 = vmul.f32 %v461, %v5068
      %v5075 = vmul.f32 %v462, %v5068
      %v5076 = vmul.f32 %v463, %v5068
      %v5077 = vmul.f32 %v465, %v5072
      %v5078 = vmul.f32 %v466, %v5072
      %v5079 = vmul.f32 %v467, %v5072
      %5086 = vrot.lane.b32.xlu0 %v5074, 124
      %v5087 = vpop.permute.xlu0 %5086
      %5088 = vrot.lane.b32.xlu0 %v5075, 124
      %v5089 = vpop.permute.xlu0 %5088
      %5090 = vrot.lane.b32.xlu0 %v5076, 124
      %v5091 = vpop.permute.xlu0 %5090
      %5092 = vrot.lane.b32.xlu0 %v5077, 124
      %v5093 = vpop.permute.xlu0 %5092
      %5094 = vrot.lane.b32.xlu0 %v5078, 124
      %v5095 = vpop.permute.xlu0 %5094
      %5096 = vrot.lane.b32.xlu0 %v5079, 124
      %v5097 = vpop.permute.xlu0 %5096
      %v5098 = vsel %vm853, %v5087, %v5089
      %v5099 = vsel %vm853, %v5089, %v5091
      %v5100 = vsel %vm853, %v5093, %v5095
      %v5101 = vsel %vm853, %v5095, %v5097
      %v5108 = vadd.f32 %v5002, %v5098
      %v5109 = vadd.f32 %v5003, %v5099
      %v5110 = vadd.f32 %v5004, %v5091
      %v5111 = vadd.f32 %v5005, %v5100
      %v5112 = vadd.f32 %v5006, %v5101
      %v5113 = vadd.f32 %v5007, %v5097
      %5114 = vset.pattern.permute.xlu0 91
      %5115 = vperm.xlu0 %5114, %v454
      %v5116 = vpop.permute.xlu0 %5115
      %5118 = vset.pattern.permute.xlu0 91
      %5119 = vperm.xlu0 %5118, %v455
      %v5120 = vpop.permute.xlu0 %5119
      %v5122 = vmul.f32 %v461, %v5116
      %v5123 = vmul.f32 %v462, %v5116
      %v5124 = vmul.f32 %v463, %v5116
      %v5125 = vmul.f32 %v465, %v5120
      %v5126 = vmul.f32 %v466, %v5120
      %v5127 = vmul.f32 %v467, %v5120
      %5134 = vrot.lane.b32.xlu0 %v5122, 124
      %v5135 = vpop.permute.xlu0 %5134
      %5136 = vrot.lane.b32.xlu0 %v5123, 124
      %v5137 = vpop.permute.xlu0 %5136
      %5138 = vrot.lane.b32.xlu0 %v5124, 124
      %v5139 = vpop.permute.xlu0 %5138
      %5140 = vrot.lane.b32.xlu0 %v5125, 124
      %v5141 = vpop.permute.xlu0 %5140
      %5142 = vrot.lane.b32.xlu0 %v5126, 124
      %v5143 = vpop.permute.xlu0 %5142
      %5144 = vrot.lane.b32.xlu0 %v5127, 124
      %v5145 = vpop.permute.xlu0 %5144
      %v5146 = vsel %vm853, %v5135, %v5137
      %v5147 = vsel %vm853, %v5137, %v5139
      %v5148 = vsel %vm853, %v5141, %v5143
      %v5149 = vsel %vm853, %v5143, %v5145
      %v5156 = vadd.f32 %v5060, %v5146
      %v5157 = vadd.f32 %v5061, %v5147
      %v5158 = vadd.f32 %v5062, %v5139
      %v5159 = vadd.f32 %v5063, %v5148
      %v5160 = vadd.f32 %v5064, %v5149
      %v5161 = vadd.f32 %v5065, %v5145
      %5162 = vset.pattern.permute.xlu0 43
      %5163 = vperm.xlu0 %5162, %v454
      %v5164 = vpop.permute.xlu0 %5163
      %5166 = vset.pattern.permute.xlu0 43
      %5167 = vperm.xlu0 %5166, %v455
      %v5168 = vpop.permute.xlu0 %5167
      %v5170 = vmul.f32 %v461, %v5164
      %v5171 = vmul.f32 %v462, %v5164
      %v5172 = vmul.f32 %v463, %v5164
      %v5173 = vmul.f32 %v465, %v5168
      %v5174 = vmul.f32 %v466, %v5168
      %v5175 = vmul.f32 %v467, %v5168
      %5182 = vrot.lane.b32.xlu0 %v5170, 123
      %v5183 = vpop.permute.xlu0 %5182
      %5184 = vrot.lane.b32.xlu0 %v5171, 123
      %v5185 = vpop.permute.xlu0 %5184
      %5186 = vrot.lane.b32.xlu0 %v5172, 123
      %v5187 = vpop.permute.xlu0 %5186
      %5188 = vrot.lane.b32.xlu0 %v5173, 123
      %v5189 = vpop.permute.xlu0 %5188
      %5190 = vrot.lane.b32.xlu0 %v5174, 123
      %v5191 = vpop.permute.xlu0 %5190
      %5192 = vrot.lane.b32.xlu0 %v5175, 123
      %v5193 = vpop.permute.xlu0 %5192
      %v5194 = vsel %vm950, %v5183, %v5185
      %v5195 = vsel %vm950, %v5185, %v5187
      %v5196 = vsel %vm950, %v5189, %v5191
      %v5197 = vsel %vm950, %v5191, %v5193
      %v5204 = vadd.f32 %v5108, %v5194
      %v5205 = vadd.f32 %v5109, %v5195
      %v5206 = vadd.f32 %v5110, %v5187
      %v5207 = vadd.f32 %v5111, %v5196
      %v5208 = vadd.f32 %v5112, %v5197
      %v5209 = vadd.f32 %v5113, %v5193
      %5210 = vset.pattern.permute.xlu0 92
      %5211 = vperm.xlu0 %5210, %v454
      %v5212 = vpop.permute.xlu0 %5211
      %5214 = vset.pattern.permute.xlu0 92
      %5215 = vperm.xlu0 %5214, %v455
      %v5216 = vpop.permute.xlu0 %5215
      %v5218 = vmul.f32 %v461, %v5212
      %v5219 = vmul.f32 %v462, %v5212
      %v5220 = vmul.f32 %v463, %v5212
      %v5221 = vmul.f32 %v465, %v5216
      %v5222 = vmul.f32 %v466, %v5216
      %v5223 = vmul.f32 %v467, %v5216
      %5230 = vrot.lane.b32.xlu0 %v5218, 123
      %v5231 = vpop.permute.xlu0 %5230
      %5232 = vrot.lane.b32.xlu0 %v5219, 123
      %v5233 = vpop.permute.xlu0 %5232
      %5234 = vrot.lane.b32.xlu0 %v5220, 123
      %v5235 = vpop.permute.xlu0 %5234
      %5236 = vrot.lane.b32.xlu0 %v5221, 123
      %v5237 = vpop.permute.xlu0 %5236
      %5238 = vrot.lane.b32.xlu0 %v5222, 123
      %v5239 = vpop.permute.xlu0 %5238
      %5240 = vrot.lane.b32.xlu0 %v5223, 123
      %v5241 = vpop.permute.xlu0 %5240
      %v5242 = vsel %vm950, %v5231, %v5233
      %v5243 = vsel %vm950, %v5233, %v5235
      %v5244 = vsel %vm950, %v5237, %v5239
      %v5245 = vsel %vm950, %v5239, %v5241
      %v5252 = vadd.f32 %v5156, %v5242
      %v5253 = vadd.f32 %v5157, %v5243
      %v5254 = vadd.f32 %v5158, %v5235
      %v5255 = vadd.f32 %v5159, %v5244
      %v5256 = vadd.f32 %v5160, %v5245
      %v5257 = vadd.f32 %v5161, %v5241
      %5258 = vset.pattern.permute.xlu0 44
      %5259 = vperm.xlu0 %5258, %v454
      %v5260 = vpop.permute.xlu0 %5259
      %5262 = vset.pattern.permute.xlu0 44
      %5263 = vperm.xlu0 %5262, %v455
      %v5264 = vpop.permute.xlu0 %5263
      %v5266 = vmul.f32 %v461, %v5260
      %v5267 = vmul.f32 %v462, %v5260
      %v5268 = vmul.f32 %v463, %v5260
      %v5269 = vmul.f32 %v465, %v5264
      %v5270 = vmul.f32 %v466, %v5264
      %v5271 = vmul.f32 %v467, %v5264
      %5278 = vrot.lane.b32.xlu0 %v5266, 122
      %v5279 = vpop.permute.xlu0 %5278
      %5280 = vrot.lane.b32.xlu0 %v5267, 122
      %v5281 = vpop.permute.xlu0 %5280
      %5282 = vrot.lane.b32.xlu0 %v5268, 122
      %v5283 = vpop.permute.xlu0 %5282
      %5284 = vrot.lane.b32.xlu0 %v5269, 122
      %v5285 = vpop.permute.xlu0 %5284
      %5286 = vrot.lane.b32.xlu0 %v5270, 122
      %v5287 = vpop.permute.xlu0 %5286
      %5288 = vrot.lane.b32.xlu0 %v5271, 122
      %v5289 = vpop.permute.xlu0 %5288
      %v5290 = vsel %vm1047, %v5279, %v5281
      %v5291 = vsel %vm1047, %v5281, %v5283
      %v5292 = vsel %vm1047, %v5285, %v5287
      %v5293 = vsel %vm1047, %v5287, %v5289
      %v5300 = vadd.f32 %v5204, %v5290
      %v5301 = vadd.f32 %v5205, %v5291
      %v5302 = vadd.f32 %v5206, %v5283
      %v5303 = vadd.f32 %v5207, %v5292
      %v5304 = vadd.f32 %v5208, %v5293
      %v5305 = vadd.f32 %v5209, %v5289
      %5306 = vset.pattern.permute.xlu0 93
      %5307 = vperm.xlu0 %5306, %v454
      %v5308 = vpop.permute.xlu0 %5307
      %5310 = vset.pattern.permute.xlu0 93
      %5311 = vperm.xlu0 %5310, %v455
      %v5312 = vpop.permute.xlu0 %5311
      %v5314 = vmul.f32 %v461, %v5308
      %v5315 = vmul.f32 %v462, %v5308
      %v5316 = vmul.f32 %v463, %v5308
      %v5317 = vmul.f32 %v465, %v5312
      %v5318 = vmul.f32 %v466, %v5312
      %v5319 = vmul.f32 %v467, %v5312
      %5326 = vrot.lane.b32.xlu0 %v5314, 122
      %v5327 = vpop.permute.xlu0 %5326
      %5328 = vrot.lane.b32.xlu0 %v5315, 122
      %v5329 = vpop.permute.xlu0 %5328
      %5330 = vrot.lane.b32.xlu0 %v5316, 122
      %v5331 = vpop.permute.xlu0 %5330
      %5332 = vrot.lane.b32.xlu0 %v5317, 122
      %v5333 = vpop.permute.xlu0 %5332
      %5334 = vrot.lane.b32.xlu0 %v5318, 122
      %v5335 = vpop.permute.xlu0 %5334
      %5336 = vrot.lane.b32.xlu0 %v5319, 122
      %v5337 = vpop.permute.xlu0 %5336
      %v5338 = vsel %vm1047, %v5327, %v5329
      %v5339 = vsel %vm1047, %v5329, %v5331
      %v5340 = vsel %vm1047, %v5333, %v5335
      %v5341 = vsel %vm1047, %v5335, %v5337
      %v5348 = vadd.f32 %v5252, %v5338
      %v5349 = vadd.f32 %v5253, %v5339
      %v5350 = vadd.f32 %v5254, %v5331
      %v5351 = vadd.f32 %v5255, %v5340
      %v5352 = vadd.f32 %v5256, %v5341
      %v5353 = vadd.f32 %v5257, %v5337
      %5354 = vset.pattern.permute.xlu0 45
      %5355 = vperm.xlu0 %5354, %v454
      %v5356 = vpop.permute.xlu0 %5355
      %5358 = vset.pattern.permute.xlu0 45
      %5359 = vperm.xlu0 %5358, %v455
      %v5360 = vpop.permute.xlu0 %5359
      %v5362 = vmul.f32 %v461, %v5356
      %v5363 = vmul.f32 %v462, %v5356
      %v5364 = vmul.f32 %v463, %v5356
      %v5365 = vmul.f32 %v465, %v5360
      %v5366 = vmul.f32 %v466, %v5360
      %v5367 = vmul.f32 %v467, %v5360
      %5374 = vrot.lane.b32.xlu0 %v5362, 121
      %v5375 = vpop.permute.xlu0 %5374
      %5376 = vrot.lane.b32.xlu0 %v5363, 121
      %v5377 = vpop.permute.xlu0 %5376
      %5378 = vrot.lane.b32.xlu0 %v5364, 121
      %v5379 = vpop.permute.xlu0 %5378
      %5380 = vrot.lane.b32.xlu0 %v5365, 121
      %v5381 = vpop.permute.xlu0 %5380
      %5382 = vrot.lane.b32.xlu0 %v5366, 121
      %v5383 = vpop.permute.xlu0 %5382
      %5384 = vrot.lane.b32.xlu0 %v5367, 121
      %v5385 = vpop.permute.xlu0 %5384
      %vm5386 = vcmask 990208
      %v5387 = vsel %vm5386, %v5375, %v5377
      %v5388 = vsel %vm5386, %v5377, %v5379
      %v5389 = vsel %vm5386, %v5381, %v5383
      %v5390 = vsel %vm5386, %v5383, %v5385
      %v5397 = vadd.f32 %v5300, %v5387
      %v5398 = vadd.f32 %v5301, %v5388
      %v5399 = vadd.f32 %v5302, %v5379
      %v5400 = vadd.f32 %v5303, %v5389
      %v5401 = vadd.f32 %v5304, %v5390
      %v5402 = vadd.f32 %v5305, %v5385
      %5403 = vset.pattern.permute.xlu0 94
      %5404 = vperm.xlu0 %5403, %v454
      %v5405 = vpop.permute.xlu0 %5404
      %5407 = vset.pattern.permute.xlu0 94
      %5408 = vperm.xlu0 %5407, %v455
      %v5409 = vpop.permute.xlu0 %5408
      %v5411 = vmul.f32 %v461, %v5405
      %v5412 = vmul.f32 %v462, %v5405
      %v5413 = vmul.f32 %v463, %v5405
      %v5414 = vmul.f32 %v465, %v5409
      %v5415 = vmul.f32 %v466, %v5409
      %v5416 = vmul.f32 %v467, %v5409
      %5423 = vrot.lane.b32.xlu0 %v5411, 121
      %v5424 = vpop.permute.xlu0 %5423
      %5425 = vrot.lane.b32.xlu0 %v5412, 121
      %v5426 = vpop.permute.xlu0 %5425
      %5427 = vrot.lane.b32.xlu0 %v5413, 121
      %v5428 = vpop.permute.xlu0 %5427
      %5429 = vrot.lane.b32.xlu0 %v5414, 121
      %v5430 = vpop.permute.xlu0 %5429
      %5431 = vrot.lane.b32.xlu0 %v5415, 121
      %v5432 = vpop.permute.xlu0 %5431
      %5433 = vrot.lane.b32.xlu0 %v5416, 121
      %v5434 = vpop.permute.xlu0 %5433
      %v5435 = vsel %vm5386, %v5424, %v5426
      %v5436 = vsel %vm5386, %v5426, %v5428
      %v5437 = vsel %vm5386, %v5430, %v5432
      %v5438 = vsel %vm5386, %v5432, %v5434
      %v5445 = vadd.f32 %v5348, %v5435
      %v5446 = vadd.f32 %v5349, %v5436
      %v5447 = vadd.f32 %v5350, %v5428
      %v5448 = vadd.f32 %v5351, %v5437
      %v5449 = vadd.f32 %v5352, %v5438
      %v5450 = vadd.f32 %v5353, %v5434
      %5451 = vset.pattern.permute.xlu0 46
      %5452 = vperm.xlu0 %5451, %v454
      %v5453 = vpop.permute.xlu0 %5452
      %5455 = vset.pattern.permute.xlu0 46
      %5456 = vperm.xlu0 %5455, %v455
      %v5457 = vpop.permute.xlu0 %5456
      %v5459 = vmul.f32 %v461, %v5453
      %v5460 = vmul.f32 %v462, %v5453
      %v5461 = vmul.f32 %v463, %v5453
      %v5462 = vmul.f32 %v465, %v5457
      %v5463 = vmul.f32 %v466, %v5457
      %v5464 = vmul.f32 %v467, %v5457
      %5471 = vrot.lane.b32.xlu0 %v5459, 120
      %v5472 = vpop.permute.xlu0 %5471
      %5473 = vrot.lane.b32.xlu0 %v5460, 120
      %v5474 = vpop.permute.xlu0 %5473
      %5475 = vrot.lane.b32.xlu0 %v5461, 120
      %v5476 = vpop.permute.xlu0 %5475
      %5477 = vrot.lane.b32.xlu0 %v5462, 120
      %v5478 = vpop.permute.xlu0 %5477
      %5479 = vrot.lane.b32.xlu0 %v5463, 120
      %v5480 = vpop.permute.xlu0 %5479
      %5481 = vrot.lane.b32.xlu0 %v5464, 120
      %v5482 = vpop.permute.xlu0 %5481
      %vm5483 = vcmask 982016
      %v5484 = vsel %vm5483, %v5472, %v5474
      %v5485 = vsel %vm5483, %v5474, %v5476
      %v5486 = vsel %vm5483, %v5478, %v5480
      %v5487 = vsel %vm5483, %v5480, %v5482
      %v5494 = vadd.f32 %v5397, %v5484
      %v5495 = vadd.f32 %v5398, %v5485
      %v5496 = vadd.f32 %v5399, %v5476
      %v5497 = vadd.f32 %v5400, %v5486
      %v5498 = vadd.f32 %v5401, %v5487
      %v5499 = vadd.f32 %v5402, %v5482
      %5500 = vset.pattern.permute.xlu0 95
      %5501 = vperm.xlu0 %5500, %v454
      %v5502 = vpop.permute.xlu0 %5501
      %5504 = vset.pattern.permute.xlu0 95
      %5505 = vperm.xlu0 %5504, %v455
      %v5506 = vpop.permute.xlu0 %5505
      %v5508 = vmul.f32 %v461, %v5502
      %v5509 = vmul.f32 %v462, %v5502
      %v5510 = vmul.f32 %v463, %v5502
      %v5511 = vmul.f32 %v465, %v5506
      %v5512 = vmul.f32 %v466, %v5506
      %v5513 = vmul.f32 %v467, %v5506
      %5520 = vrot.lane.b32.xlu0 %v5508, 120
      %v5521 = vpop.permute.xlu0 %5520
      %5522 = vrot.lane.b32.xlu0 %v5509, 120
      %v5523 = vpop.permute.xlu0 %5522
      %5524 = vrot.lane.b32.xlu0 %v5510, 120
      %v5525 = vpop.permute.xlu0 %5524
      %5526 = vrot.lane.b32.xlu0 %v5511, 120
      %v5527 = vpop.permute.xlu0 %5526
      %5528 = vrot.lane.b32.xlu0 %v5512, 120
      %v5529 = vpop.permute.xlu0 %5528
      %5530 = vrot.lane.b32.xlu0 %v5513, 120
      %v5531 = vpop.permute.xlu0 %5530
      %v5532 = vsel %vm5483, %v5521, %v5523
      %v5533 = vsel %vm5483, %v5523, %v5525
      %v5534 = vsel %vm5483, %v5527, %v5529
      %v5535 = vsel %vm5483, %v5529, %v5531
      %v5542 = vadd.f32 %v5445, %v5532
      %v5543 = vadd.f32 %v5446, %v5533
      %v5544 = vadd.f32 %v5447, %v5525
      %v5545 = vadd.f32 %v5448, %v5534
      %v5546 = vadd.f32 %v5449, %v5535
      %v5547 = vadd.f32 %v5450, %v5531
      %5548 = vset.pattern.permute.xlu0 47
      %5549 = vperm.xlu0 %5548, %v454
      %v5550 = vpop.permute.xlu0 %5549
      %5552 = vset.pattern.permute.xlu0 47
      %5553 = vperm.xlu0 %5552, %v455
      %v5554 = vpop.permute.xlu0 %5553
      %v5556 = vmul.f32 %v461, %v5550
      %v5557 = vmul.f32 %v462, %v5550
      %v5558 = vmul.f32 %v463, %v5550
      %v5559 = vmul.f32 %v465, %v5554
      %v5560 = vmul.f32 %v466, %v5554
      %v5561 = vmul.f32 %v467, %v5554
      %5568 = vrot.lane.b32.xlu0 %v5556, 119
      %v5569 = vpop.permute.xlu0 %5568
      %5570 = vrot.lane.b32.xlu0 %v5557, 119
      %v5571 = vpop.permute.xlu0 %5570
      %5572 = vrot.lane.b32.xlu0 %v5558, 119
      %v5573 = vpop.permute.xlu0 %5572
      %5574 = vrot.lane.b32.xlu0 %v5559, 119
      %v5575 = vpop.permute.xlu0 %5574
      %5576 = vrot.lane.b32.xlu0 %v5560, 119
      %v5577 = vpop.permute.xlu0 %5576
      %5578 = vrot.lane.b32.xlu0 %v5561, 119
      %v5579 = vpop.permute.xlu0 %5578
      %vm5580 = vcmask 973824
      %v5581 = vsel %vm5580, %v5569, %v5571
      %v5582 = vsel %vm5580, %v5571, %v5573
      %v5583 = vsel %vm5580, %v5575, %v5577
      %v5584 = vsel %vm5580, %v5577, %v5579
      %v5591 = vadd.f32 %v5494, %v5581
      %v5592 = vadd.f32 %v5495, %v5582
      %v5593 = vadd.f32 %v5496, %v5573
      %v5594 = vadd.f32 %v5497, %v5583
      %v5595 = vadd.f32 %v5498, %v5584
      %v5596 = vadd.f32 %v5499, %v5579
      %5597 = vset.pattern.permute.xlu0 96
      %5598 = vperm.xlu0 %5597, %v454
      %v5599 = vpop.permute.xlu0 %5598
      %5601 = vset.pattern.permute.xlu0 96
      %5602 = vperm.xlu0 %5601, %v455
      %v5603 = vpop.permute.xlu0 %5602
      %v5605 = vmul.f32 %v461, %v5599
      %v5606 = vmul.f32 %v462, %v5599
      %v5607 = vmul.f32 %v463, %v5599
      %v5608 = vmul.f32 %v465, %v5603
      %v5609 = vmul.f32 %v466, %v5603
      %v5610 = vmul.f32 %v467, %v5603
      %5617 = vrot.lane.b32.xlu0 %v5605, 119
      %v5618 = vpop.permute.xlu0 %5617
      %5619 = vrot.lane.b32.xlu0 %v5606, 119
      %v5620 = vpop.permute.xlu0 %5619
      %5621 = vrot.lane.b32.xlu0 %v5607, 119
      %v5622 = vpop.permute.xlu0 %5621
      %5623 = vrot.lane.b32.xlu0 %v5608, 119
      %v5624 = vpop.permute.xlu0 %5623
      %5625 = vrot.lane.b32.xlu0 %v5609, 119
      %v5626 = vpop.permute.xlu0 %5625
      %5627 = vrot.lane.b32.xlu0 %v5610, 119
      %v5628 = vpop.permute.xlu0 %5627
      %v5629 = vsel %vm5580, %v5618, %v5620
      %v5630 = vsel %vm5580, %v5620, %v5622
      %v5631 = vsel %vm5580, %v5624, %v5626
      %v5632 = vsel %vm5580, %v5626, %v5628
      %v5639 = vadd.f32 %v5542, %v5629
      %v5640 = vadd.f32 %v5543, %v5630
      %v5641 = vadd.f32 %v5544, %v5622
      %v5642 = vadd.f32 %v5545, %v5631
      %v5643 = vadd.f32 %v5546, %v5632
      %v5644 = vadd.f32 %v5547, %v5628
      %5645 = vset.pattern.permute.xlu0 48
      %5646 = vperm.xlu0 %5645, %v454
      %v5647 = vpop.permute.xlu0 %5646
      %5649 = vset.pattern.permute.xlu0 48
      %5650 = vperm.xlu0 %5649, %v455
      %v5651 = vpop.permute.xlu0 %5650
      %v5653 = vmul.f32 %v461, %v5647
      %v5654 = vmul.f32 %v462, %v5647
      %v5655 = vmul.f32 %v463, %v5647
      %v5656 = vmul.f32 %v465, %v5651
      %v5657 = vmul.f32 %v466, %v5651
      %v5658 = vmul.f32 %v467, %v5651
      %5665 = vrot.lane.b32.xlu0 %v5653, 118
      %v5666 = vpop.permute.xlu0 %5665
      %5667 = vrot.lane.b32.xlu0 %v5654, 118
      %v5668 = vpop.permute.xlu0 %5667
      %5669 = vrot.lane.b32.xlu0 %v5655, 118
      %v5670 = vpop.permute.xlu0 %5669
      %5671 = vrot.lane.b32.xlu0 %v5656, 118
      %v5672 = vpop.permute.xlu0 %5671
      %5673 = vrot.lane.b32.xlu0 %v5657, 118
      %v5674 = vpop.permute.xlu0 %5673
      %5675 = vrot.lane.b32.xlu0 %v5658, 118
      %v5676 = vpop.permute.xlu0 %5675
      %vm5677 = vcmask 965632
      %v5678 = vsel %vm5677, %v5666, %v5668
      %v5679 = vsel %vm5677, %v5668, %v5670
      %v5680 = vsel %vm5677, %v5672, %v5674
      %v5681 = vsel %vm5677, %v5674, %v5676
      %v5688 = vadd.f32 %v5591, %v5678
      %v5689 = vadd.f32 %v5592, %v5679
      %v5690 = vadd.f32 %v5593, %v5670
      %v5691 = vadd.f32 %v5594, %v5680
      %v5692 = vadd.f32 %v5595, %v5681
      %v5693 = vadd.f32 %v5596, %v5676
      %5694 = vset.pattern.permute.xlu0 97
      %5695 = vperm.xlu0 %5694, %v454
      %v5696 = vpop.permute.xlu0 %5695
      %5698 = vset.pattern.permute.xlu0 97
      %5699 = vperm.xlu0 %5698, %v455
      %v5700 = vpop.permute.xlu0 %5699
      %v5702 = vmul.f32 %v461, %v5696
      %v5703 = vmul.f32 %v462, %v5696
      %v5704 = vmul.f32 %v463, %v5696
      %v5705 = vmul.f32 %v465, %v5700
      %v5706 = vmul.f32 %v466, %v5700
      %v5707 = vmul.f32 %v467, %v5700
      %5714 = vrot.lane.b32.xlu0 %v5702, 118
      %v5715 = vpop.permute.xlu0 %5714
      %5716 = vrot.lane.b32.xlu0 %v5703, 118
      %v5717 = vpop.permute.xlu0 %5716
      %5718 = vrot.lane.b32.xlu0 %v5704, 118
      %v5719 = vpop.permute.xlu0 %5718
      %5720 = vrot.lane.b32.xlu0 %v5705, 118
      %v5721 = vpop.permute.xlu0 %5720
      %5722 = vrot.lane.b32.xlu0 %v5706, 118
      %v5723 = vpop.permute.xlu0 %5722
      %5724 = vrot.lane.b32.xlu0 %v5707, 118
      %v5725 = vpop.permute.xlu0 %5724
      %v5726 = vsel %vm5677, %v5715, %v5717
      %v5727 = vsel %vm5677, %v5717, %v5719
      %v5728 = vsel %vm5677, %v5721, %v5723
      %v5729 = vsel %vm5677, %v5723, %v5725
      %v5736 = vadd.f32 %v5639, %v5726
      %v5737 = vadd.f32 %v5640, %v5727
      %v5738 = vadd.f32 %v5641, %v5719
      %v5739 = vadd.f32 %v5642, %v5728
      %v5740 = vadd.f32 %v5643, %v5729
      %v5741 = vadd.f32 %v5644, %v5725
      %v5742 = vmul.f32 %v5688, 0.70710677
      %v5743 = vmul.f32 %v5689, 0.70710677
      %v5744 = vmul.f32 %v5690, 0.70710677
      %v5745 = vmul.f32 %v5691, 0.70710677
      %v5746 = vmul.f32 %v5692, 0.70710677
      %v5747 = vmul.f32 %v5693, 0.70710677
      %v5748 = vand.u32 2147483647, %v5742
      %v5749 = vand.u32 2147483647, %v5743
      %v5750 = vand.u32 2147483647, %v5744
      %v5751 = vand.u32 2147483647, %v5745
      %v5752 = vand.u32 2147483647, %v5746
      %v5753 = vand.u32 2147483647, %v5747
      %v5754 = vmul.f32 %v5748, 0.3275911
      %v5755 = vmul.f32 %v5749, 0.3275911
      %v5756 = vmul.f32 %v5750, 0.3275911
      %v5757 = vmul.f32 %v5751, 0.3275911
      %v5758 = vmul.f32 %v5752, 0.3275911
      %v5759 = vmul.f32 %v5753, 0.3275911
      %v5760 = vadd.f32 %v5754, 1.0
      %v5761 = vadd.f32 %v5755, 1.0
      %v5762 = vadd.f32 %v5756, 1.0
      %v5763 = vadd.f32 %v5757, 1.0
      %v5764 = vadd.f32 %v5758, 1.0
      %v5765 = vadd.f32 %v5759, 1.0
      %v5766 = vrcp.pop %v5760
      %v5767 = vmul.f32 %v5760, %v5766
      %v5768 = vsub.f32 1.0, %v5767
      %v5769 = vmul.f32 %v5766, %v5768
      %v5770 = vadd.f32 %v5766, %v5769
      %vm5771 = vweird.f32 %v5760
      %vm5772 = vweird.f32 %v5766
      %vm5773 = vmor %vm5771, %vm5772
      %v5774 = vsel %vm5773, %v5766, %v5770
      %v5775 = vand.u32 2147483647, %v5760
      %vm5776 = vcmp.eq.f32.partialorder %v5775, 8.507059e+37
      %v5777 = vand.u32 %v5760, 2147483648
      %v5778 = vor.u32 1.1754944e-38, %v5777
      %v5779 = vsel %vm5776, %v5778, %v5774
      %v5780 = vmul.f32 1.0, %v5779
      %v5781 = vrcp.pop %v5761
      %v5782 = vmul.f32 %v5761, %v5781
      %v5783 = vsub.f32 1.0, %v5782
      %v5784 = vmul.f32 %v5781, %v5783
      %v5785 = vadd.f32 %v5781, %v5784
      %vm5786 = vweird.f32 %v5761
      %vm5787 = vweird.f32 %v5781
      %vm5788 = vmor %vm5786, %vm5787
      %v5789 = vsel %vm5788, %v5781, %v5785
      %v5790 = vand.u32 2147483647, %v5761
      %vm5791 = vcmp.eq.f32.partialorder %v5790, 8.507059e+37
      %v5792 = vand.u32 %v5761, 2147483648
      %v5793 = vor.u32 1.1754944e-38, %v5792
      %v5794 = vsel %vm5791, %v5793, %v5789
      %v5795 = vmul.f32 1.0, %v5794
      %v5796 = vrcp.pop %v5762
      %v5797 = vmul.f32 %v5762, %v5796
      %v5798 = vsub.f32 1.0, %v5797
      %v5799 = vmul.f32 %v5796, %v5798
      %v5800 = vadd.f32 %v5796, %v5799
      %vm5801 = vweird.f32 %v5762
      %vm5802 = vweird.f32 %v5796
      %vm5803 = vmor %vm5801, %vm5802
      %v5804 = vsel %vm5803, %v5796, %v5800
      %v5805 = vand.u32 2147483647, %v5762
      %vm5806 = vcmp.eq.f32.partialorder %v5805, 8.507059e+37
      %v5807 = vand.u32 %v5762, 2147483648
      %v5808 = vor.u32 1.1754944e-38, %v5807
      %v5809 = vsel %vm5806, %v5808, %v5804
      %v5810 = vmul.f32 1.0, %v5809
      %v5811 = vrcp.pop %v5763
      %v5812 = vmul.f32 %v5763, %v5811
      %v5813 = vsub.f32 1.0, %v5812
      %v5814 = vmul.f32 %v5811, %v5813
      %v5815 = vadd.f32 %v5811, %v5814
      %vm5816 = vweird.f32 %v5763
      %vm5817 = vweird.f32 %v5811
      %vm5818 = vmor %vm5816, %vm5817
      %v5819 = vsel %vm5818, %v5811, %v5815
      %v5820 = vand.u32 2147483647, %v5763
      %vm5821 = vcmp.eq.f32.partialorder %v5820, 8.507059e+37
      %v5822 = vand.u32 %v5763, 2147483648
      %v5823 = vor.u32 1.1754944e-38, %v5822
      %v5824 = vsel %vm5821, %v5823, %v5819
      %v5825 = vmul.f32 1.0, %v5824
      %v5826 = vrcp.pop %v5764
      %v5827 = vmul.f32 %v5764, %v5826
      %v5828 = vsub.f32 1.0, %v5827
      %v5829 = vmul.f32 %v5826, %v5828
      %v5830 = vadd.f32 %v5826, %v5829
      %vm5831 = vweird.f32 %v5764
      %vm5832 = vweird.f32 %v5826
      %vm5833 = vmor %vm5831, %vm5832
      %v5834 = vsel %vm5833, %v5826, %v5830
      %v5835 = vand.u32 2147483647, %v5764
      %vm5836 = vcmp.eq.f32.partialorder %v5835, 8.507059e+37
      %v5837 = vand.u32 %v5764, 2147483648
      %v5838 = vor.u32 1.1754944e-38, %v5837
      %v5839 = vsel %vm5836, %v5838, %v5834
      %v5840 = vmul.f32 1.0, %v5839
      %v5841 = vrcp.pop %v5765
      %v5842 = vmul.f32 %v5765, %v5841
      %v5843 = vsub.f32 1.0, %v5842
      %v5844 = vmul.f32 %v5841, %v5843
      %v5845 = vadd.f32 %v5841, %v5844
      %vm5846 = vweird.f32 %v5765
      %vm5847 = vweird.f32 %v5841
      %vm5848 = vmor %vm5846, %vm5847
      %v5849 = vsel %vm5848, %v5841, %v5845
      %v5850 = vand.u32 2147483647, %v5765
      %vm5851 = vcmp.eq.f32.partialorder %v5850, 8.507059e+37
      %v5852 = vand.u32 %v5765, 2147483648
      %v5853 = vor.u32 1.1754944e-38, %v5852
      %v5854 = vsel %vm5851, %v5853, %v5849
      %v5855 = vmul.f32 1.0, %v5854
      %v5856 = vmul.f32 %v5780, 1.0614054
      %v5857 = vmul.f32 %v5795, 1.0614054
      %v5858 = vmul.f32 %v5810, 1.0614054
      %v5859 = vmul.f32 %v5825, 1.0614054
      %v5860 = vmul.f32 %v5840, 1.0614054
      %v5861 = vmul.f32 %v5855, 1.0614054
      %v5862 = vsub.f32 %v5856, 1.4531521
      %v5863 = vsub.f32 %v5857, 1.4531521
      %v5864 = vsub.f32 %v5858, 1.4531521
      %v5865 = vsub.f32 %v5859, 1.4531521
      %v5866 = vsub.f32 %v5860, 1.4531521
      %v5867 = vsub.f32 %v5861, 1.4531521
      %v5868 = vmul.f32 %v5862, %v5780
      %v5869 = vmul.f32 %v5863, %v5795
      %v5870 = vmul.f32 %v5864, %v5810
      %v5871 = vmul.f32 %v5865, %v5825
      %v5872 = vmul.f32 %v5866, %v5840
      %v5873 = vmul.f32 %v5867, %v5855
      %v5874 = vadd.f32 %v5868, 1.4214138
      %v5875 = vadd.f32 %v5869, 1.4214138
      %v5876 = vadd.f32 %v5870, 1.4214138
      %v5877 = vadd.f32 %v5871, 1.4214138
      %v5878 = vadd.f32 %v5872, 1.4214138
      %v5879 = vadd.f32 %v5873, 1.4214138
      %v5880 = vmul.f32 %v5874, %v5780
      %v5881 = vmul.f32 %v5875, %v5795
      %v5882 = vmul.f32 %v5876, %v5810
      %v5883 = vmul.f32 %v5877, %v5825
      %v5884 = vmul.f32 %v5878, %v5840
      %v5885 = vmul.f32 %v5879, %v5855
      %v5886 = vsub.f32 %v5880, 0.28449672
      %v5887 = vsub.f32 %v5881, 0.28449672
      %v5888 = vsub.f32 %v5882, 0.28449672
      %v5889 = vsub.f32 %v5883, 0.28449672
      %v5890 = vsub.f32 %v5884, 0.28449672
      %v5891 = vsub.f32 %v5885, 0.28449672
      %v5892 = vmul.f32 %v5886, %v5780
      %v5893 = vmul.f32 %v5887, %v5795
      %v5894 = vmul.f32 %v5888, %v5810
      %v5895 = vmul.f32 %v5889, %v5825
      %v5896 = vmul.f32 %v5890, %v5840
      %v5897 = vmul.f32 %v5891, %v5855
      %v5898 = vadd.f32 %v5892, 0.2548296
      %v5899 = vadd.f32 %v5893, 0.2548296
      %v5900 = vadd.f32 %v5894, 0.2548296
      %v5901 = vadd.f32 %v5895, 0.2548296
      %v5902 = vadd.f32 %v5896, 0.2548296
      %v5903 = vadd.f32 %v5897, 0.2548296
      %v5904 = vmul.f32 %v5898, %v5780
      %v5905 = vmul.f32 %v5899, %v5795
      %v5906 = vmul.f32 %v5900, %v5810
      %v5907 = vmul.f32 %v5901, %v5825
      %v5908 = vmul.f32 %v5902, %v5840
      %v5909 = vmul.f32 %v5903, %v5855
      %v5910 = vsub.f32 0.0, %v5748
      %v5911 = vsub.f32 0.0, %v5749
      %v5912 = vsub.f32 0.0, %v5750
      %v5913 = vsub.f32 0.0, %v5751
      %v5914 = vsub.f32 0.0, %v5752
      %v5915 = vsub.f32 0.0, %v5753
      %v5916 = vmul.f32 %v5910, %v5748
      %v5917 = vmul.f32 %v5911, %v5749
      %v5918 = vmul.f32 %v5912, %v5750
      %v5919 = vmul.f32 %v5913, %v5751
      %v5920 = vmul.f32 %v5914, %v5752
      %v5921 = vmul.f32 %v5915, %v5753
      %v5922 = vmul.f32 %v5916, 1.442695
      %v5923 = vpow.pop %v5922
      %v5924 = vmul.f32 %v5917, 1.442695
      %v5925 = vpow.pop %v5924
      %v5926 = vmul.f32 %v5918, 1.442695
      %v5927 = vpow.pop %v5926
      %v5928 = vmul.f32 %v5919, 1.442695
      %v5929 = vpow.pop %v5928
      %v5930 = vmul.f32 %v5920, 1.442695
      %v5931 = vpow.pop %v5930
      %v5932 = vmul.f32 %v5921, 1.442695
      %v5933 = vpow.pop %v5932
      %v5934 = vmul.f32 %v5904, %v5923
      %v5935 = vmul.f32 %v5905, %v5925
      %v5936 = vmul.f32 %v5906, %v5927
      %v5937 = vmul.f32 %v5907, %v5929
      %v5938 = vmul.f32 %v5908, %v5931
      %v5939 = vmul.f32 %v5909, %v5933
      %v5940 = vsub.f32 1.0, %v5934
      %v5941 = vsub.f32 1.0, %v5935
      %v5942 = vsub.f32 1.0, %v5936
      %v5943 = vsub.f32 1.0, %v5937
      %v5944 = vsub.f32 1.0, %v5938
      %v5945 = vsub.f32 1.0, %v5939
      %vm5946 = vcmp.ge.f32.partialorder %v5742, 0.0
      %vm5947 = vcmp.ge.f32.partialorder %v5743, 0.0
      %vm5948 = vcmp.ge.f32.partialorder %v5744, 0.0
      %vm5949 = vcmp.ge.f32.partialorder %v5745, 0.0
      %vm5950 = vcmp.ge.f32.partialorder %v5746, 0.0
      %vm5951 = vcmp.ge.f32.partialorder %v5747, 0.0
      %v5952 = vsub.f32 0.0, %v5940
      %v5953 = vsub.f32 0.0, %v5941
      %v5954 = vsub.f32 0.0, %v5942
      %v5955 = vsub.f32 0.0, %v5943
      %v5956 = vsub.f32 0.0, %v5944
      %v5957 = vsub.f32 0.0, %v5945
      %v5958 = vsel %vm5946, %v5940, %v5952
      %v5959 = vsel %vm5947, %v5941, %v5953
      %v5960 = vsel %vm5948, %v5942, %v5954
      %v5961 = vsel %vm5949, %v5943, %v5955
      %v5962 = vsel %vm5950, %v5944, %v5956
      %v5963 = vsel %vm5951, %v5945, %v5957
      %v5964 = vmul.f32 %v5688, 0.5
      %v5965 = vmul.f32 %v5689, 0.5
      %v5966 = vmul.f32 %v5690, 0.5
      %v5967 = vmul.f32 %v5691, 0.5
      %v5968 = vmul.f32 %v5692, 0.5
      %v5969 = vmul.f32 %v5693, 0.5
      %v5970 = vadd.f32 %v5958, 1.0
      %v5971 = vadd.f32 %v5959, 1.0
      %v5972 = vadd.f32 %v5960, 1.0
      %v5973 = vadd.f32 %v5961, 1.0
      %v5974 = vadd.f32 %v5962, 1.0
      %v5975 = vadd.f32 %v5963, 1.0
      %v5976 = vmul.f32 %v5964, %v5970
      %v5977 = vmul.f32 %v5965, %v5971
      %v5978 = vmul.f32 %v5966, %v5972
      %v5979 = vmul.f32 %v5967, %v5973
      %v5980 = vmul.f32 %v5968, %v5974
      %v5981 = vmul.f32 %v5969, %v5975
      %v5982 = vsub.f32 0.0, %v5736
      %v5983 = vsub.f32 0.0, %v5737
      %v5984 = vsub.f32 0.0, %v5738
      %v5985 = vsub.f32 0.0, %v5739
      %v5986 = vsub.f32 0.0, %v5740
      %v5987 = vsub.f32 0.0, %v5741
      %v5988 = vmul.f32 %v5982, 1.442695
      %v5989 = vpow.pop %v5988
      %v5990 = vmul.f32 %v5983, 1.442695
      %v5991 = vpow.pop %v5990
      %v5992 = vmul.f32 %v5984, 1.442695
      %v5993 = vpow.pop %v5992
      %v5994 = vmul.f32 %v5985, 1.442695
      %v5995 = vpow.pop %v5994
      %v5996 = vmul.f32 %v5986, 1.442695
      %v5997 = vpow.pop %v5996
      %v5998 = vmul.f32 %v5987, 1.442695
      %v5999 = vpow.pop %v5998
      %v6000 = vadd.f32 %v5989, 1.0
      %v6001 = vadd.f32 %v5991, 1.0
      %v6002 = vadd.f32 %v5993, 1.0
      %v6003 = vadd.f32 %v5995, 1.0
      %v6004 = vadd.f32 %v5997, 1.0
      %v6005 = vadd.f32 %v5999, 1.0
      %v6006 = vrcp.pop %v6000
      %v6007 = vmul.f32 %v6000, %v6006
      %v6008 = vsub.f32 1.0, %v6007
      %v6009 = vmul.f32 %v6006, %v6008
      %v6010 = vadd.f32 %v6006, %v6009
      %vm6011 = vweird.f32 %v6000
      %vm6012 = vweird.f32 %v6006
      %vm6013 = vmor %vm6011, %vm6012
      %v6014 = vsel %vm6013, %v6006, %v6010
      %v6015 = vand.u32 2147483647, %v6000
      %vm6016 = vcmp.eq.f32.partialorder %v6015, 8.507059e+37
      %v6017 = vand.u32 %v6000, 2147483648
      %v6018 = vor.u32 1.1754944e-38, %v6017
      %v6019 = vsel %vm6016, %v6018, %v6014
      %v6020 = vmul.f32 1.0, %v6019
      %v6021 = vrcp.pop %v6001
      %v6022 = vmul.f32 %v6001, %v6021
      %v6023 = vsub.f32 1.0, %v6022
      %v6024 = vmul.f32 %v6021, %v6023
      %v6025 = vadd.f32 %v6021, %v6024
      %vm6026 = vweird.f32 %v6001
      %vm6027 = vweird.f32 %v6021
      %vm6028 = vmor %vm6026, %vm6027
      %v6029 = vsel %vm6028, %v6021, %v6025
      %v6030 = vand.u32 2147483647, %v6001
      %vm6031 = vcmp.eq.f32.partialorder %v6030, 8.507059e+37
      %v6032 = vand.u32 %v6001, 2147483648
      %v6033 = vor.u32 1.1754944e-38, %v6032
      %v6034 = vsel %vm6031, %v6033, %v6029
      %v6035 = vmul.f32 1.0, %v6034
      %v6036 = vrcp.pop %v6002
      %v6037 = vmul.f32 %v6002, %v6036
      %v6038 = vsub.f32 1.0, %v6037
      %v6039 = vmul.f32 %v6036, %v6038
      %v6040 = vadd.f32 %v6036, %v6039
      %vm6041 = vweird.f32 %v6002
      %vm6042 = vweird.f32 %v6036
      %vm6043 = vmor %vm6041, %vm6042
      %v6044 = vsel %vm6043, %v6036, %v6040
      %v6045 = vand.u32 2147483647, %v6002
      %vm6046 = vcmp.eq.f32.partialorder %v6045, 8.507059e+37
      %v6047 = vand.u32 %v6002, 2147483648
      %v6048 = vor.u32 1.1754944e-38, %v6047
      %v6049 = vsel %vm6046, %v6048, %v6044
      %v6050 = vmul.f32 1.0, %v6049
      %v6051 = vrcp.pop %v6003
      %v6052 = vmul.f32 %v6003, %v6051
      %v6053 = vsub.f32 1.0, %v6052
      %v6054 = vmul.f32 %v6051, %v6053
      %v6055 = vadd.f32 %v6051, %v6054
      %vm6056 = vweird.f32 %v6003
      %vm6057 = vweird.f32 %v6051
      %vm6058 = vmor %vm6056, %vm6057
      %v6059 = vsel %vm6058, %v6051, %v6055
      %v6060 = vand.u32 2147483647, %v6003
      %vm6061 = vcmp.eq.f32.partialorder %v6060, 8.507059e+37
      %v6062 = vand.u32 %v6003, 2147483648
      %v6063 = vor.u32 1.1754944e-38, %v6062
      %v6064 = vsel %vm6061, %v6063, %v6059
      %v6065 = vmul.f32 1.0, %v6064
      %v6066 = vrcp.pop %v6004
      %v6067 = vmul.f32 %v6004, %v6066
      %v6068 = vsub.f32 1.0, %v6067
      %v6069 = vmul.f32 %v6066, %v6068
      %v6070 = vadd.f32 %v6066, %v6069
      %vm6071 = vweird.f32 %v6004
      %vm6072 = vweird.f32 %v6066
      %vm6073 = vmor %vm6071, %vm6072
      %v6074 = vsel %vm6073, %v6066, %v6070
      %v6075 = vand.u32 2147483647, %v6004
      %vm6076 = vcmp.eq.f32.partialorder %v6075, 8.507059e+37
      %v6077 = vand.u32 %v6004, 2147483648
      %v6078 = vor.u32 1.1754944e-38, %v6077
      %v6079 = vsel %vm6076, %v6078, %v6074
      %v6080 = vmul.f32 1.0, %v6079
      %v6081 = vrcp.pop %v6005
      %v6082 = vmul.f32 %v6005, %v6081
      %v6083 = vsub.f32 1.0, %v6082
      %v6084 = vmul.f32 %v6081, %v6083
      %v6085 = vadd.f32 %v6081, %v6084
      %vm6086 = vweird.f32 %v6005
      %vm6087 = vweird.f32 %v6081
      %vm6088 = vmor %vm6086, %vm6087
      %v6089 = vsel %vm6088, %v6081, %v6085
      %v6090 = vand.u32 2147483647, %v6005
      %vm6091 = vcmp.eq.f32.partialorder %v6090, 8.507059e+37
      %v6092 = vand.u32 %v6005, 2147483648
      %v6093 = vor.u32 1.1754944e-38, %v6092
      %v6094 = vsel %vm6091, %v6093, %v6089
      %v6095 = vmul.f32 1.0, %v6094
      %v6096 = vmul.f32 %v5976, %v6020
      %v6097 = vmul.f32 %v5977, %v6035
      %v6098 = vmul.f32 %v5978, %v6050
      %v6099 = vmul.f32 %v5979, %v6065
      %v6100 = vmul.f32 %v5980, %v6080
      %v6101 = vmul.f32 %v5981, %v6095
      %6103 = vset.pattern.permute.xlu0 0
      %6104 = vperm.xlu0 %6103, %v458
      %v6105 = vpop.permute.xlu0 %6104
      %6108 = vset.pattern.permute.xlu0 0
      %6109 = vperm.xlu0 %6108, %v459
      %v6110 = vpop.permute.xlu0 %6109
      %v6113 = vsel %vm328, %v456, 0
      %v6116 = vsel %vm328, %v457, 0
      %6118 = vmatpush.msra.mxu0 0.0
      %6119 = vmatpush.msra.mxu0 0.0
      %6120 = vmatpush.msra.mxu0 0.0
      %6121 = vmatpush.msra.mxu0 0.0
      %6122 = vmatpush.msra.mxu0 0.0
      %6123 = vmatpush.msra.mxu0 0.0
      %6124 = vmatpush.msra.mxu0 0.0
      %6125 = vmatpush.msra.mxu0 0.0
      %6126 = vmatpush.msra.mxu0 0.0
      %6127 = vmatpush.msra.mxu0 0.0
      %6128 = vmatpush.msra.mxu0 0.0
      %6129 = vmatpush.msra.mxu0 0.0
      %6130 = vmatpush.msra.mxu0 0.0
      %6131 = vmatpush.msra.mxu0 0.0
      %6132 = vmatpush.msra.mxu0 %v6099
      %6133 = vmatpush.msra.mxu0 %v6096
      %6134 = vmatmul.f32.gmra.mxu0 %v6113
      %v6135 = vpop.f32.mrf.mxu0
      %v6136 = vadd.f32 %v6105, %v6135
      %6137 = vmatmul.f32.gmra.mxu0 %v6116
      %v6138 = vpop.f32.mrf.mxu0
      %v6139 = vadd.f32 %v6110, %v6138
      %6140 = vdwg.mxu0
      %6141 = vmatpush.msra.mxu0 0.0
      %6142 = vmatpush.msra.mxu0 0.0
      %6143 = vmatpush.msra.mxu0 0.0
      %6144 = vmatpush.msra.mxu0 0.0
      %6145 = vmatpush.msra.mxu0 0.0
      %6146 = vmatpush.msra.mxu0 0.0
      %6147 = vmatpush.msra.mxu0 0.0
      %6148 = vmatpush.msra.mxu0 0.0
      %6149 = vmatpush.msra.mxu0 0.0
      %6150 = vmatpush.msra.mxu0 0.0
      %6151 = vmatpush.msra.mxu0 0.0
      %6152 = vmatpush.msra.mxu0 0.0
      %6153 = vmatpush.msra.mxu0 0.0
      %6154 = vmatpush.msra.mxu0 0.0
      %6155 = vmatpush.msra.mxu0 %v6100
      %6156 = vmatpush.msra.mxu0 %v6097
      %6157 = vmatmul.f32.gmra.mxu0 %v6113
      %v6158 = vpop.f32.mrf.mxu0
      %v6159 = vadd.f32 %v6105, %v6158
      %6160 = vmatmul.f32.gmra.mxu0 %v6116
      %v6161 = vpop.f32.mrf.mxu0
      %v6162 = vadd.f32 %v6110, %v6161
      %6163 = vdwg.mxu0
      %6164 = vmatpush.msra.mxu0 0.0
      %6165 = vmatpush.msra.mxu0 0.0
      %6166 = vmatpush.msra.mxu0 0.0
      %6167 = vmatpush.msra.mxu0 0.0
      %6168 = vmatpush.msra.mxu0 0.0
      %6169 = vmatpush.msra.mxu0 0.0
      %6170 = vmatpush.msra.mxu0 0.0
      %6171 = vmatpush.msra.mxu0 0.0
      %6172 = vmatpush.msra.mxu0 0.0
      %6173 = vmatpush.msra.mxu0 0.0
      %6174 = vmatpush.msra.mxu0 0.0
      %6175 = vmatpush.msra.mxu0 0.0
      %6176 = vmatpush.msra.mxu0 0.0
      %6177 = vmatpush.msra.mxu0 0.0
      %6178 = vmatpush.msra.mxu0 %v6101
      %6179 = vmatpush.msra.mxu0 %v6098
      %6180 = vmatmul.f32.gmra.mxu0 %v6113
      %v6181 = vpop.f32.mrf.mxu0
      %v6182 = vadd.f32 %v6105, %v6181
      %6183 = vmatmul.f32.gmra.mxu0 %v6116
      %v6184 = vpop.f32.mrf.mxu0
      %v6185 = vadd.f32 %v6110, %v6184
      %6186 = vdwg.mxu0
      %6187 = vst [vmem:[%s305] sm:$0xff] %v6136
      %6188 = vst [vmem:[%s305 + $0x8] sm:$0xff] %v6159
      %vm6189 = vcmask 785408
      %6190 = vst.msk [vmem:[%s305 + $0x10] sm:$0xff] %vm6189, %v6182
      %6191 = vst [vmem:[%s305 + $0x18] sm:$0xff] %v6139
      %6192 = vst [vmem:[%s305 + $0x20] sm:$0xff] %v6162
      %6193 = vst.msk [vmem:[%s305 + $0x28] sm:$0xff] %vm6189, %v6185
      %p6194 = scmp.lt.s32.totalorder %s19, 1
      %s6195 = scalar_select %p6194, %s19, 1
      %s6196 = smul.addr %s6195, 6
      %s6197 = smul.addr %s6196, 8
      %s6198 = scalar_lea.vmem %s8, %s6197
      // Predicated region
      $region53: #{dual_adaptive_neural_block.1} parent=51 // pred_check
        %p6199 = pneg %p210
      $region54: #{dual_adaptive_neural_block.1} parent=51 // pred_check_branch
        %6201 = sbr.rel (%p6199) target = $region56
      $region55: #{dual_adaptive_neural_block.1} parent=51 // pred_region
        _
      $region56: #{dual_adaptive_neural_block.1} parent=51 // pred_fallthru
        _
    $region52: #{dual_adaptive_neural_block.1} parent=5 // pred_fallthru
      _
    %p6202 = scmp.le.s32.totalorder 2, %s14
    // Predicated region
    $region57: #{dual_adaptive_neural_block.1} parent=5 // pred_check
      %p6203 = pneg %p6202
    $region58: #{dual_adaptive_neural_block.1} parent=5 // pred_check_branch
      %6205 = sbr.rel (%p6203) target = $region60
    $region59: #{dual_adaptive_neural_block.1} parent=5 // pred_region
      %s6206 = ssub.s32 %s14, 2
      // Predicated region
      $region61: #{dual_adaptive_neural_block.1} parent=59 // pred_check
        %p6207 = pneg %p216
      $region62: #{dual_adaptive_neural_block.1} parent=59 // pred_check_branch
        %6209 = sbr.rel (%p6207) target = $region64
      $region63: #{dual_adaptive_neural_block.1} parent=59 // pred_region
        %p6210 = scmp.lt.s32.totalorder %s20, 1
        %s6211 = scalar_select %p6210, %s20, 1
        %s6212 = smul.addr %s6211, 6
        %s6213 = smul.addr %s6212, 8
        %s6214 = scalar_lea.vmem %s8, %s6213
      $region64: #{dual_adaptive_neural_block.1} parent=59 // pred_fallthru
        _
    $region60: #{dual_adaptive_neural_block.1} parent=5 // pred_fallthru
      _
  $region6: #{dual_adaptive_neural_block.1} parent=0 // loop_footer
    %s18 = sadd.s32 1, %s14
  $region7: #{dual_adaptive_neural_block.1} parent=0 // loop_footer_branch
    %13 = sbr.rel target = $region3
  $region8: #{dual_adaptive_neural_block.1} parent=0 // loop_exit
    _

</llo_original>
